<compile_context>
chip_gen: v5e
topology: v5e:2x2
jax: 0.10.0
libtpu: 0.0.40
codegen_flags: <defaults>
</compile_context>

<pallas_src>
import jax
import jax.numpy as jnp
import numpy as np
from jax import lax
from jax.experimental import pallas as pl
from jax.experimental.pallas import tpu as pltpu

EPS = 1e-5


# --------------------------------------------------------------------------- #
# Pallas kernel
# --------------------------------------------------------------------------- #
def _make_kernel(shortcut, Nb, Hs, Ws, Cin, Cout):
    """Build the kernel for a static (shortcut, shape) configuration."""
    M = Nb * Hs * Ws

    def kernel(*refs):
        if shortcut:
            (x_ref, w1_ref, b1_ref, s1_ref, t1_ref,
             w2_ref, b2_ref, s2_ref, t2_ref, ws_ref,
             o_ref, pad2) = refs
        else:
            (x_ref, w1_ref, b1_ref, s1_ref, t1_ref,
             w2_ref, b2_ref, s2_ref, t2_ref,
             o_ref, pad2) = refs

        def conv3x3(src_ref, w_ref, cin):
            """3x3 'same' conv: 9 shifted-window bf16 matmuls, f32 accumulate.

            src_ref: (Nb, Hs+2, Ws+2, cin) zero-padded, bf16.
            w_ref:   (9, cin, Cout) tap-major weights, bf16 (offset-0 reads).
            The (Nb,Hs,Ws,cin)->(M,cin) flatten only merges leading dims, so
            it is layout-preserving whenever Ws % 8 == 0.
            """
            acc = None
            for k in range(9):
                dy, dx = divmod(k, 3)
                win = src_ref[:, dy:dy + Hs, dx:dx + Ws, :].reshape(M, cin)
                part = jnp.dot(win, w_ref[k],
                               preferred_element_type=jnp.float32)
                acc = part if acc is None else acc + part
            return acc

        # conv1 -> +bias -> ReLU -> BN1 (all elementwise in f32)
        z1 = conv3x3(x_ref, w1_ref, Cin) + b1_ref[...]
        y1 = jnp.maximum(z1, 0.0) * s1_ref[...] + t1_ref[...]      # (M, Cout)

        # Stage y1 (bf16) into the padded scratch for conv2.  Only the
        # 1-pixel halo is zeroed; the interior is fully rewritten.  Re-zeroed
        # every step (tiny) so the batch grid axis stays "parallel"-safe.
        pad2[:, 0:1, :, :] = jnp.zeros((Nb, 1, Ws + 2, Cout), jnp.bfloat16)
        pad2[:, Hs + 1:Hs + 2, :, :] = jnp.zeros((Nb, 1, Ws + 2, Cout),
                                                 jnp.bfloat16)
        pad2[:, :, 0:1, :] = jnp.zeros((Nb, Hs + 2, 1, Cout), jnp.bfloat16)
        pad2[:, :, Ws + 1:Ws + 2, :] = jnp.zeros((Nb, Hs + 2, 1, Cout),
                                                 jnp.bfloat16)
        pad2[:, 1:Hs + 1, 1:Ws + 1, :] = (
            y1.reshape(Nb, Hs, Ws, Cout).astype(jnp.bfloat16))

        # conv2 -> +bias -> ReLU -> BN2 (shortcut BN shift pre-merged into t2)
        z2 = conv3x3(pad2, w2_ref, Cout) + b2_ref[...]
        y2 = jnp.maximum(z2, 0.0) * s2_ref[...] + t2_ref[...]

        # optional shortcut: 1x1 conv on the (un-padded) input window; the BN
        # scale is folded into ws_ref, its shift is already inside t2_ref.
        if shortcut:
            xc = x_ref[:, 1:Hs + 1, 1:Ws + 1, :].reshape(M, Cin)
            y2 = y2 + jnp.dot(xc, ws_ref[...],
                              preferred_element_type=jnp.float32)

        o_ref[...] = y2.astype(o_ref.dtype)                        # (M, Cout)

    return kernel


# --------------------------------------------------------------------------- #
# Wrapper (parameter folding / layout plumbing in plain JAX)
# --------------------------------------------------------------------------- #
def _pick_nb(N, Hs, Ws, Cin, Cout, target_m=256, vmem_budget=8 << 20):
    """Smallest divisor of N whose M = Nb*Hs*Ws reaches the MXU target."""
    per_img = ((Hs + 2) * (Ws + 2) * (2 * Cin + Cout) * 2   # x (2 bufs) + pad2, bf16
               + Hs * Ws * Cout * 4 * 2)                    # out block (2 bufs), f32
    best = 1
    for nb in range(1, N + 1):
        if N % nb != 0:
            continue
        if nb > 1 and nb * per_img > vmem_budget:
            break
        best = nb
        if nb * Hs * Ws >= target_m:
            break
    return best


def conv_block_forward(params, x_nchw, *, pool=True, shortcut=False):
    N, Cin, H, W = x_nchw.shape
    Cout = params["w1"].shape[0]

    if pool:
        assert H % 2 == 0 and W % 2 == 0
        Hs, Ws = H // 2, W // 2
        # 2x2 / stride-2 max-pool fused into the layout prologue (NCHW reshape
        # max -> transpose the 4x smaller tensor).
        x_nchw = jnp.max(x_nchw.reshape(N, Cin, Hs, 2, Ws, 2), axis=(3, 5))
    else:
        Hs, Ws = H, W

    # NHWC, bf16 (MXU operand dtype), zero-padded once in HBM for conv1.
    x = jnp.transpose(x_nchw, (0, 2, 3, 1)).astype(jnp.bfloat16)
    xpad = jnp.pad(x, ((0, 0), (1, 1), (1, 1), (0, 0)))

    def fold_bn(g, b, m, v):
        s = g / jnp.sqrt(v + EPS)
        return s, b - m * s

    s1, t1 = fold_bn(params["g1"], params["beta1"], params["m1"], params["v1"])
    s2, t2 = fold_bn(params["g2"], params["beta2"], params["m2"], params["v2"])

    # conv weights -> tap-major (9, Cin_k, Cout) layout, bf16.
    w1f = jnp.transpose(params["w1"], (2, 3, 1, 0)).reshape(9, Cin, Cout)
    w2f = jnp.transpose(params["w2"], (2, 3, 1, 0)).reshape(9, Cout, Cout)

    t2x = t2
    wsf = None
    if shortcut:
        ss, ts = fold_bn(params["gs"], params["betas"], params["ms"],
                         params["vs"])
        wsf = (params["ws"][:, :, 0, 0].T * ss[None, :]).astype(jnp.bfloat16)
        t2x = t2 + ts                                     # merge BN shifts

    Nb = _pick_nb(N, Hs, Ws, Cin, Cout)
    assert N % Nb == 0
    M = Nb * Hs * Ws

    args = [xpad,
            w1f.astype(jnp.bfloat16),
            params["b1"].reshape(1, Cout).astype(jnp.float32),
            s1.reshape(1, Cout), t1.reshape(1, Cout),
            w2f.astype(jnp.bfloat16),
            params["b2"].reshape(1, Cout).astype(jnp.float32),
            s2.reshape(1, Cout), t2x.reshape(1, Cout)]

    def _const(shape):
        # TODO(synk): pipeline_mode=pl.Buffered(1) — constant index_map makes
        #             the second pipeline buffer redundant.
        zeros = (0,) * len(shape)
        return pl.BlockSpec(shape, lambda n, _z=zeros: _z)

    in_specs = [
        pl.BlockSpec((Nb, Hs + 2, Ws + 2, Cin), lambda n: (n, 0, 0, 0)),
        _const((9, Cin, Cout)), _const((1, Cout)),
        _const((1, Cout)), _const((1, Cout)),
        _const((9, Cout, Cout)), _const((1, Cout)),
        _const((1, Cout)), _const((1, Cout)),
    ]
    if shortcut:
        args.append(wsf)
        in_specs.append(_const((Cin, Cout)))

    kernel = _make_kernel(shortcut, Nb, Hs, Ws, Cin, Cout)

    # Explicit VMEM budget (blocks are double-buffered by the pipeline).
    vmem_need = (2 * Nb * (Hs + 2) * (Ws + 2) * Cin * 2
                 + Nb * (Hs + 2) * (Ws + 2) * Cout * 2
                 + 2 * M * Cout * 4
                 + 2 * (9 * Cin * Cout + 9 * Cout * Cout + Cin * Cout) * 2
                 + 2 * 6 * 8 * 128 * 4)
    vmem_limit = int(min(max(2 * vmem_need, 32 << 20), 64 << 20))

    out = pl.pallas_call(
        kernel,
        out_shape=jax.ShapeDtypeStruct((N // Nb, M, Cout), jnp.float32),
        grid=(N // Nb,),
        in_specs=in_specs,
        out_specs=pl.BlockSpec((None, M, Cout), lambda n: (n, 0, 0)),
        scratch_shapes=[
            pltpu.VMEM((Nb, Hs + 2, Ws + 2, Cout), jnp.bfloat16),   # pad2
        ],
        compiler_params=pltpu.CompilerParams(
            dimension_semantics=("parallel",),
            vmem_limit_bytes=vmem_limit),
    )(*args)

    # (N//Nb, Nb*Hs*Ws, Cout) -> (N, Hs, Ws, Cout) (free) -> NCHW
    return jnp.transpose(out.reshape(N, Hs, Ws, Cout), (0, 3, 1, 2))


# --------------------------------------------------------------------------- #
# Deterministic parameter init (shapes from ConvBlock.__init__)
# --------------------------------------------------------------------------- #
def init_params(key, in_c, out_c, shortcut):
    ks = jax.random.split(key, 17)
    p = {
        "w1": 0.1 * jax.random.normal(ks[0], (out_c, in_c, 3, 3), jnp.float32),
        "b1": 0.1 * jax.random.normal(ks[1], (out_c,), jnp.float32),
        "g1": 1.0 + 0.1 * jax.random.normal(ks[2], (out_c,), jnp.float32),
        "beta1": 0.1 * jax.random.normal(ks[3], (out_c,), jnp.float32),
        "m1": 0.1 * jax.random.normal(ks[4], (out_c,), jnp.float32),
        "v1": jax.random.uniform(ks[5], (out_c,), jnp.float32, 0.5, 1.5),
        "w2": 0.1 * jax.random.normal(ks[6], (out_c, out_c, 3, 3), jnp.float32),
        "b2": 0.1 * jax.random.normal(ks[7], (out_c,), jnp.float32),
        "g2": 1.0 + 0.1 * jax.random.normal(ks[8], (out_c,), jnp.float32),
        "beta2": 0.1 * jax.random.normal(ks[9], (out_c,), jnp.float32),
        "m2": 0.1 * jax.random.normal(ks[10], (out_c,), jnp.float32),
        "v2": jax.random.uniform(ks[11], (out_c,), jnp.float32, 0.5, 1.5),
    }
    if shortcut:
        p.update({
            "ws": 0.1 * jax.random.normal(ks[12], (out_c, in_c, 1, 1), jnp.float32),
            "gs": 1.0 + 0.1 * jax.random.normal(ks[13], (out_c,), jnp.float32),
            "betas": 0.1 * jax.random.normal(ks[14], (out_c,), jnp.float32),
            "ms": 0.1 * jax.random.normal(ks[15], (out_c,), jnp.float32),
            "vs": jax.random.uniform(ks[16], (out_c,), jnp.float32, 0.5, 1.5),
        })
    return p


# --------------------------------------------------------------------------- #
# Pure-JAX reference (mirrors the PyTorch forward, eval-mode BN, f32/HIGHEST)
# --------------------------------------------------------------------------- #
def reference_forward(p, x, *, pool=True, shortcut=False):
    if pool:
        x = lax.reduce_window(x, -jnp.inf, lax.max,
                              (1, 1, 2, 2), (1, 1, 2, 2), "VALID")

    def conv(x, w, b, pad):
        y = lax.conv_general_dilated(
            x, w, (1, 1), [(pad, pad), (pad, pad)],
            dimension_numbers=("NCHW", "OIHW", "NCHW"),
            precision=lax.Precision.HIGHEST)
        if b is not None:
            y = y + b[None, :, None, None]
        return y

    def bn(x, g, b, m, v):
        return (g[None, :, None, None] * (x - m[None, :, None, None])
                / jnp.sqrt(v[None, :, None, None] + EPS)
                + b[None, :, None, None])

    out = conv(x, p["w1"], p["b1"], 1)
    out = jnp.maximum(out, 0.0)
    out = bn(out, p["g1"], p["beta1"], p["m1"], p["v1"])
    out = conv(out, p["w2"], p["b2"], 1)
    out = jnp.maximum(out, 0.0)
    out = bn(out, p["g2"], p["beta2"], p["m2"], p["v2"])
    if shortcut:
        sc = conv(x, p["ws"], None, 0)
        sc = bn(sc, p["gs"], p["betas"], p["ms"], p["vs"])
        out = out + sc
    return out


# --------------------------------------------------------------------------- #
if __name__ == "__main__":
    key = jax.random.PRNGKey(0)
    kx, kp = jax.random.split(key)

    N, Cin, H, W, Cout = 2, 4, 16, 16, 8
    x = jax.random.normal(kx, (N, Cin, H, W), jnp.float32)

    configs = [
        dict(pool=True, shortcut=False),   # module defaults
        dict(pool=True, shortcut=True),
        dict(pool=False, shortcut=True),
    ]

    for cfg in configs:
        params = init_params(kp, Cin, Cout, cfg["shortcut"])
        out = conv_block_forward(params, x, **cfg)
        out = jax.block_until_ready(out)
        ref = jax.block_until_ready(reference_forward(params, x, **cfg))
        assert out.shape == ref.shape, (out.shape, ref.shape)
        # Tolerance reflects bf16 MXU operands / bf16 activations (f32
        # accumulation & elementwise) vs. the f32/HIGHEST reference.
        np.testing.assert_allclose(np.asarray(out), np.asarray(ref),
                                   rtol=4e-2, atol=4e-2)

    print("KERNEL_OK")
</pallas_src>

<mosaic_0001>
module attributes {stable_mosaic.version = 11 : i64} {
  func.func @kernel(%arg0: i32, %arg1: memref<2x10x10x4xbf16, #tpu.memory_space<vmem>>, %arg2: memref<9x4x8xbf16, #tpu.memory_space<vmem>>, %arg3: memref<1x8xf32, #tpu.memory_space<vmem>>, %arg4: memref<1x8xf32, #tpu.memory_space<vmem>>, %arg5: memref<1x8xf32, #tpu.memory_space<vmem>>, %arg6: memref<9x8x8xbf16, #tpu.memory_space<vmem>>, %arg7: memref<1x8xf32, #tpu.memory_space<vmem>>, %arg8: memref<1x8xf32, #tpu.memory_space<vmem>>, %arg9: memref<1x8xf32, #tpu.memory_space<vmem>>, %arg10: memref<1x128x8xf32, #tpu.memory_space<vmem>>, %arg11: memref<2x10x10x8xbf16, #tpu.memory_space<vmem>>) attributes {dimension_semantics = [#tpu.dimension_semantics<parallel>], iteration_bounds = array<i64: 1>, scalar_prefetch = 0 : i64, scratch_operands = 1 : i64, tpu.core_type = #tpu.core_type<tc>, window_params = [{transform_indices = @transform_0, window_bounds = array<i64: 2, 10, 10, 4>}, {pipeline_mode = #tpu.pipeline_mode<synchronous>, transform_indices = @transform_1, window_bounds = array<i64: 9, 4, 8>}, {pipeline_mode = #tpu.pipeline_mode<synchronous>, transform_indices = @transform_2, window_bounds = array<i64: 1, 8>}, {pipeline_mode = #tpu.pipeline_mode<synchronous>, transform_indices = @transform_3, window_bounds = array<i64: 1, 8>}, {pipeline_mode = #tpu.pipeline_mode<synchronous>, transform_indices = @transform_4, window_bounds = array<i64: 1, 8>}, {pipeline_mode = #tpu.pipeline_mode<synchronous>, transform_indices = @transform_5, window_bounds = array<i64: 9, 8, 8>}, {pipeline_mode = #tpu.pipeline_mode<synchronous>, transform_indices = @transform_6, window_bounds = array<i64: 1, 8>}, {pipeline_mode = #tpu.pipeline_mode<synchronous>, transform_indices = @transform_7, window_bounds = array<i64: 1, 8>}, {pipeline_mode = #tpu.pipeline_mode<synchronous>, transform_indices = @transform_8, window_bounds = array<i64: 1, 8>}, {transform_indices = @transform_9, window_bounds = array<i64: 1, 128, 8>}]} {
    %c0 = arith.constant 0 : index
    %c0_0 = arith.constant 0 : index
    %c0_1 = arith.constant 0 : index
    %c0_2 = arith.constant 0 : index
    %0 = vector.load %arg1[%c0, %c0_0, %c0_1, %c0_2] : memref<2x10x10x4xbf16, #tpu.memory_space<vmem>>, vector<2x8x8x4xbf16>
    %1 = vector.shape_cast %0 : vector<2x8x8x4xbf16> to vector<128x4xbf16>
    %c0_3 = arith.constant 0 : index
    %c0_4 = arith.constant 0 : index
    %c0_5 = arith.constant 0 : index
    %2 = vector.load %arg2[%c0_3, %c0_4, %c0_5] : memref<9x4x8xbf16, #tpu.memory_space<vmem>>, vector<1x4x8xbf16>
    %3 = vector.shape_cast %2 : vector<1x4x8xbf16> to vector<4x8xbf16>
    %cst = arith.constant dense<0.000000e+00> : vector<128x8xf32>
    %4 = tpu.matmul %1, %3, %cst {dimension_numbers = #tpu.dot_dimension_numbers<[1], [0], [0], [1], [0, 0, 1, 1], [], []>} : vector<128x4xbf16>, vector<4x8xbf16>, vector<128x8xf32> -> vector<128x8xf32>
    %c0_6 = arith.constant 0 : index
    %c0_7 = arith.constant 0 : index
    %c1 = arith.constant 1 : index
    %c0_8 = arith.constant 0 : index
    %5 = vector.load %arg1[%c0_6, %c0_7, %c1, %c0_8] : memref<2x10x10x4xbf16, #tpu.memory_space<vmem>>, vector<2x8x8x4xbf16>
    %6 = vector.shape_cast %5 : vector<2x8x8x4xbf16> to vector<128x4xbf16>
    %c1_9 = arith.constant 1 : index
    %c0_10 = arith.constant 0 : index
    %c0_11 = arith.constant 0 : index
    %7 = vector.load %arg2[%c1_9, %c0_10, %c0_11] : memref<9x4x8xbf16, #tpu.memory_space<vmem>>, vector<1x4x8xbf16>
    %8 = vector.shape_cast %7 : vector<1x4x8xbf16> to vector<4x8xbf16>
    %cst_12 = arith.constant dense<0.000000e+00> : vector<128x8xf32>
    %9 = tpu.matmul %6, %8, %cst_12 {dimension_numbers = #tpu.dot_dimension_numbers<[1], [0], [0], [1], [0, 0, 1, 1], [], []>} : vector<128x4xbf16>, vector<4x8xbf16>, vector<128x8xf32> -> vector<128x8xf32>
    %10 = arith.addf %4, %9 : vector<128x8xf32>
    %c0_13 = arith.constant 0 : index
    %c0_14 = arith.constant 0 : index
    %c2 = arith.constant 2 : index
    %c0_15 = arith.constant 0 : index
    %11 = vector.load %arg1[%c0_13, %c0_14, %c2, %c0_15] : memref<2x10x10x4xbf16, #tpu.memory_space<vmem>>, vector<2x8x8x4xbf16>
    %12 = vector.shape_cast %11 : vector<2x8x8x4xbf16> to vector<128x4xbf16>
    %c2_16 = arith.constant 2 : index
    %c0_17 = arith.constant 0 : index
    %c0_18 = arith.constant 0 : index
    %13 = vector.load %arg2[%c2_16, %c0_17, %c0_18] : memref<9x4x8xbf16, #tpu.memory_space<vmem>>, vector<1x4x8xbf16>
    %14 = vector.shape_cast %13 : vector<1x4x8xbf16> to vector<4x8xbf16>
    %cst_19 = arith.constant dense<0.000000e+00> : vector<128x8xf32>
    %15 = tpu.matmul %12, %14, %cst_19 {dimension_numbers = #tpu.dot_dimension_numbers<[1], [0], [0], [1], [0, 0, 1, 1], [], []>} : vector<128x4xbf16>, vector<4x8xbf16>, vector<128x8xf32> -> vector<128x8xf32>
    %16 = arith.addf %10, %15 : vector<128x8xf32>
    %c0_20 = arith.constant 0 : index
    %c1_21 = arith.constant 1 : index
    %c0_22 = arith.constant 0 : index
    %c0_23 = arith.constant 0 : index
    %17 = vector.load %arg1[%c0_20, %c1_21, %c0_22, %c0_23] : memref<2x10x10x4xbf16, #tpu.memory_space<vmem>>, vector<2x8x8x4xbf16>
    %18 = vector.shape_cast %17 : vector<2x8x8x4xbf16> to vector<128x4xbf16>
    %c3 = arith.constant 3 : index
    %c0_24 = arith.constant 0 : index
    %c0_25 = arith.constant 0 : index
    %19 = vector.load %arg2[%c3, %c0_24, %c0_25] : memref<9x4x8xbf16, #tpu.memory_space<vmem>>, vector<1x4x8xbf16>
    %20 = vector.shape_cast %19 : vector<1x4x8xbf16> to vector<4x8xbf16>
    %cst_26 = arith.constant dense<0.000000e+00> : vector<128x8xf32>
    %21 = tpu.matmul %18, %20, %cst_26 {dimension_numbers = #tpu.dot_dimension_numbers<[1], [0], [0], [1], [0, 0, 1, 1], [], []>} : vector<128x4xbf16>, vector<4x8xbf16>, vector<128x8xf32> -> vector<128x8xf32>
    %22 = arith.addf %16, %21 : vector<128x8xf32>
    %c0_27 = arith.constant 0 : index
    %c1_28 = arith.constant 1 : index
    %c1_29 = arith.constant 1 : index
    %c0_30 = arith.constant 0 : index
    %23 = vector.load %arg1[%c0_27, %c1_28, %c1_29, %c0_30] : memref<2x10x10x4xbf16, #tpu.memory_space<vmem>>, vector<2x8x8x4xbf16>
    %24 = vector.shape_cast %23 : vector<2x8x8x4xbf16> to vector<128x4xbf16>
    %c4 = arith.constant 4 : index
    %c0_31 = arith.constant 0 : index
    %c0_32 = arith.constant 0 : index
    %25 = vector.load %arg2[%c4, %c0_31, %c0_32] : memref<9x4x8xbf16, #tpu.memory_space<vmem>>, vector<1x4x8xbf16>
    %26 = vector.shape_cast %25 : vector<1x4x8xbf16> to vector<4x8xbf16>
    %cst_33 = arith.constant dense<0.000000e+00> : vector<128x8xf32>
    %27 = tpu.matmul %24, %26, %cst_33 {dimension_numbers = #tpu.dot_dimension_numbers<[1], [0], [0], [1], [0, 0, 1, 1], [], []>} : vector<128x4xbf16>, vector<4x8xbf16>, vector<128x8xf32> -> vector<128x8xf32>
    %28 = arith.addf %22, %27 : vector<128x8xf32>
    %c0_34 = arith.constant 0 : index
    %c1_35 = arith.constant 1 : index
    %c2_36 = arith.constant 2 : index
    %c0_37 = arith.constant 0 : index
    %29 = vector.load %arg1[%c0_34, %c1_35, %c2_36, %c0_37] : memref<2x10x10x4xbf16, #tpu.memory_space<vmem>>, vector<2x8x8x4xbf16>
    %30 = vector.shape_cast %29 : vector<2x8x8x4xbf16> to vector<128x4xbf16>
    %c5 = arith.constant 5 : index
    %c0_38 = arith.constant 0 : index
    %c0_39 = arith.constant 0 : index
    %31 = vector.load %arg2[%c5, %c0_38, %c0_39] : memref<9x4x8xbf16, #tpu.memory_space<vmem>>, vector<1x4x8xbf16>
    %32 = vector.shape_cast %31 : vector<1x4x8xbf16> to vector<4x8xbf16>
    %cst_40 = arith.constant dense<0.000000e+00> : vector<128x8xf32>
    %33 = tpu.matmul %30, %32, %cst_40 {dimension_numbers = #tpu.dot_dimension_numbers<[1], [0], [0], [1], [0, 0, 1, 1], [], []>} : vector<128x4xbf16>, vector<4x8xbf16>, vector<128x8xf32> -> vector<128x8xf32>
    %34 = arith.addf %28, %33 : vector<128x8xf32>
    %c0_41 = arith.constant 0 : index
    %c2_42 = arith.constant 2 : index
    %c0_43 = arith.constant 0 : index
    %c0_44 = arith.constant 0 : index
    %35 = vector.load %arg1[%c0_41, %c2_42, %c0_43, %c0_44] : memref<2x10x10x4xbf16, #tpu.memory_space<vmem>>, vector<2x8x8x4xbf16>
    %36 = vector.shape_cast %35 : vector<2x8x8x4xbf16> to vector<128x4xbf16>
    %c6 = arith.constant 6 : index
    %c0_45 = arith.constant 0 : index
    %c0_46 = arith.constant 0 : index
    %37 = vector.load %arg2[%c6, %c0_45, %c0_46] : memref<9x4x8xbf16, #tpu.memory_space<vmem>>, vector<1x4x8xbf16>
    %38 = vector.shape_cast %37 : vector<1x4x8xbf16> to vector<4x8xbf16>
    %cst_47 = arith.constant dense<0.000000e+00> : vector<128x8xf32>
    %39 = tpu.matmul %36, %38, %cst_47 {dimension_numbers = #tpu.dot_dimension_numbers<[1], [0], [0], [1], [0, 0, 1, 1], [], []>} : vector<128x4xbf16>, vector<4x8xbf16>, vector<128x8xf32> -> vector<128x8xf32>
    %40 = arith.addf %34, %39 : vector<128x8xf32>
    %c0_48 = arith.constant 0 : index
    %c2_49 = arith.constant 2 : index
    %c1_50 = arith.constant 1 : index
    %c0_51 = arith.constant 0 : index
    %41 = vector.load %arg1[%c0_48, %c2_49, %c1_50, %c0_51] : memref<2x10x10x4xbf16, #tpu.memory_space<vmem>>, vector<2x8x8x4xbf16>
    %42 = vector.shape_cast %41 : vector<2x8x8x4xbf16> to vector<128x4xbf16>
    %c7 = arith.constant 7 : index
    %c0_52 = arith.constant 0 : index
    %c0_53 = arith.constant 0 : index
    %43 = vector.load %arg2[%c7, %c0_52, %c0_53] : memref<9x4x8xbf16, #tpu.memory_space<vmem>>, vector<1x4x8xbf16>
    %44 = vector.shape_cast %43 : vector<1x4x8xbf16> to vector<4x8xbf16>
    %cst_54 = arith.constant dense<0.000000e+00> : vector<128x8xf32>
    %45 = tpu.matmul %42, %44, %cst_54 {dimension_numbers = #tpu.dot_dimension_numbers<[1], [0], [0], [1], [0, 0, 1, 1], [], []>} : vector<128x4xbf16>, vector<4x8xbf16>, vector<128x8xf32> -> vector<128x8xf32>
    %46 = arith.addf %40, %45 : vector<128x8xf32>
    %c0_55 = arith.constant 0 : index
    %c2_56 = arith.constant 2 : index
    %c2_57 = arith.constant 2 : index
    %c0_58 = arith.constant 0 : index
    %47 = vector.load %arg1[%c0_55, %c2_56, %c2_57, %c0_58] : memref<2x10x10x4xbf16, #tpu.memory_space<vmem>>, vector<2x8x8x4xbf16>
    %48 = vector.shape_cast %47 : vector<2x8x8x4xbf16> to vector<128x4xbf16>
    %c8 = arith.constant 8 : index
    %c0_59 = arith.constant 0 : index
    %c0_60 = arith.constant 0 : index
    %49 = vector.load %arg2[%c8, %c0_59, %c0_60] : memref<9x4x8xbf16, #tpu.memory_space<vmem>>, vector<1x4x8xbf16>
    %50 = vector.shape_cast %49 : vector<1x4x8xbf16> to vector<4x8xbf16>
    %cst_61 = arith.constant dense<0.000000e+00> : vector<128x8xf32>
    %51 = tpu.matmul %48, %50, %cst_61 {dimension_numbers = #tpu.dot_dimension_numbers<[1], [0], [0], [1], [0, 0, 1, 1], [], []>} : vector<128x4xbf16>, vector<4x8xbf16>, vector<128x8xf32> -> vector<128x8xf32>
    %52 = arith.addf %46, %51 : vector<128x8xf32>
    %c0_62 = arith.constant 0 : index
    %c0_63 = arith.constant 0 : index
    %53 = vector.load %arg3[%c0_62, %c0_63] : memref<1x8xf32, #tpu.memory_space<vmem>>, vector<1x8xf32>
    %54 = vector.broadcast %53 : vector<1x8xf32> to vector<128x8xf32>
    %55 = arith.addf %52, %54 : vector<128x8xf32>
    %cst_64 = arith.constant 0.000000e+00 : f32
    %56 = vector.broadcast %cst_64 : f32 to vector<128x8xf32>
    %57 = arith.maximumf %55, %56 : vector<128x8xf32>
    %c0_65 = arith.constant 0 : index
    %c0_66 = arith.constant 0 : index
    %58 = vector.load %arg4[%c0_65, %c0_66] : memref<1x8xf32, #tpu.memory_space<vmem>>, vector<1x8xf32>
    %59 = vector.broadcast %58 : vector<1x8xf32> to vector<128x8xf32>
    %60 = arith.mulf %57, %59 : vector<128x8xf32>
    %c0_67 = arith.constant 0 : index
    %c0_68 = arith.constant 0 : index
    %61 = vector.load %arg5[%c0_67, %c0_68] : memref<1x8xf32, #tpu.memory_space<vmem>>, vector<1x8xf32>
    %62 = vector.broadcast %61 : vector<1x8xf32> to vector<128x8xf32>
    %63 = arith.addf %60, %62 : vector<128x8xf32>
    %cst_69 = arith.constant 0.000000e+00 : bf16
    %64 = vector.broadcast %cst_69 : bf16 to vector<2x1x10x8xbf16>
    %c0_70 = arith.constant 0 : index
    %c0_71 = arith.constant 0 : index
    %c0_72 = arith.constant 0 : index
    %c0_73 = arith.constant 0 : index
    %65 = vector.load %arg11[%c0_70, %c0_71, %c0_72, %c0_73] : memref<2x10x10x8xbf16, #tpu.memory_space<vmem>>, vector<2x1x10x8xbf16>
    tpu.vector_store %arg11[%c0_70, %c0_71, %c0_72, %c0_73], %64 {strides = array<i32>} : memref<2x10x10x8xbf16, #tpu.memory_space<vmem>>, vector<2x1x10x8xbf16>,
    %cst_74 = arith.constant 0.000000e+00 : bf16
    %66 = vector.broadcast %cst_74 : bf16 to vector<2x1x10x8xbf16>
    %c0_75 = arith.constant 0 : index
    %c9 = arith.constant 9 : index
    %c0_76 = arith.constant 0 : index
    %c0_77 = arith.constant 0 : index
    %67 = vector.load %arg11[%c0_75, %c9, %c0_76, %c0_77] : memref<2x10x10x8xbf16, #tpu.memory_space<vmem>>, vector<2x1x10x8xbf16>
    tpu.vector_store %arg11[%c0_75, %c9, %c0_76, %c0_77], %66 {strides = array<i32>} : memref<2x10x10x8xbf16, #tpu.memory_space<vmem>>, vector<2x1x10x8xbf16>,
    %cst_78 = arith.constant 0.000000e+00 : bf16
    %68 = vector.broadcast %cst_78 : bf16 to vector<2x10x1x8xbf16>
    %c0_79 = arith.constant 0 : index
    %c0_80 = arith.constant 0 : index
    %c0_81 = arith.constant 0 : index
    %c0_82 = arith.constant 0 : index
    %69 = vector.load %arg11[%c0_79, %c0_80, %c0_81, %c0_82] : memref<2x10x10x8xbf16, #tpu.memory_space<vmem>>, vector<2x10x1x8xbf16>
    tpu.vector_store %arg11[%c0_79, %c0_80, %c0_81, %c0_82], %68 {strides = array<i32>} : memref<2x10x10x8xbf16, #tpu.memory_space<vmem>>, vector<2x10x1x8xbf16>,
    %cst_83 = arith.constant 0.000000e+00 : bf16
    %70 = vector.broadcast %cst_83 : bf16 to vector<2x10x1x8xbf16>
    %c0_84 = arith.constant 0 : index
    %c0_85 = arith.constant 0 : index
    %c9_86 = arith.constant 9 : index
    %c0_87 = arith.constant 0 : index
    %71 = vector.load %arg11[%c0_84, %c0_85, %c9_86, %c0_87] : memref<2x10x10x8xbf16, #tpu.memory_space<vmem>>, vector<2x10x1x8xbf16>
    tpu.vector_store %arg11[%c0_84, %c0_85, %c9_86, %c0_87], %70 {strides = array<i32>} : memref<2x10x10x8xbf16, #tpu.memory_space<vmem>>, vector<2x10x1x8xbf16>,
    %72 = vector.shape_cast %63 : vector<128x8xf32> to vector<2x8x8x8xf32>
    %73 = arith.truncf %72 : vector<2x8x8x8xf32> to vector<2x8x8x8xbf16>
    %c0_88 = arith.constant 0 : index
    %c1_89 = arith.constant 1 : index
    %c1_90 = arith.constant 1 : index
    %c0_91 = arith.constant 0 : index
    %74 = vector.load %arg11[%c0_88, %c1_89, %c1_90, %c0_91] : memref<2x10x10x8xbf16, #tpu.memory_space<vmem>>, vector<2x8x8x8xbf16>
    tpu.vector_store %arg11[%c0_88, %c1_89, %c1_90, %c0_91], %73 {strides = array<i32>} : memref<2x10x10x8xbf16, #tpu.memory_space<vmem>>, vector<2x8x8x8xbf16>,
    %c0_92 = arith.constant 0 : index
    %c0_93 = arith.constant 0 : index
    %c0_94 = arith.constant 0 : index
    %c0_95 = arith.constant 0 : index
    %75 = vector.load %arg11[%c0_92, %c0_93, %c0_94, %c0_95] : memref<2x10x10x8xbf16, #tpu.memory_space<vmem>>, vector<2x8x8x8xbf16>
    %76 = vector.shape_cast %75 : vector<2x8x8x8xbf16> to vector<128x8xbf16>
    %c0_96 = arith.constant 0 : index
    %c0_97 = arith.constant 0 : index
    %c0_98 = arith.constant 0 : index
    %77 = vector.load %arg6[%c0_96, %c0_97, %c0_98] : memref<9x8x8xbf16, #tpu.memory_space<vmem>>, vector<1x8x8xbf16>
    %78 = vector.shape_cast %77 : vector<1x8x8xbf16> to vector<8x8xbf16>
    %cst_99 = arith.constant dense<0.000000e+00> : vector<128x8xf32>
    %79 = tpu.matmul %76, %78, %cst_99 {dimension_numbers = #tpu.dot_dimension_numbers<[1], [0], [0], [1], [0, 0, 1, 1], [], []>} : vector<128x8xbf16>, vector<8x8xbf16>, vector<128x8xf32> -> vector<128x8xf32>
    %c0_100 = arith.constant 0 : index
    %c0_101 = arith.constant 0 : index
    %c1_102 = arith.constant 1 : index
    %c0_103 = arith.constant 0 : index
    %80 = vector.load %arg11[%c0_100, %c0_101, %c1_102, %c0_103] : memref<2x10x10x8xbf16, #tpu.memory_space<vmem>>, vector<2x8x8x8xbf16>
    %81 = vector.shape_cast %80 : vector<2x8x8x8xbf16> to vector<128x8xbf16>
    %c1_104 = arith.constant 1 : index
    %c0_105 = arith.constant 0 : index
    %c0_106 = arith.constant 0 : index
    %82 = vector.load %arg6[%c1_104, %c0_105, %c0_106] : memref<9x8x8xbf16, #tpu.memory_space<vmem>>, vector<1x8x8xbf16>
    %83 = vector.shape_cast %82 : vector<1x8x8xbf16> to vector<8x8xbf16>
    %cst_107 = arith.constant dense<0.000000e+00> : vector<128x8xf32>
    %84 = tpu.matmul %81, %83, %cst_107 {dimension_numbers = #tpu.dot_dimension_numbers<[1], [0], [0], [1], [0, 0, 1, 1], [], []>} : vector<128x8xbf16>, vector<8x8xbf16>, vector<128x8xf32> -> vector<128x8xf32>
    %85 = arith.addf %79, %84 : vector<128x8xf32>
    %c0_108 = arith.constant 0 : index
    %c0_109 = arith.constant 0 : index
    %c2_110 = arith.constant 2 : index
    %c0_111 = arith.constant 0 : index
    %86 = vector.load %arg11[%c0_108, %c0_109, %c2_110, %c0_111] : memref<2x10x10x8xbf16, #tpu.memory_space<vmem>>, vector<2x8x8x8xbf16>
    %87 = vector.shape_cast %86 : vector<2x8x8x8xbf16> to vector<128x8xbf16>
    %c2_112 = arith.constant 2 : index
    %c0_113 = arith.constant 0 : index
    %c0_114 = arith.constant 0 : index
    %88 = vector.load %arg6[%c2_112, %c0_113, %c0_114] : memref<9x8x8xbf16, #tpu.memory_space<vmem>>, vector<1x8x8xbf16>
    %89 = vector.shape_cast %88 : vector<1x8x8xbf16> to vector<8x8xbf16>
    %cst_115 = arith.constant dense<0.000000e+00> : vector<128x8xf32>
    %90 = tpu.matmul %87, %89, %cst_115 {dimension_numbers = #tpu.dot_dimension_numbers<[1], [0], [0], [1], [0, 0, 1, 1], [], []>} : vector<128x8xbf16>, vector<8x8xbf16>, vector<128x8xf32> -> vector<128x8xf32>
    %91 = arith.addf %85, %90 : vector<128x8xf32>
    %c0_116 = arith.constant 0 : index
    %c1_117 = arith.constant 1 : index
    %c0_118 = arith.constant 0 : index
    %c0_119 = arith.constant 0 : index
    %92 = vector.load %arg11[%c0_116, %c1_117, %c0_118, %c0_119] : memref<2x10x10x8xbf16, #tpu.memory_space<vmem>>, vector<2x8x8x8xbf16>
    %93 = vector.shape_cast %92 : vector<2x8x8x8xbf16> to vector<128x8xbf16>
    %c3_120 = arith.constant 3 : index
    %c0_121 = arith.constant 0 : index
    %c0_122 = arith.constant 0 : index
    %94 = vector.load %arg6[%c3_120, %c0_121, %c0_122] : memref<9x8x8xbf16, #tpu.memory_space<vmem>>, vector<1x8x8xbf16>
    %95 = vector.shape_cast %94 : vector<1x8x8xbf16> to vector<8x8xbf16>
    %cst_123 = arith.constant dense<0.000000e+00> : vector<128x8xf32>
    %96 = tpu.matmul %93, %95, %cst_123 {dimension_numbers = #tpu.dot_dimension_numbers<[1], [0], [0], [1], [0, 0, 1, 1], [], []>} : vector<128x8xbf16>, vector<8x8xbf16>, vector<128x8xf32> -> vector<128x8xf32>
    %97 = arith.addf %91, %96 : vector<128x8xf32>
    %c0_124 = arith.constant 0 : index
    %c1_125 = arith.constant 1 : index
    %c1_126 = arith.constant 1 : index
    %c0_127 = arith.constant 0 : index
    %98 = vector.load %arg11[%c0_124, %c1_125, %c1_126, %c0_127] : memref<2x10x10x8xbf16, #tpu.memory_space<vmem>>, vector<2x8x8x8xbf16>
    %99 = vector.shape_cast %98 : vector<2x8x8x8xbf16> to vector<128x8xbf16>
    %c4_128 = arith.constant 4 : index
    %c0_129 = arith.constant 0 : index
    %c0_130 = arith.constant 0 : index
    %100 = vector.load %arg6[%c4_128, %c0_129, %c0_130] : memref<9x8x8xbf16, #tpu.memory_space<vmem>>, vector<1x8x8xbf16>
    %101 = vector.shape_cast %100 : vector<1x8x8xbf16> to vector<8x8xbf16>
    %cst_131 = arith.constant dense<0.000000e+00> : vector<128x8xf32>
    %102 = tpu.matmul %99, %101, %cst_131 {dimension_numbers = #tpu.dot_dimension_numbers<[1], [0], [0], [1], [0, 0, 1, 1], [], []>} : vector<128x8xbf16>, vector<8x8xbf16>, vector<128x8xf32> -> vector<128x8xf32>
    %103 = arith.addf %97, %102 : vector<128x8xf32>
    %c0_132 = arith.constant 0 : index
    %c1_133 = arith.constant 1 : index
    %c2_134 = arith.constant 2 : index
    %c0_135 = arith.constant 0 : index
    %104 = vector.load %arg11[%c0_132, %c1_133, %c2_134, %c0_135] : memref<2x10x10x8xbf16, #tpu.memory_space<vmem>>, vector<2x8x8x8xbf16>
    %105 = vector.shape_cast %104 : vector<2x8x8x8xbf16> to vector<128x8xbf16>
    %c5_136 = arith.constant 5 : index
    %c0_137 = arith.constant 0 : index
    %c0_138 = arith.constant 0 : index
    %106 = vector.load %arg6[%c5_136, %c0_137, %c0_138] : memref<9x8x8xbf16, #tpu.memory_space<vmem>>, vector<1x8x8xbf16>
    %107 = vector.shape_cast %106 : vector<1x8x8xbf16> to vector<8x8xbf16>
    %cst_139 = arith.constant dense<0.000000e+00> : vector<128x8xf32>
    %108 = tpu.matmul %105, %107, %cst_139 {dimension_numbers = #tpu.dot_dimension_numbers<[1], [0], [0], [1], [0, 0, 1, 1], [], []>} : vector<128x8xbf16>, vector<8x8xbf16>, vector<128x8xf32> -> vector<128x8xf32>
    %109 = arith.addf %103, %108 : vector<128x8xf32>
    %c0_140 = arith.constant 0 : index
    %c2_141 = arith.constant 2 : index
    %c0_142 = arith.constant 0 : index
    %c0_143 = arith.constant 0 : index
    %110 = vector.load %arg11[%c0_140, %c2_141, %c0_142, %c0_143] : memref<2x10x10x8xbf16, #tpu.memory_space<vmem>>, vector<2x8x8x8xbf16>
    %111 = vector.shape_cast %110 : vector<2x8x8x8xbf16> to vector<128x8xbf16>
    %c6_144 = arith.constant 6 : index
    %c0_145 = arith.constant 0 : index
    %c0_146 = arith.constant 0 : index
    %112 = vector.load %arg6[%c6_144, %c0_145, %c0_146] : memref<9x8x8xbf16, #tpu.memory_space<vmem>>, vector<1x8x8xbf16>
    %113 = vector.shape_cast %112 : vector<1x8x8xbf16> to vector<8x8xbf16>
    %cst_147 = arith.constant dense<0.000000e+00> : vector<128x8xf32>
    %114 = tpu.matmul %111, %113, %cst_147 {dimension_numbers = #tpu.dot_dimension_numbers<[1], [0], [0], [1], [0, 0, 1, 1], [], []>} : vector<128x8xbf16>, vector<8x8xbf16>, vector<128x8xf32> -> vector<128x8xf32>
    %115 = arith.addf %109, %114 : vector<128x8xf32>
    %c0_148 = arith.constant 0 : index
    %c2_149 = arith.constant 2 : index
    %c1_150 = arith.constant 1 : index
    %c0_151 = arith.constant 0 : index
    %116 = vector.load %arg11[%c0_148, %c2_149, %c1_150, %c0_151] : memref<2x10x10x8xbf16, #tpu.memory_space<vmem>>, vector<2x8x8x8xbf16>
    %117 = vector.shape_cast %116 : vector<2x8x8x8xbf16> to vector<128x8xbf16>
    %c7_152 = arith.constant 7 : index
    %c0_153 = arith.constant 0 : index
    %c0_154 = arith.constant 0 : index
    %118 = vector.load %arg6[%c7_152, %c0_153, %c0_154] : memref<9x8x8xbf16, #tpu.memory_space<vmem>>, vector<1x8x8xbf16>
    %119 = vector.shape_cast %118 : vector<1x8x8xbf16> to vector<8x8xbf16>
    %cst_155 = arith.constant dense<0.000000e+00> : vector<128x8xf32>
    %120 = tpu.matmul %117, %119, %cst_155 {dimension_numbers = #tpu.dot_dimension_numbers<[1], [0], [0], [1], [0, 0, 1, 1], [], []>} : vector<128x8xbf16>, vector<8x8xbf16>, vector<128x8xf32> -> vector<128x8xf32>
    %121 = arith.addf %115, %120 : vector<128x8xf32>
    %c0_156 = arith.constant 0 : index
    %c2_157 = arith.constant 2 : index
    %c2_158 = arith.constant 2 : index
    %c0_159 = arith.constant 0 : index
    %122 = vector.load %arg11[%c0_156, %c2_157, %c2_158, %c0_159] : memref<2x10x10x8xbf16, #tpu.memory_space<vmem>>, vector<2x8x8x8xbf16>
    %123 = vector.shape_cast %122 : vector<2x8x8x8xbf16> to vector<128x8xbf16>
    %c8_160 = arith.constant 8 : index
    %c0_161 = arith.constant 0 : index
    %c0_162 = arith.constant 0 : index
    %124 = vector.load %arg6[%c8_160, %c0_161, %c0_162] : memref<9x8x8xbf16, #tpu.memory_space<vmem>>, vector<1x8x8xbf16>
    %125 = vector.shape_cast %124 : vector<1x8x8xbf16> to vector<8x8xbf16>
    %cst_163 = arith.constant dense<0.000000e+00> : vector<128x8xf32>
    %126 = tpu.matmul %123, %125, %cst_163 {dimension_numbers = #tpu.dot_dimension_numbers<[1], [0], [0], [1], [0, 0, 1, 1], [], []>} : vector<128x8xbf16>, vector<8x8xbf16>, vector<128x8xf32> -> vector<128x8xf32>
    %127 = arith.addf %121, %126 : vector<128x8xf32>
    %c0_164 = arith.constant 0 : index
    %c0_165 = arith.constant 0 : index
    %128 = vector.load %arg7[%c0_164, %c0_165] : memref<1x8xf32, #tpu.memory_space<vmem>>, vector<1x8xf32>
    %129 = vector.broadcast %128 : vector<1x8xf32> to vector<128x8xf32>
    %130 = arith.addf %127, %129 : vector<128x8xf32>
    %cst_166 = arith.constant 0.000000e+00 : f32
    %131 = vector.broadcast %cst_166 : f32 to vector<128x8xf32>
    %132 = arith.maximumf %130, %131 : vector<128x8xf32>
    %c0_167 = arith.constant 0 : index
    %c0_168 = arith.constant 0 : index
    %133 = vector.load %arg8[%c0_167, %c0_168] : memref<1x8xf32, #tpu.memory_space<vmem>>, vector<1x8xf32>
    %134 = vector.broadcast %133 : vector<1x8xf32> to vector<128x8xf32>
    %135 = arith.mulf %132, %134 : vector<128x8xf32>
    %c0_169 = arith.constant 0 : index
    %c0_170 = arith.constant 0 : index
    %136 = vector.load %arg9[%c0_169, %c0_170] : memref<1x8xf32, #tpu.memory_space<vmem>>, vector<1x8xf32>
    %137 = vector.broadcast %136 : vector<1x8xf32> to vector<128x8xf32>
    %138 = arith.addf %135, %137 : vector<128x8xf32>
    %c0_171 = arith.constant 0 : index
    %c0_172 = arith.constant 0 : index
    %c0_173 = arith.constant 0 : index
    %139 = vector.load %arg10[%c0_171, %c0_172, %c0_173] : memref<1x128x8xf32, #tpu.memory_space<vmem>>, vector<1x128x8xf32>
    %140 = vector.shape_cast %139 : vector<1x128x8xf32> to vector<128x8xf32>
    %141 = vector.shape_cast %138 : vector<128x8xf32> to vector<1x128x8xf32>
    tpu.vector_store %arg10[%c0_171, %c0_172, %c0_173], %141 {strides = array<i32>} : memref<1x128x8xf32, #tpu.memory_space<vmem>>, vector<1x128x8xf32>,
    return
  }
  func.func @transform_0(%arg0: i32) -> (i32, i32, i32, i32) {
    %c0_i32 = arith.constant 0 : i32
    %c0_i32_0 = arith.constant 0 : i32
    %c0_i32_1 = arith.constant 0 : i32
    %c0_i32_2 = arith.constant 0 : i32
    return %arg0, %c0_i32, %c0_i32_0, %c0_i32_1 : i32, i32, i32, i32
  }
  func.func @transform_1(%arg0: i32) -> (i32, i32, i32) {
    %c0_i32 = arith.constant 0 : i32
    %c0_i32_0 = arith.constant 0 : i32
    %c0_i32_1 = arith.constant 0 : i32
    %c0_i32_2 = arith.constant 0 : i32
    return %c0_i32, %c0_i32_0, %c0_i32_1 : i32, i32, i32
  }
  func.func @transform_2(%arg0: i32) -> (i32, i32) {
    %c0_i32 = arith.constant 0 : i32
    %c0_i32_0 = arith.constant 0 : i32
    %c0_i32_1 = arith.constant 0 : i32
    return %c0_i32, %c0_i32_0 : i32, i32
  }
  func.func @transform_3(%arg0: i32) -> (i32, i32) {
    %c0_i32 = arith.constant 0 : i32
    %c0_i32_0 = arith.constant 0 : i32
    %c0_i32_1 = arith.constant 0 : i32
    return %c0_i32, %c0_i32_0 : i32, i32
  }
  func.func @transform_4(%arg0: i32) -> (i32, i32) {
    %c0_i32 = arith.constant 0 : i32
    %c0_i32_0 = arith.constant 0 : i32
    %c0_i32_1 = arith.constant 0 : i32
    return %c0_i32, %c0_i32_0 : i32, i32
  }
  func.func @transform_5(%arg0: i32) -> (i32, i32, i32) {
    %c0_i32 = arith.constant 0 : i32
    %c0_i32_0 = arith.constant 0 : i32
    %c0_i32_1 = arith.constant 0 : i32
    %c0_i32_2 = arith.constant 0 : i32
    return %c0_i32, %c0_i32_0, %c0_i32_1 : i32, i32, i32
  }
  func.func @transform_6(%arg0: i32) -> (i32, i32) {
    %c0_i32 = arith.constant 0 : i32
    %c0_i32_0 = arith.constant 0 : i32
    %c0_i32_1 = arith.constant 0 : i32
    return %c0_i32, %c0_i32_0 : i32, i32
  }
  func.func @transform_7(%arg0: i32) -> (i32, i32) {
    %c0_i32 = arith.constant 0 : i32
    %c0_i32_0 = arith.constant 0 : i32
    %c0_i32_1 = arith.constant 0 : i32
    return %c0_i32, %c0_i32_0 : i32, i32
  }
  func.func @transform_8(%arg0: i32) -> (i32, i32) {
    %c0_i32 = arith.constant 0 : i32
    %c0_i32_0 = arith.constant 0 : i32
    %c0_i32_1 = arith.constant 0 : i32
    return %c0_i32, %c0_i32_0 : i32, i32
  }
  func.func @transform_9(%arg0: i32) -> (i32, i32, i32) {
    %c0_i32 = arith.constant 0 : i32
    %c0_i32_0 = arith.constant 0 : i32
    %c0_i32_1 = arith.constant 0 : i32
    return %arg0, %c0_i32, %c0_i32_0 : i32, i32, i32
  }
}

</mosaic_0001>

<llo_original>
// kernel: tpu_custom_call.1
$region0: #{tpu_custom_call.1}
  #allocation0 [shape = 'u32[]', space=smem, size = 0x4, offset = 0x4, fixed_abs, tag = 'smem constant byte address 0x4 - core index']
  #allocation1 [shape = 'u32[72,128]{1,0:T(1,128)}', space=vmem, size = 0x9000, scoped, tag = 'internal scratch']
  #allocation2 [shape = 'bf16[2,10,10,8]{3,2,1,0:T(8,128)(2,1)}', space=vmem, size = 0x14000, scoped, tag = 'scratch operand']
  %s0 = inlined_call_operand.vmem [shape: bf16[2,10,10,4], index: 0, kind: input, shape index: {}]
  %s1 = inlined_call_operand.vmem [shape: bf16[9,4,8], index: 1, kind: input, shape index: {}]
  %s2 = inlined_call_operand.vmem [shape: f32[1,8], index: 2, kind: input, shape index: {}]
  %s3 = inlined_call_operand.vmem [shape: f32[1,8], index: 3, kind: input, shape index: {}]
  %s4 = inlined_call_operand.vmem [shape: f32[1,8], index: 4, kind: input, shape index: {}]
  %s5 = inlined_call_operand.vmem [shape: bf16[9,8,8], index: 5, kind: input, shape index: {}]
  %s6 = inlined_call_operand.vmem [shape: f32[1,8], index: 6, kind: input, shape index: {}]
  %s7 = inlined_call_operand.vmem [shape: f32[1,8], index: 7, kind: input, shape index: {}]
  %s8 = inlined_call_operand.vmem [shape: f32[1,8], index: 8, kind: input, shape index: {}]
  %s9 = inlined_call_operand.vmem [shape: f32[1,128,8], index: 9, kind: output, shape index: {}]
  %s10 = sld [smem:[#allocation0]]
  $region46: #{tpu_custom_call.1} parent=0
    _
  %s12 = ssub.s32 1, %s10
  %s13 = scalar_select 0, %s12, %s10
  // Predicated region
  $region2: #{tpu_custom_call.1} parent=0 // pred_check
    _
  $region3: #{tpu_custom_call.1} parent=0 // pred_check_branch
    %15 = sbr.rel (0) target = $region5
  $region4: #{tpu_custom_call.1} parent=0 // pred_region
    _
  $region5: #{tpu_custom_call.1} parent=0 // pred_fallthru
    _
  // Predicated region
  $region6: #{tpu_custom_call.1} parent=0 // pred_check
    _
  $region7: #{tpu_custom_call.1} parent=0 // pred_check_branch
    %17 = sbr.rel (0) target = $region9
  $region8: #{tpu_custom_call.1} parent=0 // pred_region
    _
  $region9: #{tpu_custom_call.1} parent=0 // pred_fallthru
    _
  // Predicated region
  $region10: #{tpu_custom_call.1} parent=0 // pred_check
    _
  $region11: #{tpu_custom_call.1} parent=0 // pred_check_branch
    %19 = sbr.rel (0) target = $region13
  $region12: #{tpu_custom_call.1} parent=0 // pred_region
    _
  $region13: #{tpu_custom_call.1} parent=0 // pred_fallthru
    _
  // Predicated region
  $region14: #{tpu_custom_call.1} parent=0 // pred_check
    _
  $region15: #{tpu_custom_call.1} parent=0 // pred_check_branch
    %21 = sbr.rel (0) target = $region17
  $region16: #{tpu_custom_call.1} parent=0 // pred_region
    _
  $region17: #{tpu_custom_call.1} parent=0 // pred_fallthru
    _
  // Predicated region
  $region18: #{tpu_custom_call.1} parent=0 // pred_check
    _
  $region19: #{tpu_custom_call.1} parent=0 // pred_check_branch
    %23 = sbr.rel (0) target = $region21
  $region20: #{tpu_custom_call.1} parent=0 // pred_region
    _
  $region21: #{tpu_custom_call.1} parent=0 // pred_fallthru
    _
  // Predicated region
  $region22: #{tpu_custom_call.1} parent=0 // pred_check
    _
  $region23: #{tpu_custom_call.1} parent=0 // pred_check_branch
    %25 = sbr.rel (0) target = $region25
  $region24: #{tpu_custom_call.1} parent=0 // pred_region
    _
  $region25: #{tpu_custom_call.1} parent=0 // pred_fallthru
    _
  // Predicated region
  $region26: #{tpu_custom_call.1} parent=0 // pred_check
    _
  $region27: #{tpu_custom_call.1} parent=0 // pred_check_branch
    %27 = sbr.rel (0) target = $region29
  $region28: #{tpu_custom_call.1} parent=0 // pred_region
    _
  $region29: #{tpu_custom_call.1} parent=0 // pred_fallthru
    _
  // Predicated region
  $region30: #{tpu_custom_call.1} parent=0 // pred_check
    _
  $region31: #{tpu_custom_call.1} parent=0 // pred_check_branch
    %29 = sbr.rel (0) target = $region33
  $region32: #{tpu_custom_call.1} parent=0 // pred_region
    _
  $region33: #{tpu_custom_call.1} parent=0 // pred_fallthru
    _
  // Predicated region
  $region34: #{tpu_custom_call.1} parent=0 // pred_check
    _
  $region35: #{tpu_custom_call.1} parent=0 // pred_check_branch
    %31 = sbr.rel (0) target = $region37
  $region36: #{tpu_custom_call.1} parent=0 // pred_region
    _
  $region37: #{tpu_custom_call.1} parent=0 // pred_fallthru
    _
  %v33 = vld [vmem:[%s0] sm:$0xf]
  %v34 = vld [vmem:[%s0 + $0x8] sm:$0xf]
  %v35 = vld [vmem:[%s0 + $0x10] sm:$0xf]
  %v36 = vld [vmem:[%s0 + $0x18] sm:$0xf]
  %v37 = vld [vmem:[%s0 + $0x20] sm:$0xf]
  %v38 = vld [vmem:[%s0 + $0x28] sm:$0xf]
  %v39 = vld [vmem:[%s0 + $0x30] sm:$0xf]
  %v40 = vld [vmem:[%s0 + $0x38] sm:$0xf]
  %v41 = vld [vmem:[%s0 + $0x50] sm:$0xf]
  %v42 = vld [vmem:[%s0 + $0x58] sm:$0xf]
  %v43 = vld [vmem:[%s0 + $0x60] sm:$0xf]
  %v44 = vld [vmem:[%s0 + $0x68] sm:$0xf]
  %v45 = vld [vmem:[%s0 + $0x70] sm:$0xf]
  %v46 = vld [vmem:[%s0 + $0x78] sm:$0xf]
  %v47 = vld [vmem:[%s0 + $0x80] sm:$0xf]
  %v48 = vld [vmem:[%s0 + $0x88] sm:$0xf]
  %v49 = vld [vmem:[%s1] sm:$0x3]
  %v50 = vld [vmem:[%s0 + $0x4] sm:$0x1]
  %v51 = vld [vmem:[%s0 + $0xc] sm:$0x1]
  %v52 = vld [vmem:[%s0 + $0x14] sm:$0x1]
  %v53 = vld [vmem:[%s0 + $0x1c] sm:$0x1]
  %v54 = vld [vmem:[%s0 + $0x24] sm:$0x1]
  %v55 = vld [vmem:[%s0 + $0x2c] sm:$0x1]
  %v56 = vld [vmem:[%s0 + $0x34] sm:$0x1]
  %v57 = vld [vmem:[%s0 + $0x3c] sm:$0x1]
  %v58 = vld [vmem:[%s0 + $0x54] sm:$0x1]
  %v59 = vld [vmem:[%s0 + $0x5c] sm:$0x1]
  %v60 = vld [vmem:[%s0 + $0x64] sm:$0x1]
  %v61 = vld [vmem:[%s0 + $0x6c] sm:$0x1]
  %v62 = vld [vmem:[%s0 + $0x74] sm:$0x1]
  %v63 = vld [vmem:[%s0 + $0x7c] sm:$0x1]
  %v64 = vld [vmem:[%s0 + $0x84] sm:$0x1]
  %v65 = vld [vmem:[%s0 + $0x8c] sm:$0x1]
  %vm66 = vsmask.f32 3328
  %vm67 = vsmask.f32 7440
  %vm68 = vmor %vm66, %vm67
  %v70 = vshrl.u32 %v33, 16
  %v72 = vrot.slane %v70, 4
  %v73 = vshll.u32 %v33, 16
  %v75 = vrot.slane %v73, 5
  %v76 = vor.u32 %v72, %v75
  %v77 = vrot.slane %v76, 4
  %v79 = vshll.u32 %v50, 16
  %v81 = vrot.slane %v79, 5
  %v82 = vsel %vm68, %v77, %v81
  %v84 = vshrl.u32 %v34, 16
  %v86 = vrot.slane %v84, 4
  %v87 = vshll.u32 %v34, 16
  %v89 = vrot.slane %v87, 5
  %v90 = vor.u32 %v86, %v89
  %v91 = vrot.slane %v90, 4
  %v93 = vshll.u32 %v51, 16
  %v95 = vrot.slane %v93, 5
  %v96 = vsel %vm68, %v91, %v95
  %v98 = vshrl.u32 %v35, 16
  %v100 = vrot.slane %v98, 4
  %v101 = vshll.u32 %v35, 16
  %v103 = vrot.slane %v101, 5
  %v104 = vor.u32 %v100, %v103
  %v105 = vrot.slane %v104, 4
  %v107 = vshll.u32 %v52, 16
  %v109 = vrot.slane %v107, 5
  %v110 = vsel %vm68, %v105, %v109
  %v112 = vshrl.u32 %v36, 16
  %v114 = vrot.slane %v112, 4
  %v115 = vshll.u32 %v36, 16
  %v117 = vrot.slane %v115, 5
  %v118 = vor.u32 %v114, %v117
  %v119 = vrot.slane %v118, 4
  %v121 = vshll.u32 %v53, 16
  %v123 = vrot.slane %v121, 5
  %v124 = vsel %vm68, %v119, %v123
  %v126 = vshrl.u32 %v37, 16
  %v128 = vrot.slane %v126, 4
  %v129 = vshll.u32 %v37, 16
  %v131 = vrot.slane %v129, 5
  %v132 = vor.u32 %v128, %v131
  %v133 = vrot.slane %v132, 4
  %v135 = vshll.u32 %v54, 16
  %v137 = vrot.slane %v135, 5
  %v138 = vsel %vm68, %v133, %v137
  %v140 = vshrl.u32 %v38, 16
  %v142 = vrot.slane %v140, 4
  %v143 = vshll.u32 %v38, 16
  %v145 = vrot.slane %v143, 5
  %v146 = vor.u32 %v142, %v145
  %v147 = vrot.slane %v146, 4
  %v149 = vshll.u32 %v55, 16
  %v151 = vrot.slane %v149, 5
  %v152 = vsel %vm68, %v147, %v151
  %v154 = vshrl.u32 %v39, 16
  %v156 = vrot.slane %v154, 4
  %v157 = vshll.u32 %v39, 16
  %v159 = vrot.slane %v157, 5
  %v160 = vor.u32 %v156, %v159
  %v161 = vrot.slane %v160, 4
  %v163 = vshll.u32 %v56, 16
  %v165 = vrot.slane %v163, 5
  %v166 = vsel %vm68, %v161, %v165
  %v168 = vshrl.u32 %v40, 16
  %v170 = vrot.slane %v168, 4
  %v171 = vshll.u32 %v40, 16
  %v173 = vrot.slane %v171, 5
  %v174 = vor.u32 %v170, %v173
  %v175 = vrot.slane %v174, 4
  %v177 = vshll.u32 %v57, 16
  %v179 = vrot.slane %v177, 5
  %v180 = vsel %vm68, %v175, %v179
  %v182 = vshrl.u32 %v41, 16
  %v184 = vrot.slane %v182, 4
  %v185 = vshll.u32 %v41, 16
  %v187 = vrot.slane %v185, 5
  %v188 = vor.u32 %v184, %v187
  %v189 = vrot.slane %v188, 4
  %v191 = vshll.u32 %v58, 16
  %v193 = vrot.slane %v191, 5
  %v194 = vsel %vm68, %v189, %v193
  %v196 = vshrl.u32 %v42, 16
  %v198 = vrot.slane %v196, 4
  %v199 = vshll.u32 %v42, 16
  %v201 = vrot.slane %v199, 5
  %v202 = vor.u32 %v198, %v201
  %v203 = vrot.slane %v202, 4
  %v205 = vshll.u32 %v59, 16
  %v207 = vrot.slane %v205, 5
  %v208 = vsel %vm68, %v203, %v207
  %v210 = vshrl.u32 %v43, 16
  %v212 = vrot.slane %v210, 4
  %v213 = vshll.u32 %v43, 16
  %v215 = vrot.slane %v213, 5
  %v216 = vor.u32 %v212, %v215
  %v217 = vrot.slane %v216, 4
  %v219 = vshll.u32 %v60, 16
  %v221 = vrot.slane %v219, 5
  %v222 = vsel %vm68, %v217, %v221
  %v224 = vshrl.u32 %v44, 16
  %v226 = vrot.slane %v224, 4
  %v227 = vshll.u32 %v44, 16
  %v229 = vrot.slane %v227, 5
  %v230 = vor.u32 %v226, %v229
  %v231 = vrot.slane %v230, 4
  %v233 = vshll.u32 %v61, 16
  %v235 = vrot.slane %v233, 5
  %v236 = vsel %vm68, %v231, %v235
  %v238 = vshrl.u32 %v45, 16
  %v240 = vrot.slane %v238, 4
  %v241 = vshll.u32 %v45, 16
  %v243 = vrot.slane %v241, 5
  %v244 = vor.u32 %v240, %v243
  %v245 = vrot.slane %v244, 4
  %v247 = vshll.u32 %v62, 16
  %v249 = vrot.slane %v247, 5
  %v250 = vsel %vm68, %v245, %v249
  %v252 = vshrl.u32 %v46, 16
  %v254 = vrot.slane %v252, 4
  %v255 = vshll.u32 %v46, 16
  %v257 = vrot.slane %v255, 5
  %v258 = vor.u32 %v254, %v257
  %v259 = vrot.slane %v258, 4
  %v261 = vshll.u32 %v63, 16
  %v263 = vrot.slane %v261, 5
  %v264 = vsel %vm68, %v259, %v263
  %v266 = vshrl.u32 %v47, 16
  %v268 = vrot.slane %v266, 4
  %v269 = vshll.u32 %v47, 16
  %v271 = vrot.slane %v269, 5
  %v272 = vor.u32 %v268, %v271
  %v273 = vrot.slane %v272, 4
  %v275 = vshll.u32 %v64, 16
  %v277 = vrot.slane %v275, 5
  %v278 = vsel %vm68, %v273, %v277
  %v280 = vshrl.u32 %v48, 16
  %v282 = vrot.slane %v280, 4
  %v283 = vshll.u32 %v48, 16
  %v285 = vrot.slane %v283, 5
  %v286 = vor.u32 %v282, %v285
  %v287 = vrot.slane %v286, 4
  %v289 = vshll.u32 %v65, 16
  %v291 = vrot.slane %v289, 5
  %v292 = vsel %vm68, %v287, %v291
  %s293 = scalar_lea.vmem %s1, 2
  %v294 = vld [vmem:[%s293] sm:$0x3]
  %v295 = vunpack.c.l.b16 %v82
  %v296 = vunpack.c.l.b16 %v96
  %v297 = vunpack.c.l.b16 %v110
  %v298 = vunpack.c.l.b16 %v124
  %v299 = vunpack.c.l.b16 %v138
  %v300 = vunpack.c.l.b16 %v152
  %v301 = vunpack.c.l.b16 %v166
  %v302 = vunpack.c.l.b16 %v180
  %v303 = vunpack.c.l.b16 %v194
  %v304 = vunpack.c.l.b16 %v208
  %v305 = vunpack.c.l.b16 %v222
  %v306 = vunpack.c.l.b16 %v236
  %v307 = vunpack.c.l.b16 %v250
  %v308 = vunpack.c.l.b16 %v264
  %v309 = vunpack.c.l.b16 %v278
  %v310 = vunpack.c.l.b16 %v292
  %v311 = vpack.c.b16 %v296, %v295
  %v312 = vpack.c.b16 %v298, %v297
  %v313 = vpack.c.b16 %v300, %v299
  %v314 = vpack.c.b16 %v302, %v301
  %v315 = vpack.c.b16 %v304, %v303
  %v316 = vpack.c.b16 %v306, %v305
  %v317 = vpack.c.b16 %v308, %v307
  %v318 = vpack.c.b16 %v310, %v309
  %vm319 = vcmask 31744
  %v321 = vsel %vm319, %v311, 0
  %v324 = vsel %vm319, %v312, 0
  %v327 = vsel %vm319, %v313, 0
  %v330 = vsel %vm319, %v314, 0
  %v333 = vsel %vm319, %v315, 0
  %v336 = vsel %vm319, %v316, 0
  %v339 = vsel %vm319, %v317, 0
  %v342 = vsel %vm319, %v318, 0
  %vm344 = vcmask 1041408
  %v346 = vsel %vm344, %v294, 0
  %348 = vmatpush.bf16.msra.mxu0 0
  %349 = vmatpush.bf16.msra.mxu0 0
  %350 = vmatpush.bf16.msra.mxu0 0
  %351 = vmatpush.bf16.msra.mxu0 0
  %352 = vmatpush.bf16.msra.mxu0 0
  %353 = vmatpush.bf16.msra.mxu0 0
  %354 = vmatpush.bf16.msra.mxu0 0
  %355 = vmatpush.bf16.msra.mxu0 %v346
  %356 = vmatmul.bf16.gmra.mxu0 %v321
  %v357 = vpop.f32.mrf.mxu0
  %v358 = vadd.f32 0.0, %v357
  %v359 = vpop.f32.mrf.mxu0
  %v360 = vadd.f32 0.0, %v359
  %361 = vmatmul.bf16.gmra.mxu0 %v324
  %v362 = vpop.f32.mrf.mxu0
  %v363 = vadd.f32 0.0, %v362
  %v364 = vpop.f32.mrf.mxu0
  %v365 = vadd.f32 0.0, %v364
  %366 = vmatmul.bf16.gmra.mxu0 %v327
  %v367 = vpop.f32.mrf.mxu0
  %v368 = vadd.f32 0.0, %v367
  %v369 = vpop.f32.mrf.mxu0
  %v370 = vadd.f32 0.0, %v369
  %371 = vmatmul.bf16.gmra.mxu0 %v330
  %v372 = vpop.f32.mrf.mxu0
  %v373 = vadd.f32 0.0, %v372
  %v374 = vpop.f32.mrf.mxu0
  %v375 = vadd.f32 0.0, %v374
  %376 = vmatmul.bf16.gmra.mxu0 %v333
  %v377 = vpop.f32.mrf.mxu0
  %v378 = vadd.f32 0.0, %v377
  %v379 = vpop.f32.mrf.mxu0
  %v380 = vadd.f32 0.0, %v379
  %381 = vmatmul.bf16.gmra.mxu0 %v336
  %v382 = vpop.f32.mrf.mxu0
  %v383 = vadd.f32 0.0, %v382
  %v384 = vpop.f32.mrf.mxu0
  %v385 = vadd.f32 0.0, %v384
  %386 = vmatmul.bf16.gmra.mxu0 %v339
  %v387 = vpop.f32.mrf.mxu0
  %v388 = vadd.f32 0.0, %v387
  %v389 = vpop.f32.mrf.mxu0
  %v390 = vadd.f32 0.0, %v389
  %391 = vmatmul.bf16.gmra.mxu0 %v342
  %v392 = vpop.f32.mrf.mxu0
  %v393 = vadd.f32 0.0, %v392
  %v394 = vpop.f32.mrf.mxu0
  %v395 = vadd.f32 0.0, %v394
  %396 = vdwg.mxu0
  %v413 = vunpack.c.l.b16 %v33
  %v414 = vunpack.c.l.b16 %v34
  %v415 = vunpack.c.l.b16 %v35
  %v416 = vunpack.c.l.b16 %v36
  %v417 = vunpack.c.l.b16 %v37
  %v418 = vunpack.c.l.b16 %v38
  %v419 = vunpack.c.l.b16 %v39
  %v420 = vunpack.c.l.b16 %v40
  %v421 = vunpack.c.l.b16 %v41
  %v422 = vunpack.c.l.b16 %v42
  %v423 = vunpack.c.l.b16 %v43
  %v424 = vunpack.c.l.b16 %v44
  %v425 = vunpack.c.l.b16 %v45
  %v426 = vunpack.c.l.b16 %v46
  %v427 = vunpack.c.l.b16 %v47
  %v428 = vunpack.c.l.b16 %v48
  %v429 = vpack.c.b16 %v414, %v413
  %v430 = vpack.c.b16 %v416, %v415
  %v431 = vpack.c.b16 %v418, %v417
  %v432 = vpack.c.b16 %v420, %v419
  %v433 = vpack.c.b16 %v422, %v421
  %v434 = vpack.c.b16 %v424, %v423
  %v435 = vpack.c.b16 %v426, %v425
  %v436 = vpack.c.b16 %v428, %v427
  %v438 = vsel %vm319, %v429, 0
  %v441 = vsel %vm319, %v430, 0
  %v444 = vsel %vm319, %v431, 0
  %v447 = vsel %vm319, %v432, 0
  %v450 = vsel %vm319, %v433, 0
  %v453 = vsel %vm319, %v434, 0
  %v456 = vsel %vm319, %v435, 0
  %v459 = vsel %vm319, %v436, 0
  %v462 = vsel %vm344, %v49, 0
  %464 = vmatpush.bf16.msra.mxu0 0
  %465 = vmatpush.bf16.msra.mxu0 0
  %466 = vmatpush.bf16.msra.mxu0 0
  %467 = vmatpush.bf16.msra.mxu0 0
  %468 = vmatpush.bf16.msra.mxu0 0
  %469 = vmatpush.bf16.msra.mxu0 0
  %470 = vmatpush.bf16.msra.mxu0 0
  %471 = vmatpush.bf16.msra.mxu0 %v462
  %472 = vmatmul.bf16.gmra.mxu0 %v438
  %v473 = vpop.f32.mrf.mxu0
  %v474 = vadd.f32 %v358, %v473
  %v475 = vpop.f32.mrf.mxu0
  %v476 = vadd.f32 %v360, %v475
  %477 = vmatmul.bf16.gmra.mxu0 %v441
  %v478 = vpop.f32.mrf.mxu0
  %v479 = vadd.f32 %v363, %v478
  %v480 = vpop.f32.mrf.mxu0
  %v481 = vadd.f32 %v365, %v480
  %482 = vmatmul.bf16.gmra.mxu0 %v444
  %v483 = vpop.f32.mrf.mxu0
  %v484 = vadd.f32 %v368, %v483
  %v485 = vpop.f32.mrf.mxu0
  %v486 = vadd.f32 %v370, %v485
  %487 = vmatmul.bf16.gmra.mxu0 %v447
  %v488 = vpop.f32.mrf.mxu0
  %v489 = vadd.f32 %v373, %v488
  %v490 = vpop.f32.mrf.mxu0
  %v491 = vadd.f32 %v375, %v490
  %492 = vmatmul.bf16.gmra.mxu0 %v450
  %v493 = vpop.f32.mrf.mxu0
  %v494 = vadd.f32 %v378, %v493
  %v495 = vpop.f32.mrf.mxu0
  %v496 = vadd.f32 %v380, %v495
  %497 = vmatmul.bf16.gmra.mxu0 %v453
  %v498 = vpop.f32.mrf.mxu0
  %v499 = vadd.f32 %v383, %v498
  %v500 = vpop.f32.mrf.mxu0
  %v501 = vadd.f32 %v385, %v500
  %502 = vmatmul.bf16.gmra.mxu0 %v456
  %v503 = vpop.f32.mrf.mxu0
  %v504 = vadd.f32 %v388, %v503
  %v505 = vpop.f32.mrf.mxu0
  %v506 = vadd.f32 %v390, %v505
  %507 = vmatmul.bf16.gmra.mxu0 %v459
  %v508 = vpop.f32.mrf.mxu0
  %v509 = vadd.f32 %v393, %v508
  %v510 = vpop.f32.mrf.mxu0
  %v511 = vadd.f32 %v395, %v510
  %512 = vdwg.mxu0
  %v513 = vld [vmem:[%s0] sm:$0xe]
  %v514 = vld [vmem:[%s0 + $0x8] sm:$0xe]
  %v515 = vld [vmem:[%s0 + $0x10] sm:$0xe]
  %v516 = vld [vmem:[%s0 + $0x18] sm:$0xe]
  %v517 = vld [vmem:[%s0 + $0x20] sm:$0xe]
  %v518 = vld [vmem:[%s0 + $0x28] sm:$0xe]
  %v519 = vld [vmem:[%s0 + $0x30] sm:$0xe]
  %v520 = vld [vmem:[%s0 + $0x38] sm:$0xe]
  %v521 = vld [vmem:[%s0 + $0x50] sm:$0xe]
  %v522 = vld [vmem:[%s0 + $0x58] sm:$0xe]
  %v523 = vld [vmem:[%s0 + $0x60] sm:$0xe]
  %v524 = vld [vmem:[%s0 + $0x68] sm:$0xe]
  %v525 = vld [vmem:[%s0 + $0x70] sm:$0xe]
  %v526 = vld [vmem:[%s0 + $0x78] sm:$0xe]
  %v527 = vld [vmem:[%s0 + $0x80] sm:$0xe]
  %v528 = vld [vmem:[%s0 + $0x88] sm:$0xe]
  %vm561 = vcmask 1042432
  %vm562 = vcmask 1046532
  %vm563 = vmor %vm561, %vm562
  %v564 = vrot.slane %v513, 5
  %v565 = vrot.slane %v564, 4
  %v566 = vrot.slane %v50, 5
  %v567 = vsel %vm563, %v565, %v566
  %v568 = vrot.slane %v514, 5
  %v569 = vrot.slane %v568, 4
  %v570 = vrot.slane %v51, 5
  %v571 = vsel %vm563, %v569, %v570
  %v572 = vrot.slane %v515, 5
  %v573 = vrot.slane %v572, 4
  %v574 = vrot.slane %v52, 5
  %v575 = vsel %vm563, %v573, %v574
  %v576 = vrot.slane %v516, 5
  %v577 = vrot.slane %v576, 4
  %v578 = vrot.slane %v53, 5
  %v579 = vsel %vm563, %v577, %v578
  %v580 = vrot.slane %v517, 5
  %v581 = vrot.slane %v580, 4
  %v582 = vrot.slane %v54, 5
  %v583 = vsel %vm563, %v581, %v582
  %v584 = vrot.slane %v518, 5
  %v585 = vrot.slane %v584, 4
  %v586 = vrot.slane %v55, 5
  %v587 = vsel %vm563, %v585, %v586
  %v588 = vrot.slane %v519, 5
  %v589 = vrot.slane %v588, 4
  %v590 = vrot.slane %v56, 5
  %v591 = vsel %vm563, %v589, %v590
  %v592 = vrot.slane %v520, 5
  %v593 = vrot.slane %v592, 4
  %v594 = vrot.slane %v57, 5
  %v595 = vsel %vm563, %v593, %v594
  %v596 = vrot.slane %v521, 5
  %v597 = vrot.slane %v596, 4
  %v598 = vrot.slane %v58, 5
  %v599 = vsel %vm563, %v597, %v598
  %v600 = vrot.slane %v522, 5
  %v601 = vrot.slane %v600, 4
  %v602 = vrot.slane %v59, 5
  %v603 = vsel %vm563, %v601, %v602
  %v604 = vrot.slane %v523, 5
  %v605 = vrot.slane %v604, 4
  %v606 = vrot.slane %v60, 5
  %v607 = vsel %vm563, %v605, %v606
  %v608 = vrot.slane %v524, 5
  %v609 = vrot.slane %v608, 4
  %v610 = vrot.slane %v61, 5
  %v611 = vsel %vm563, %v609, %v610
  %v612 = vrot.slane %v525, 5
  %v613 = vrot.slane %v612, 4
  %v614 = vrot.slane %v62, 5
  %v615 = vsel %vm563, %v613, %v614
  %v616 = vrot.slane %v526, 5
  %v617 = vrot.slane %v616, 4
  %v618 = vrot.slane %v63, 5
  %v619 = vsel %vm563, %v617, %v618
  %v620 = vrot.slane %v527, 5
  %v621 = vrot.slane %v620, 4
  %v622 = vrot.slane %v64, 5
  %v623 = vsel %vm563, %v621, %v622
  %v624 = vrot.slane %v528, 5
  %v625 = vrot.slane %v624, 4
  %v626 = vrot.slane %v65, 5
  %v627 = vsel %vm563, %v625, %v626
  %s628 = scalar_lea.vmem %s1, 4
  %v629 = vld [vmem:[%s628] sm:$0x3]
  %v630 = vunpack.c.l.b16 %v567
  %v631 = vunpack.c.l.b16 %v571
  %v632 = vunpack.c.l.b16 %v575
  %v633 = vunpack.c.l.b16 %v579
  %v634 = vunpack.c.l.b16 %v583
  %v635 = vunpack.c.l.b16 %v587
  %v636 = vunpack.c.l.b16 %v591
  %v637 = vunpack.c.l.b16 %v595
  %v638 = vunpack.c.l.b16 %v599
  %v639 = vunpack.c.l.b16 %v603
  %v640 = vunpack.c.l.b16 %v607
  %v641 = vunpack.c.l.b16 %v611
  %v642 = vunpack.c.l.b16 %v615
  %v643 = vunpack.c.l.b16 %v619
  %v644 = vunpack.c.l.b16 %v623
  %v645 = vunpack.c.l.b16 %v627
  %v646 = vpack.c.b16 %v631, %v630
  %v647 = vpack.c.b16 %v633, %v632
  %v648 = vpack.c.b16 %v635, %v634
  %v649 = vpack.c.b16 %v637, %v636
  %v650 = vpack.c.b16 %v639, %v638
  %v651 = vpack.c.b16 %v641, %v640
  %v652 = vpack.c.b16 %v643, %v642
  %v653 = vpack.c.b16 %v645, %v644
  %v655 = vsel %vm319, %v646, 0
  %v658 = vsel %vm319, %v647, 0
  %v661 = vsel %vm319, %v648, 0
  %v664 = vsel %vm319, %v649, 0
  %v667 = vsel %vm319, %v650, 0
  %v670 = vsel %vm319, %v651, 0
  %v673 = vsel %vm319, %v652, 0
  %v676 = vsel %vm319, %v653, 0
  %v679 = vsel %vm344, %v629, 0
  %681 = vmatpush.bf16.msra.mxu0 0
  %682 = vmatpush.bf16.msra.mxu0 0
  %683 = vmatpush.bf16.msra.mxu0 0
  %684 = vmatpush.bf16.msra.mxu0 0
  %685 = vmatpush.bf16.msra.mxu0 0
  %686 = vmatpush.bf16.msra.mxu0 0
  %687 = vmatpush.bf16.msra.mxu0 0
  %688 = vmatpush.bf16.msra.mxu0 %v679
  %689 = vmatmul.bf16.gmra.mxu0 %v655
  %v690 = vpop.f32.mrf.mxu0
  %v691 = vadd.f32 0.0, %v690
  %v692 = vpop.f32.mrf.mxu0
  %v693 = vadd.f32 0.0, %v692
  %694 = vmatmul.bf16.gmra.mxu0 %v658
  %v695 = vpop.f32.mrf.mxu0
  %v696 = vadd.f32 0.0, %v695
  %v697 = vpop.f32.mrf.mxu0
  %v698 = vadd.f32 0.0, %v697
  %699 = vmatmul.bf16.gmra.mxu0 %v661
  %v700 = vpop.f32.mrf.mxu0
  %v701 = vadd.f32 0.0, %v700
  %v702 = vpop.f32.mrf.mxu0
  %v703 = vadd.f32 0.0, %v702
  %704 = vmatmul.bf16.gmra.mxu0 %v664
  %v705 = vpop.f32.mrf.mxu0
  %v706 = vadd.f32 0.0, %v705
  %v707 = vpop.f32.mrf.mxu0
  %v708 = vadd.f32 0.0, %v707
  %709 = vmatmul.bf16.gmra.mxu0 %v667
  %v710 = vpop.f32.mrf.mxu0
  %v711 = vadd.f32 0.0, %v710
  %v712 = vpop.f32.mrf.mxu0
  %v713 = vadd.f32 0.0, %v712
  %714 = vmatmul.bf16.gmra.mxu0 %v670
  %v715 = vpop.f32.mrf.mxu0
  %v716 = vadd.f32 0.0, %v715
  %v717 = vpop.f32.mrf.mxu0
  %v718 = vadd.f32 0.0, %v717
  %719 = vmatmul.bf16.gmra.mxu0 %v673
  %v720 = vpop.f32.mrf.mxu0
  %v721 = vadd.f32 0.0, %v720
  %v722 = vpop.f32.mrf.mxu0
  %v723 = vadd.f32 0.0, %v722
  %724 = vmatmul.bf16.gmra.mxu0 %v676
  %v725 = vpop.f32.mrf.mxu0
  %v726 = vadd.f32 0.0, %v725
  %v727 = vpop.f32.mrf.mxu0
  %v728 = vadd.f32 0.0, %v727
  %729 = vdwg.mxu0
  %v730 = vadd.f32 %v474, %v691
  %v731 = vadd.f32 %v476, %v693
  %v732 = vadd.f32 %v479, %v696
  %v733 = vadd.f32 %v481, %v698
  %v734 = vadd.f32 %v484, %v701
  %v735 = vadd.f32 %v486, %v703
  %v736 = vadd.f32 %v489, %v706
  %v737 = vadd.f32 %v491, %v708
  %v738 = vadd.f32 %v494, %v711
  %v739 = vadd.f32 %v496, %v713
  %v740 = vadd.f32 %v499, %v716
  %v741 = vadd.f32 %v501, %v718
  %v742 = vadd.f32 %v504, %v721
  %v743 = vadd.f32 %v506, %v723
  %v744 = vadd.f32 %v509, %v726
  %v745 = vadd.f32 %v511, %v728
  %s746 = scalar_lea.vmem %s0, 8
  %v747 = vld [vmem:[%s746] sm:$0xf]
  %v748 = vld [vmem:[%s746 + $0x8] sm:$0xf]
  %v749 = vld [vmem:[%s746 + $0x10] sm:$0xf]
  %v750 = vld [vmem:[%s746 + $0x18] sm:$0xf]
  %v751 = vld [vmem:[%s746 + $0x20] sm:$0xf]
  %v752 = vld [vmem:[%s746 + $0x28] sm:$0xf]
  %v753 = vld [vmem:[%s746 + $0x30] sm:$0xf]
  %v754 = vld [vmem:[%s746 + $0x38] sm:$0xf]
  %v755 = vld [vmem:[%s746 + $0x50] sm:$0xf]
  %v756 = vld [vmem:[%s746 + $0x58] sm:$0xf]
  %v757 = vld [vmem:[%s746 + $0x60] sm:$0xf]
  %v758 = vld [vmem:[%s746 + $0x68] sm:$0xf]
  %v759 = vld [vmem:[%s746 + $0x70] sm:$0xf]
  %v760 = vld [vmem:[%s746 + $0x78] sm:$0xf]
  %v761 = vld [vmem:[%s746 + $0x80] sm:$0xf]
  %v762 = vld [vmem:[%s746 + $0x88] sm:$0xf]
  %s763 = scalar_lea.vmem %s1, 6
  %v764 = vld [vmem:[%s763] sm:$0x3]
  %v781 = vunpack.c.l.b16 %v747
  %v782 = vunpack.c.l.b16 %v748
  %v783 = vunpack.c.l.b16 %v749
  %v784 = vunpack.c.l.b16 %v750
  %v785 = vunpack.c.l.b16 %v751
  %v786 = vunpack.c.l.b16 %v752
  %v787 = vunpack.c.l.b16 %v753
  %v788 = vunpack.c.l.b16 %v754
  %v789 = vunpack.c.l.b16 %v755
  %v790 = vunpack.c.l.b16 %v756
  %v791 = vunpack.c.l.b16 %v757
  %v792 = vunpack.c.l.b16 %v758
  %v793 = vunpack.c.l.b16 %v759
  %v794 = vunpack.c.l.b16 %v760
  %v795 = vunpack.c.l.b16 %v761
  %v796 = vunpack.c.l.b16 %v762
  %v797 = vpack.c.b16 %v782, %v781
  %v798 = vpack.c.b16 %v784, %v783
  %v799 = vpack.c.b16 %v786, %v785
  %v800 = vpack.c.b16 %v788, %v787
  %v801 = vpack.c.b16 %v790, %v789
  %v802 = vpack.c.b16 %v792, %v791
  %v803 = vpack.c.b16 %v794, %v793
  %v804 = vpack.c.b16 %v796, %v795
  %v806 = vsel %vm319, %v797, 0
  %v809 = vsel %vm319, %v798, 0
  %v812 = vsel %vm319, %v799, 0
  %v815 = vsel %vm319, %v800, 0
  %v818 = vsel %vm319, %v801, 0
  %v821 = vsel %vm319, %v802, 0
  %v824 = vsel %vm319, %v803, 0
  %v827 = vsel %vm319, %v804, 0
  %v830 = vsel %vm344, %v764, 0
  %832 = vmatpush.bf16.msra.mxu0 0
  %833 = vmatpush.bf16.msra.mxu0 0
  %834 = vmatpush.bf16.msra.mxu0 0
  %835 = vmatpush.bf16.msra.mxu0 0
  %836 = vmatpush.bf16.msra.mxu0 0
  %837 = vmatpush.bf16.msra.mxu0 0
  %838 = vmatpush.bf16.msra.mxu0 0
  %839 = vmatpush.bf16.msra.mxu0 %v830
  %840 = vmatmul.bf16.gmra.mxu0 %v806
  %v841 = vpop.f32.mrf.mxu0
  %v842 = vadd.f32 0.0, %v841
  %v843 = vpop.f32.mrf.mxu0
  %v844 = vadd.f32 0.0, %v843
  %845 = vmatmul.bf16.gmra.mxu0 %v809
  %v846 = vpop.f32.mrf.mxu0
  %v847 = vadd.f32 0.0, %v846
  %v848 = vpop.f32.mrf.mxu0
  %v849 = vadd.f32 0.0, %v848
  %850 = vmatmul.bf16.gmra.mxu0 %v812
  %v851 = vpop.f32.mrf.mxu0
  %v852 = vadd.f32 0.0, %v851
  %v853 = vpop.f32.mrf.mxu0
  %v854 = vadd.f32 0.0, %v853
  %855 = vmatmul.bf16.gmra.mxu0 %v815
  %v856 = vpop.f32.mrf.mxu0
  %v857 = vadd.f32 0.0, %v856
  %v858 = vpop.f32.mrf.mxu0
  %v859 = vadd.f32 0.0, %v858
  %860 = vmatmul.bf16.gmra.mxu0 %v818
  %v861 = vpop.f32.mrf.mxu0
  %v862 = vadd.f32 0.0, %v861
  %v863 = vpop.f32.mrf.mxu0
  %v864 = vadd.f32 0.0, %v863
  %865 = vmatmul.bf16.gmra.mxu0 %v821
  %v866 = vpop.f32.mrf.mxu0
  %v867 = vadd.f32 0.0, %v866
  %v868 = vpop.f32.mrf.mxu0
  %v869 = vadd.f32 0.0, %v868
  %870 = vmatmul.bf16.gmra.mxu0 %v824
  %v871 = vpop.f32.mrf.mxu0
  %v872 = vadd.f32 0.0, %v871
  %v873 = vpop.f32.mrf.mxu0
  %v874 = vadd.f32 0.0, %v873
  %875 = vmatmul.bf16.gmra.mxu0 %v827
  %v876 = vpop.f32.mrf.mxu0
  %v877 = vadd.f32 0.0, %v876
  %v878 = vpop.f32.mrf.mxu0
  %v879 = vadd.f32 0.0, %v878
  %880 = vdwg.mxu0
  %v881 = vadd.f32 %v730, %v842
  %v882 = vadd.f32 %v731, %v844
  %v883 = vadd.f32 %v732, %v847
  %v884 = vadd.f32 %v733, %v849
  %v885 = vadd.f32 %v734, %v852
  %v886 = vadd.f32 %v735, %v854
  %v887 = vadd.f32 %v736, %v857
  %v888 = vadd.f32 %v737, %v859
  %v889 = vadd.f32 %v738, %v862
  %v890 = vadd.f32 %v739, %v864
  %v891 = vadd.f32 %v740, %v867
  %v892 = vadd.f32 %v741, %v869
  %v893 = vadd.f32 %v742, %v872
  %v894 = vadd.f32 %v743, %v874
  %v895 = vadd.f32 %v744, %v877
  %v896 = vadd.f32 %v745, %v879
  %v897 = vld [vmem:[%s746] sm:$0xf]
  %v898 = vld [vmem:[%s746 + $0x4] sm:$0x1]
  %v899 = vld [vmem:[%s746 + $0x8] sm:$0xf]
  %v900 = vld [vmem:[%s746 + $0xc] sm:$0x1]
  %v901 = vld [vmem:[%s746 + $0x10] sm:$0xf]
  %v902 = vld [vmem:[%s746 + $0x14] sm:$0x1]
  %v903 = vld [vmem:[%s746 + $0x18] sm:$0xf]
  %v904 = vld [vmem:[%s746 + $0x1c] sm:$0x1]
  %v905 = vld [vmem:[%s746 + $0x20] sm:$0xf]
  %v906 = vld [vmem:[%s746 + $0x24] sm:$0x1]
  %v907 = vld [vmem:[%s746 + $0x28] sm:$0xf]
  %v908 = vld [vmem:[%s746 + $0x2c] sm:$0x1]
  %v909 = vld [vmem:[%s746 + $0x30] sm:$0xf]
  %v910 = vld [vmem:[%s746 + $0x34] sm:$0x1]
  %v911 = vld [vmem:[%s746 + $0x38] sm:$0xf]
  %v912 = vld [vmem:[%s746 + $0x3c] sm:$0x1]
  %v913 = vld [vmem:[%s746 + $0x50] sm:$0xf]
  %v914 = vld [vmem:[%s746 + $0x54] sm:$0x1]
  %v915 = vld [vmem:[%s746 + $0x58] sm:$0xf]
  %v916 = vld [vmem:[%s746 + $0x5c] sm:$0x1]
  %v917 = vld [vmem:[%s746 + $0x60] sm:$0xf]
  %v918 = vld [vmem:[%s746 + $0x64] sm:$0x1]
  %v919 = vld [vmem:[%s746 + $0x68] sm:$0xf]
  %v920 = vld [vmem:[%s746 + $0x6c] sm:$0x1]
  %v921 = vld [vmem:[%s746 + $0x70] sm:$0xf]
  %v922 = vld [vmem:[%s746 + $0x74] sm:$0x1]
  %v923 = vld [vmem:[%s746 + $0x78] sm:$0xf]
  %v924 = vld [vmem:[%s746 + $0x7c] sm:$0x1]
  %v925 = vld [vmem:[%s746 + $0x80] sm:$0xf]
  %v926 = vld [vmem:[%s746 + $0x84] sm:$0x1]
  %v927 = vld [vmem:[%s746 + $0x88] sm:$0xf]
  %v928 = vld [vmem:[%s746 + $0x8c] sm:$0x1]
  %v930 = vshrl.u32 %v897, 16
  %v932 = vrot.slane %v930, 4
  %v933 = vshll.u32 %v897, 16
  %v935 = vrot.slane %v933, 5
  %v936 = vor.u32 %v932, %v935
  %v937 = vrot.slane %v936, 4
  %v939 = vshll.u32 %v898, 16
  %v941 = vrot.slane %v939, 5
  %v942 = vsel %vm68, %v937, %v941
  %v944 = vshrl.u32 %v899, 16
  %v946 = vrot.slane %v944, 4
  %v947 = vshll.u32 %v899, 16
  %v949 = vrot.slane %v947, 5
  %v950 = vor.u32 %v946, %v949
  %v951 = vrot.slane %v950, 4
  %v953 = vshll.u32 %v900, 16
  %v955 = vrot.slane %v953, 5
  %v956 = vsel %vm68, %v951, %v955
  %v958 = vshrl.u32 %v901, 16
  %v960 = vrot.slane %v958, 4
  %v961 = vshll.u32 %v901, 16
  %v963 = vrot.slane %v961, 5
  %v964 = vor.u32 %v960, %v963
  %v965 = vrot.slane %v964, 4
  %v967 = vshll.u32 %v902, 16
  %v969 = vrot.slane %v967, 5
  %v970 = vsel %vm68, %v965, %v969
  %v972 = vshrl.u32 %v903, 16
  %v974 = vrot.slane %v972, 4
  %v975 = vshll.u32 %v903, 16
  %v977 = vrot.slane %v975, 5
  %v978 = vor.u32 %v974, %v977
  %v979 = vrot.slane %v978, 4
  %v981 = vshll.u32 %v904, 16
  %v983 = vrot.slane %v981, 5
  %v984 = vsel %vm68, %v979, %v983
  %v986 = vshrl.u32 %v905, 16
  %v988 = vrot.slane %v986, 4
  %v989 = vshll.u32 %v905, 16
  %v991 = vrot.slane %v989, 5
  %v992 = vor.u32 %v988, %v991
  %v993 = vrot.slane %v992, 4
  %v995 = vshll.u32 %v906, 16
  %v997 = vrot.slane %v995, 5
  %v998 = vsel %vm68, %v993, %v997
  %v1000 = vshrl.u32 %v907, 16
  %v1002 = vrot.slane %v1000, 4
  %v1003 = vshll.u32 %v907, 16
  %v1005 = vrot.slane %v1003, 5
  %v1006 = vor.u32 %v1002, %v1005
  %v1007 = vrot.slane %v1006, 4
  %v1009 = vshll.u32 %v908, 16
  %v1011 = vrot.slane %v1009, 5
  %v1012 = vsel %vm68, %v1007, %v1011
  %v1014 = vshrl.u32 %v909, 16
  %v1016 = vrot.slane %v1014, 4
  %v1017 = vshll.u32 %v909, 16
  %v1019 = vrot.slane %v1017, 5
  %v1020 = vor.u32 %v1016, %v1019
  %v1021 = vrot.slane %v1020, 4
  %v1023 = vshll.u32 %v910, 16
  %v1025 = vrot.slane %v1023, 5
  %v1026 = vsel %vm68, %v1021, %v1025
  %v1028 = vshrl.u32 %v911, 16
  %v1030 = vrot.slane %v1028, 4
  %v1031 = vshll.u32 %v911, 16
  %v1033 = vrot.slane %v1031, 5
  %v1034 = vor.u32 %v1030, %v1033
  %v1035 = vrot.slane %v1034, 4
  %v1037 = vshll.u32 %v912, 16
  %v1039 = vrot.slane %v1037, 5
  %v1040 = vsel %vm68, %v1035, %v1039
  %v1042 = vshrl.u32 %v913, 16
  %v1044 = vrot.slane %v1042, 4
  %v1045 = vshll.u32 %v913, 16
  %v1047 = vrot.slane %v1045, 5
  %v1048 = vor.u32 %v1044, %v1047
  %v1049 = vrot.slane %v1048, 4
  %v1051 = vshll.u32 %v914, 16
  %v1053 = vrot.slane %v1051, 5
  %v1054 = vsel %vm68, %v1049, %v1053
  %v1056 = vshrl.u32 %v915, 16
  %v1058 = vrot.slane %v1056, 4
  %v1059 = vshll.u32 %v915, 16
  %v1061 = vrot.slane %v1059, 5
  %v1062 = vor.u32 %v1058, %v1061
  %v1063 = vrot.slane %v1062, 4
  %v1065 = vshll.u32 %v916, 16
  %v1067 = vrot.slane %v1065, 5
  %v1068 = vsel %vm68, %v1063, %v1067
  %v1070 = vshrl.u32 %v917, 16
  %v1072 = vrot.slane %v1070, 4
  %v1073 = vshll.u32 %v917, 16
  %v1075 = vrot.slane %v1073, 5
  %v1076 = vor.u32 %v1072, %v1075
  %v1077 = vrot.slane %v1076, 4
  %v1079 = vshll.u32 %v918, 16
  %v1081 = vrot.slane %v1079, 5
  %v1082 = vsel %vm68, %v1077, %v1081
  %v1084 = vshrl.u32 %v919, 16
  %v1086 = vrot.slane %v1084, 4
  %v1087 = vshll.u32 %v919, 16
  %v1089 = vrot.slane %v1087, 5
  %v1090 = vor.u32 %v1086, %v1089
  %v1091 = vrot.slane %v1090, 4
  %v1093 = vshll.u32 %v920, 16
  %v1095 = vrot.slane %v1093, 5
  %v1096 = vsel %vm68, %v1091, %v1095
  %v1098 = vshrl.u32 %v921, 16
  %v1100 = vrot.slane %v1098, 4
  %v1101 = vshll.u32 %v921, 16
  %v1103 = vrot.slane %v1101, 5
  %v1104 = vor.u32 %v1100, %v1103
  %v1105 = vrot.slane %v1104, 4
  %v1107 = vshll.u32 %v922, 16
  %v1109 = vrot.slane %v1107, 5
  %v1110 = vsel %vm68, %v1105, %v1109
  %v1112 = vshrl.u32 %v923, 16
  %v1114 = vrot.slane %v1112, 4
  %v1115 = vshll.u32 %v923, 16
  %v1117 = vrot.slane %v1115, 5
  %v1118 = vor.u32 %v1114, %v1117
  %v1119 = vrot.slane %v1118, 4
  %v1121 = vshll.u32 %v924, 16
  %v1123 = vrot.slane %v1121, 5
  %v1124 = vsel %vm68, %v1119, %v1123
  %v1126 = vshrl.u32 %v925, 16
  %v1128 = vrot.slane %v1126, 4
  %v1129 = vshll.u32 %v925, 16
  %v1131 = vrot.slane %v1129, 5
  %v1132 = vor.u32 %v1128, %v1131
  %v1133 = vrot.slane %v1132, 4
  %v1135 = vshll.u32 %v926, 16
  %v1137 = vrot.slane %v1135, 5
  %v1138 = vsel %vm68, %v1133, %v1137
  %v1140 = vshrl.u32 %v927, 16
  %v1142 = vrot.slane %v1140, 4
  %v1143 = vshll.u32 %v927, 16
  %v1145 = vrot.slane %v1143, 5
  %v1146 = vor.u32 %v1142, %v1145
  %v1147 = vrot.slane %v1146, 4
  %v1149 = vshll.u32 %v928, 16
  %v1151 = vrot.slane %v1149, 5
  %v1152 = vsel %vm68, %v1147, %v1151
  %s1153 = scalar_lea.vmem %s1, 8
  %v1154 = vld [vmem:[%s1153] sm:$0x3]
  %v1155 = vunpack.c.l.b16 %v942
  %v1156 = vunpack.c.l.b16 %v956
  %v1157 = vunpack.c.l.b16 %v970
  %v1158 = vunpack.c.l.b16 %v984
  %v1159 = vunpack.c.l.b16 %v998
  %v1160 = vunpack.c.l.b16 %v1012
  %v1161 = vunpack.c.l.b16 %v1026
  %v1162 = vunpack.c.l.b16 %v1040
  %v1163 = vunpack.c.l.b16 %v1054
  %v1164 = vunpack.c.l.b16 %v1068
  %v1165 = vunpack.c.l.b16 %v1082
  %v1166 = vunpack.c.l.b16 %v1096
  %v1167 = vunpack.c.l.b16 %v1110
  %v1168 = vunpack.c.l.b16 %v1124
  %v1169 = vunpack.c.l.b16 %v1138
  %v1170 = vunpack.c.l.b16 %v1152
  %v1171 = vpack.c.b16 %v1156, %v1155
  %v1172 = vpack.c.b16 %v1158, %v1157
  %v1173 = vpack.c.b16 %v1160, %v1159
  %v1174 = vpack.c.b16 %v1162, %v1161
  %v1175 = vpack.c.b16 %v1164, %v1163
  %v1176 = vpack.c.b16 %v1166, %v1165
  %v1177 = vpack.c.b16 %v1168, %v1167
  %v1178 = vpack.c.b16 %v1170, %v1169
  %v1180 = vsel %vm319, %v1171, 0
  %v1183 = vsel %vm319, %v1172, 0
  %v1186 = vsel %vm319, %v1173, 0
  %v1189 = vsel %vm319, %v1174, 0
  %v1192 = vsel %vm319, %v1175, 0
  %v1195 = vsel %vm319, %v1176, 0
  %v1198 = vsel %vm319, %v1177, 0
  %v1201 = vsel %vm319, %v1178, 0
  %v1204 = vsel %vm344, %v1154, 0
  %1206 = vmatpush.bf16.msra.mxu0 0
  %1207 = vmatpush.bf16.msra.mxu0 0
  %1208 = vmatpush.bf16.msra.mxu0 0
  %1209 = vmatpush.bf16.msra.mxu0 0
  %1210 = vmatpush.bf16.msra.mxu0 0
  %1211 = vmatpush.bf16.msra.mxu0 0
  %1212 = vmatpush.bf16.msra.mxu0 0
  %1213 = vmatpush.bf16.msra.mxu0 %v1204
  %1214 = vmatmul.bf16.gmra.mxu0 %v1180
  %v1215 = vpop.f32.mrf.mxu0
  %v1216 = vadd.f32 0.0, %v1215
  %v1217 = vpop.f32.mrf.mxu0
  %v1218 = vadd.f32 0.0, %v1217
  %1219 = vmatmul.bf16.gmra.mxu0 %v1183
  %v1220 = vpop.f32.mrf.mxu0
  %v1221 = vadd.f32 0.0, %v1220
  %v1222 = vpop.f32.mrf.mxu0
  %v1223 = vadd.f32 0.0, %v1222
  %1224 = vmatmul.bf16.gmra.mxu0 %v1186
  %v1225 = vpop.f32.mrf.mxu0
  %v1226 = vadd.f32 0.0, %v1225
  %v1227 = vpop.f32.mrf.mxu0
  %v1228 = vadd.f32 0.0, %v1227
  %1229 = vmatmul.bf16.gmra.mxu0 %v1189
  %v1230 = vpop.f32.mrf.mxu0
  %v1231 = vadd.f32 0.0, %v1230
  %v1232 = vpop.f32.mrf.mxu0
  %v1233 = vadd.f32 0.0, %v1232
  %1234 = vmatmul.bf16.gmra.mxu0 %v1192
  %v1235 = vpop.f32.mrf.mxu0
  %v1236 = vadd.f32 0.0, %v1235
  %v1237 = vpop.f32.mrf.mxu0
  %v1238 = vadd.f32 0.0, %v1237
  %1239 = vmatmul.bf16.gmra.mxu0 %v1195
  %v1240 = vpop.f32.mrf.mxu0
  %v1241 = vadd.f32 0.0, %v1240
  %v1242 = vpop.f32.mrf.mxu0
  %v1243 = vadd.f32 0.0, %v1242
  %1244 = vmatmul.bf16.gmra.mxu0 %v1198
  %v1245 = vpop.f32.mrf.mxu0
  %v1246 = vadd.f32 0.0, %v1245
  %v1247 = vpop.f32.mrf.mxu0
  %v1248 = vadd.f32 0.0, %v1247
  %1249 = vmatmul.bf16.gmra.mxu0 %v1201
  %v1250 = vpop.f32.mrf.mxu0
  %v1251 = vadd.f32 0.0, %v1250
  %v1252 = vpop.f32.mrf.mxu0
  %v1253 = vadd.f32 0.0, %v1252
  %1254 = vdwg.mxu0
  %v1255 = vadd.f32 %v881, %v1216
  %v1256 = vadd.f32 %v882, %v1218
  %v1257 = vadd.f32 %v883, %v1221
  %v1258 = vadd.f32 %v884, %v1223
  %v1259 = vadd.f32 %v885, %v1226
  %v1260 = vadd.f32 %v886, %v1228
  %v1261 = vadd.f32 %v887, %v1231
  %v1262 = vadd.f32 %v888, %v1233
  %v1263 = vadd.f32 %v889, %v1236
  %v1264 = vadd.f32 %v890, %v1238
  %v1265 = vadd.f32 %v891, %v1241
  %v1266 = vadd.f32 %v892, %v1243
  %v1267 = vadd.f32 %v893, %v1246
  %v1268 = vadd.f32 %v894, %v1248
  %v1269 = vadd.f32 %v895, %v1251
  %v1270 = vadd.f32 %v896, %v1253
  %v1271 = vld [vmem:[%s746] sm:$0xe]
  %v1272 = vld [vmem:[%s746 + $0x8] sm:$0xe]
  %v1273 = vld [vmem:[%s746 + $0x10] sm:$0xe]
  %v1274 = vld [vmem:[%s746 + $0x18] sm:$0xe]
  %v1275 = vld [vmem:[%s746 + $0x20] sm:$0xe]
  %v1276 = vld [vmem:[%s746 + $0x28] sm:$0xe]
  %v1277 = vld [vmem:[%s746 + $0x30] sm:$0xe]
  %v1278 = vld [vmem:[%s746 + $0x38] sm:$0xe]
  %v1279 = vld [vmem:[%s746 + $0x50] sm:$0xe]
  %v1280 = vld [vmem:[%s746 + $0x58] sm:$0xe]
  %v1281 = vld [vmem:[%s746 + $0x60] sm:$0xe]
  %v1282 = vld [vmem:[%s746 + $0x68] sm:$0xe]
  %v1283 = vld [vmem:[%s746 + $0x70] sm:$0xe]
  %v1284 = vld [vmem:[%s746 + $0x78] sm:$0xe]
  %v1285 = vld [vmem:[%s746 + $0x80] sm:$0xe]
  %v1286 = vld [vmem:[%s746 + $0x88] sm:$0xe]
  %v1319 = vrot.slane %v1271, 5
  %v1320 = vrot.slane %v1319, 4
  %v1321 = vrot.slane %v898, 5
  %v1322 = vsel %vm563, %v1320, %v1321
  %v1323 = vrot.slane %v1272, 5
  %v1324 = vrot.slane %v1323, 4
  %v1325 = vrot.slane %v900, 5
  %v1326 = vsel %vm563, %v1324, %v1325
  %v1327 = vrot.slane %v1273, 5
  %v1328 = vrot.slane %v1327, 4
  %v1329 = vrot.slane %v902, 5
  %v1330 = vsel %vm563, %v1328, %v1329
  %v1331 = vrot.slane %v1274, 5
  %v1332 = vrot.slane %v1331, 4
  %v1333 = vrot.slane %v904, 5
  %v1334 = vsel %vm563, %v1332, %v1333
  %v1335 = vrot.slane %v1275, 5
  %v1336 = vrot.slane %v1335, 4
  %v1337 = vrot.slane %v906, 5
  %v1338 = vsel %vm563, %v1336, %v1337
  %v1339 = vrot.slane %v1276, 5
  %v1340 = vrot.slane %v1339, 4
  %v1341 = vrot.slane %v908, 5
  %v1342 = vsel %vm563, %v1340, %v1341
  %v1343 = vrot.slane %v1277, 5
  %v1344 = vrot.slane %v1343, 4
  %v1345 = vrot.slane %v910, 5
  %v1346 = vsel %vm563, %v1344, %v1345
  %v1347 = vrot.slane %v1278, 5
  %v1348 = vrot.slane %v1347, 4
  %v1349 = vrot.slane %v912, 5
  %v1350 = vsel %vm563, %v1348, %v1349
  %v1351 = vrot.slane %v1279, 5
  %v1352 = vrot.slane %v1351, 4
  %v1353 = vrot.slane %v914, 5
  %v1354 = vsel %vm563, %v1352, %v1353
  %v1355 = vrot.slane %v1280, 5
  %v1356 = vrot.slane %v1355, 4
  %v1357 = vrot.slane %v916, 5
  %v1358 = vsel %vm563, %v1356, %v1357
  %v1359 = vrot.slane %v1281, 5
  %v1360 = vrot.slane %v1359, 4
  %v1361 = vrot.slane %v918, 5
  %v1362 = vsel %vm563, %v1360, %v1361
  %v1363 = vrot.slane %v1282, 5
  %v1364 = vrot.slane %v1363, 4
  %v1365 = vrot.slane %v920, 5
  %v1366 = vsel %vm563, %v1364, %v1365
  %v1367 = vrot.slane %v1283, 5
  %v1368 = vrot.slane %v1367, 4
  %v1369 = vrot.slane %v922, 5
  %v1370 = vsel %vm563, %v1368, %v1369
  %v1371 = vrot.slane %v1284, 5
  %v1372 = vrot.slane %v1371, 4
  %v1373 = vrot.slane %v924, 5
  %v1374 = vsel %vm563, %v1372, %v1373
  %v1375 = vrot.slane %v1285, 5
  %v1376 = vrot.slane %v1375, 4
  %v1377 = vrot.slane %v926, 5
  %v1378 = vsel %vm563, %v1376, %v1377
  %v1379 = vrot.slane %v1286, 5
  %v1380 = vrot.slane %v1379, 4
  %v1381 = vrot.slane %v928, 5
  %v1382 = vsel %vm563, %v1380, %v1381
  %s1383 = scalar_lea.vmem %s1, 10
  %v1384 = vld [vmem:[%s1383] sm:$0x3]
  %v1385 = vunpack.c.l.b16 %v1322
  %v1386 = vunpack.c.l.b16 %v1326
  %v1387 = vunpack.c.l.b16 %v1330
  %v1388 = vunpack.c.l.b16 %v1334
  %v1389 = vunpack.c.l.b16 %v1338
  %v1390 = vunpack.c.l.b16 %v1342
  %v1391 = vunpack.c.l.b16 %v1346
  %v1392 = vunpack.c.l.b16 %v1350
  %v1393 = vunpack.c.l.b16 %v1354
  %v1394 = vunpack.c.l.b16 %v1358
  %v1395 = vunpack.c.l.b16 %v1362
  %v1396 = vunpack.c.l.b16 %v1366
  %v1397 = vunpack.c.l.b16 %v1370
  %v1398 = vunpack.c.l.b16 %v1374
  %v1399 = vunpack.c.l.b16 %v1378
  %v1400 = vunpack.c.l.b16 %v1382
  %v1401 = vpack.c.b16 %v1386, %v1385
  %v1402 = vpack.c.b16 %v1388, %v1387
  %v1403 = vpack.c.b16 %v1390, %v1389
  %v1404 = vpack.c.b16 %v1392, %v1391
  %v1405 = vpack.c.b16 %v1394, %v1393
  %v1406 = vpack.c.b16 %v1396, %v1395
  %v1407 = vpack.c.b16 %v1398, %v1397
  %v1408 = vpack.c.b16 %v1400, %v1399
  %v1410 = vsel %vm319, %v1401, 0
  %v1413 = vsel %vm319, %v1402, 0
  %v1416 = vsel %vm319, %v1403, 0
  %v1419 = vsel %vm319, %v1404, 0
  %v1422 = vsel %vm319, %v1405, 0
  %v1425 = vsel %vm319, %v1406, 0
  %v1428 = vsel %vm319, %v1407, 0
  %v1431 = vsel %vm319, %v1408, 0
  %v1434 = vsel %vm344, %v1384, 0
  %1436 = vmatpush.bf16.msra.mxu0 0
  %1437 = vmatpush.bf16.msra.mxu0 0
  %1438 = vmatpush.bf16.msra.mxu0 0
  %1439 = vmatpush.bf16.msra.mxu0 0
  %1440 = vmatpush.bf16.msra.mxu0 0
  %1441 = vmatpush.bf16.msra.mxu0 0
  %1442 = vmatpush.bf16.msra.mxu0 0
  %1443 = vmatpush.bf16.msra.mxu0 %v1434
  %1444 = vmatmul.bf16.gmra.mxu0 %v1410
  %v1445 = vpop.f32.mrf.mxu0
  %v1446 = vadd.f32 0.0, %v1445
  %v1447 = vpop.f32.mrf.mxu0
  %v1448 = vadd.f32 0.0, %v1447
  %1449 = vmatmul.bf16.gmra.mxu0 %v1413
  %v1450 = vpop.f32.mrf.mxu0
  %v1451 = vadd.f32 0.0, %v1450
  %v1452 = vpop.f32.mrf.mxu0
  %v1453 = vadd.f32 0.0, %v1452
  %1454 = vmatmul.bf16.gmra.mxu0 %v1416
  %v1455 = vpop.f32.mrf.mxu0
  %v1456 = vadd.f32 0.0, %v1455
  %v1457 = vpop.f32.mrf.mxu0
  %v1458 = vadd.f32 0.0, %v1457
  %1459 = vmatmul.bf16.gmra.mxu0 %v1419
  %v1460 = vpop.f32.mrf.mxu0
  %v1461 = vadd.f32 0.0, %v1460
  %v1462 = vpop.f32.mrf.mxu0
  %v1463 = vadd.f32 0.0, %v1462
  %1464 = vmatmul.bf16.gmra.mxu0 %v1422
  %v1465 = vpop.f32.mrf.mxu0
  %v1466 = vadd.f32 0.0, %v1465
  %v1467 = vpop.f32.mrf.mxu0
  %v1468 = vadd.f32 0.0, %v1467
  %1469 = vmatmul.bf16.gmra.mxu0 %v1425
  %v1470 = vpop.f32.mrf.mxu0
  %v1471 = vadd.f32 0.0, %v1470
  %v1472 = vpop.f32.mrf.mxu0
  %v1473 = vadd.f32 0.0, %v1472
  %1474 = vmatmul.bf16.gmra.mxu0 %v1428
  %v1475 = vpop.f32.mrf.mxu0
  %v1476 = vadd.f32 0.0, %v1475
  %v1477 = vpop.f32.mrf.mxu0
  %v1478 = vadd.f32 0.0, %v1477
  %1479 = vmatmul.bf16.gmra.mxu0 %v1431
  %v1480 = vpop.f32.mrf.mxu0
  %v1481 = vadd.f32 0.0, %v1480
  %v1482 = vpop.f32.mrf.mxu0
  %v1483 = vadd.f32 0.0, %v1482
  %1484 = vdwg.mxu0
  %v1485 = vadd.f32 %v1255, %v1446
  %v1486 = vadd.f32 %v1256, %v1448
  %v1487 = vadd.f32 %v1257, %v1451
  %v1488 = vadd.f32 %v1258, %v1453
  %v1489 = vadd.f32 %v1259, %v1456
  %v1490 = vadd.f32 %v1260, %v1458
  %v1491 = vadd.f32 %v1261, %v1461
  %v1492 = vadd.f32 %v1262, %v1463
  %v1493 = vadd.f32 %v1263, %v1466
  %v1494 = vadd.f32 %v1264, %v1468
  %v1495 = vadd.f32 %v1265, %v1471
  %v1496 = vadd.f32 %v1266, %v1473
  %v1497 = vadd.f32 %v1267, %v1476
  %v1498 = vadd.f32 %v1268, %v1478
  %v1499 = vadd.f32 %v1269, %v1481
  %v1500 = vadd.f32 %v1270, %v1483
  %s1501 = scalar_lea.vmem %s0, 16
  %v1502 = vld [vmem:[%s1501] sm:$0xf]
  %v1503 = vld [vmem:[%s1501 + $0x8] sm:$0xf]
  %v1504 = vld [vmem:[%s1501 + $0x10] sm:$0xf]
  %v1505 = vld [vmem:[%s1501 + $0x18] sm:$0xf]
  %v1506 = vld [vmem:[%s1501 + $0x20] sm:$0xf]
  %v1507 = vld [vmem:[%s1501 + $0x28] sm:$0xf]
  %v1508 = vld [vmem:[%s1501 + $0x30] sm:$0xf]
  %v1509 = vld [vmem:[%s1501 + $0x38] sm:$0xf]
  %v1510 = vld [vmem:[%s1501 + $0x50] sm:$0xf]
  %v1511 = vld [vmem:[%s1501 + $0x58] sm:$0xf]
  %v1512 = vld [vmem:[%s1501 + $0x60] sm:$0xf]
  %v1513 = vld [vmem:[%s1501 + $0x68] sm:$0xf]
  %v1514 = vld [vmem:[%s1501 + $0x70] sm:$0xf]
  %v1515 = vld [vmem:[%s1501 + $0x78] sm:$0xf]
  %v1516 = vld [vmem:[%s1501 + $0x80] sm:$0xf]
  %v1517 = vld [vmem:[%s1501 + $0x88] sm:$0xf]
  %s1518 = scalar_lea.vmem %s1, 12
  %v1519 = vld [vmem:[%s1518] sm:$0x3]
  %v1536 = vunpack.c.l.b16 %v1502
  %v1537 = vunpack.c.l.b16 %v1503
  %v1538 = vunpack.c.l.b16 %v1504
  %v1539 = vunpack.c.l.b16 %v1505
  %v1540 = vunpack.c.l.b16 %v1506
  %v1541 = vunpack.c.l.b16 %v1507
  %v1542 = vunpack.c.l.b16 %v1508
  %v1543 = vunpack.c.l.b16 %v1509
  %v1544 = vunpack.c.l.b16 %v1510
  %v1545 = vunpack.c.l.b16 %v1511
  %v1546 = vunpack.c.l.b16 %v1512
  %v1547 = vunpack.c.l.b16 %v1513
  %v1548 = vunpack.c.l.b16 %v1514
  %v1549 = vunpack.c.l.b16 %v1515
  %v1550 = vunpack.c.l.b16 %v1516
  %v1551 = vunpack.c.l.b16 %v1517
  %v1552 = vpack.c.b16 %v1537, %v1536
  %v1553 = vpack.c.b16 %v1539, %v1538
  %v1554 = vpack.c.b16 %v1541, %v1540
  %v1555 = vpack.c.b16 %v1543, %v1542
  %v1556 = vpack.c.b16 %v1545, %v1544
  %v1557 = vpack.c.b16 %v1547, %v1546
  %v1558 = vpack.c.b16 %v1549, %v1548
  %v1559 = vpack.c.b16 %v1551, %v1550
  %v1561 = vsel %vm319, %v1552, 0
  %v1564 = vsel %vm319, %v1553, 0
  %v1567 = vsel %vm319, %v1554, 0
  %v1570 = vsel %vm319, %v1555, 0
  %v1573 = vsel %vm319, %v1556, 0
  %v1576 = vsel %vm319, %v1557, 0
  %v1579 = vsel %vm319, %v1558, 0
  %v1582 = vsel %vm319, %v1559, 0
  %v1585 = vsel %vm344, %v1519, 0
  %1587 = vmatpush.bf16.msra.mxu0 0
  %1588 = vmatpush.bf16.msra.mxu0 0
  %1589 = vmatpush.bf16.msra.mxu0 0
  %1590 = vmatpush.bf16.msra.mxu0 0
  %1591 = vmatpush.bf16.msra.mxu0 0
  %1592 = vmatpush.bf16.msra.mxu0 0
  %1593 = vmatpush.bf16.msra.mxu0 0
  %1594 = vmatpush.bf16.msra.mxu0 %v1585
  %1595 = vmatmul.bf16.gmra.mxu0 %v1561
  %v1596 = vpop.f32.mrf.mxu0
  %v1597 = vadd.f32 0.0, %v1596
  %v1598 = vpop.f32.mrf.mxu0
  %v1599 = vadd.f32 0.0, %v1598
  %1600 = vmatmul.bf16.gmra.mxu0 %v1564
  %v1601 = vpop.f32.mrf.mxu0
  %v1602 = vadd.f32 0.0, %v1601
  %v1603 = vpop.f32.mrf.mxu0
  %v1604 = vadd.f32 0.0, %v1603
  %1605 = vmatmul.bf16.gmra.mxu0 %v1567
  %v1606 = vpop.f32.mrf.mxu0
  %v1607 = vadd.f32 0.0, %v1606
  %v1608 = vpop.f32.mrf.mxu0
  %v1609 = vadd.f32 0.0, %v1608
  %1610 = vmatmul.bf16.gmra.mxu0 %v1570
  %v1611 = vpop.f32.mrf.mxu0
  %v1612 = vadd.f32 0.0, %v1611
  %v1613 = vpop.f32.mrf.mxu0
  %v1614 = vadd.f32 0.0, %v1613
  %1615 = vmatmul.bf16.gmra.mxu0 %v1573
  %v1616 = vpop.f32.mrf.mxu0
  %v1617 = vadd.f32 0.0, %v1616
  %v1618 = vpop.f32.mrf.mxu0
  %v1619 = vadd.f32 0.0, %v1618
  %1620 = vmatmul.bf16.gmra.mxu0 %v1576
  %v1621 = vpop.f32.mrf.mxu0
  %v1622 = vadd.f32 0.0, %v1621
  %v1623 = vpop.f32.mrf.mxu0
  %v1624 = vadd.f32 0.0, %v1623
  %1625 = vmatmul.bf16.gmra.mxu0 %v1579
  %v1626 = vpop.f32.mrf.mxu0
  %v1627 = vadd.f32 0.0, %v1626
  %v1628 = vpop.f32.mrf.mxu0
  %v1629 = vadd.f32 0.0, %v1628
  %1630 = vmatmul.bf16.gmra.mxu0 %v1582
  %v1631 = vpop.f32.mrf.mxu0
  %v1632 = vadd.f32 0.0, %v1631
  %v1633 = vpop.f32.mrf.mxu0
  %v1634 = vadd.f32 0.0, %v1633
  %1635 = vdwg.mxu0
  %v1636 = vadd.f32 %v1485, %v1597
  %v1637 = vadd.f32 %v1486, %v1599
  %v1638 = vadd.f32 %v1487, %v1602
  %v1639 = vadd.f32 %v1488, %v1604
  %v1640 = vadd.f32 %v1489, %v1607
  %v1641 = vadd.f32 %v1490, %v1609
  %v1642 = vadd.f32 %v1491, %v1612
  %v1643 = vadd.f32 %v1492, %v1614
  %v1644 = vadd.f32 %v1493, %v1617
  %v1645 = vadd.f32 %v1494, %v1619
  %v1646 = vadd.f32 %v1495, %v1622
  %v1647 = vadd.f32 %v1496, %v1624
  %v1648 = vadd.f32 %v1497, %v1627
  %v1649 = vadd.f32 %v1498, %v1629
  %v1650 = vadd.f32 %v1499, %v1632
  %v1651 = vadd.f32 %v1500, %v1634
  %v1652 = vld [vmem:[%s1501] sm:$0xf]
  %v1653 = vld [vmem:[%s1501 + $0x4] sm:$0x1]
  %v1654 = vld [vmem:[%s1501 + $0x8] sm:$0xf]
  %v1655 = vld [vmem:[%s1501 + $0xc] sm:$0x1]
  %v1656 = vld [vmem:[%s1501 + $0x10] sm:$0xf]
  %v1657 = vld [vmem:[%s1501 + $0x14] sm:$0x1]
  %v1658 = vld [vmem:[%s1501 + $0x18] sm:$0xf]
  %v1659 = vld [vmem:[%s1501 + $0x1c] sm:$0x1]
  %v1660 = vld [vmem:[%s1501 + $0x20] sm:$0xf]
  %v1661 = vld [vmem:[%s1501 + $0x24] sm:$0x1]
  %v1662 = vld [vmem:[%s1501 + $0x28] sm:$0xf]
  %v1663 = vld [vmem:[%s1501 + $0x2c] sm:$0x1]
  %v1664 = vld [vmem:[%s1501 + $0x30] sm:$0xf]
  %v1665 = vld [vmem:[%s1501 + $0x34] sm:$0x1]
  %v1666 = vld [vmem:[%s1501 + $0x38] sm:$0xf]
  %v1667 = vld [vmem:[%s1501 + $0x3c] sm:$0x1]
  %v1668 = vld [vmem:[%s1501 + $0x50] sm:$0xf]
  %v1669 = vld [vmem:[%s1501 + $0x54] sm:$0x1]
  %v1670 = vld [vmem:[%s1501 + $0x58] sm:$0xf]
  %v1671 = vld [vmem:[%s1501 + $0x5c] sm:$0x1]
  %v1672 = vld [vmem:[%s1501 + $0x60] sm:$0xf]
  %v1673 = vld [vmem:[%s1501 + $0x64] sm:$0x1]
  %v1674 = vld [vmem:[%s1501 + $0x68] sm:$0xf]
  %v1675 = vld [vmem:[%s1501 + $0x6c] sm:$0x1]
  %v1676 = vld [vmem:[%s1501 + $0x70] sm:$0xf]
  %v1677 = vld [vmem:[%s1501 + $0x74] sm:$0x1]
  %v1678 = vld [vmem:[%s1501 + $0x78] sm:$0xf]
  %v1679 = vld [vmem:[%s1501 + $0x7c] sm:$0x1]
  %v1680 = vld [vmem:[%s1501 + $0x80] sm:$0xf]
  %v1681 = vld [vmem:[%s1501 + $0x84] sm:$0x1]
  %v1682 = vld [vmem:[%s1501 + $0x88] sm:$0xf]
  %v1683 = vld [vmem:[%s1501 + $0x8c] sm:$0x1]
  %v1685 = vshrl.u32 %v1652, 16
  %v1687 = vrot.slane %v1685, 4
  %v1688 = vshll.u32 %v1652, 16
  %v1690 = vrot.slane %v1688, 5
  %v1691 = vor.u32 %v1687, %v1690
  %v1692 = vrot.slane %v1691, 4
  %v1694 = vshll.u32 %v1653, 16
  %v1696 = vrot.slane %v1694, 5
  %v1697 = vsel %vm68, %v1692, %v1696
  %v1699 = vshrl.u32 %v1654, 16
  %v1701 = vrot.slane %v1699, 4
  %v1702 = vshll.u32 %v1654, 16
  %v1704 = vrot.slane %v1702, 5
  %v1705 = vor.u32 %v1701, %v1704
  %v1706 = vrot.slane %v1705, 4
  %v1708 = vshll.u32 %v1655, 16
  %v1710 = vrot.slane %v1708, 5
  %v1711 = vsel %vm68, %v1706, %v1710
  %v1713 = vshrl.u32 %v1656, 16
  %v1715 = vrot.slane %v1713, 4
  %v1716 = vshll.u32 %v1656, 16
  %v1718 = vrot.slane %v1716, 5
  %v1719 = vor.u32 %v1715, %v1718
  %v1720 = vrot.slane %v1719, 4
  %v1722 = vshll.u32 %v1657, 16
  %v1724 = vrot.slane %v1722, 5
  %v1725 = vsel %vm68, %v1720, %v1724
  %v1727 = vshrl.u32 %v1658, 16
  %v1729 = vrot.slane %v1727, 4
  %v1730 = vshll.u32 %v1658, 16
  %v1732 = vrot.slane %v1730, 5
  %v1733 = vor.u32 %v1729, %v1732
  %v1734 = vrot.slane %v1733, 4
  %v1736 = vshll.u32 %v1659, 16
  %v1738 = vrot.slane %v1736, 5
  %v1739 = vsel %vm68, %v1734, %v1738
  %v1741 = vshrl.u32 %v1660, 16
  %v1743 = vrot.slane %v1741, 4
  %v1744 = vshll.u32 %v1660, 16
  %v1746 = vrot.slane %v1744, 5
  %v1747 = vor.u32 %v1743, %v1746
  %v1748 = vrot.slane %v1747, 4
  %v1750 = vshll.u32 %v1661, 16
  %v1752 = vrot.slane %v1750, 5
  %v1753 = vsel %vm68, %v1748, %v1752
  %v1755 = vshrl.u32 %v1662, 16
  %v1757 = vrot.slane %v1755, 4
  %v1758 = vshll.u32 %v1662, 16
  %v1760 = vrot.slane %v1758, 5
  %v1761 = vor.u32 %v1757, %v1760
  %v1762 = vrot.slane %v1761, 4
  %v1764 = vshll.u32 %v1663, 16
  %v1766 = vrot.slane %v1764, 5
  %v1767 = vsel %vm68, %v1762, %v1766
  %v1769 = vshrl.u32 %v1664, 16
  %v1771 = vrot.slane %v1769, 4
  %v1772 = vshll.u32 %v1664, 16
  %v1774 = vrot.slane %v1772, 5
  %v1775 = vor.u32 %v1771, %v1774
  %v1776 = vrot.slane %v1775, 4
  %v1778 = vshll.u32 %v1665, 16
  %v1780 = vrot.slane %v1778, 5
  %v1781 = vsel %vm68, %v1776, %v1780
  %v1783 = vshrl.u32 %v1666, 16
  %v1785 = vrot.slane %v1783, 4
  %v1786 = vshll.u32 %v1666, 16
  %v1788 = vrot.slane %v1786, 5
  %v1789 = vor.u32 %v1785, %v1788
  %v1790 = vrot.slane %v1789, 4
  %v1792 = vshll.u32 %v1667, 16
  %v1794 = vrot.slane %v1792, 5
  %v1795 = vsel %vm68, %v1790, %v1794
  %v1797 = vshrl.u32 %v1668, 16
  %v1799 = vrot.slane %v1797, 4
  %v1800 = vshll.u32 %v1668, 16
  %v1802 = vrot.slane %v1800, 5
  %v1803 = vor.u32 %v1799, %v1802
  %v1804 = vrot.slane %v1803, 4
  %v1806 = vshll.u32 %v1669, 16
  %v1808 = vrot.slane %v1806, 5
  %v1809 = vsel %vm68, %v1804, %v1808
  %v1811 = vshrl.u32 %v1670, 16
  %v1813 = vrot.slane %v1811, 4
  %v1814 = vshll.u32 %v1670, 16
  %v1816 = vrot.slane %v1814, 5
  %v1817 = vor.u32 %v1813, %v1816
  %v1818 = vrot.slane %v1817, 4
  %v1820 = vshll.u32 %v1671, 16
  %v1822 = vrot.slane %v1820, 5
  %v1823 = vsel %vm68, %v1818, %v1822
  %v1825 = vshrl.u32 %v1672, 16
  %v1827 = vrot.slane %v1825, 4
  %v1828 = vshll.u32 %v1672, 16
  %v1830 = vrot.slane %v1828, 5
  %v1831 = vor.u32 %v1827, %v1830
  %v1832 = vrot.slane %v1831, 4
  %v1834 = vshll.u32 %v1673, 16
  %v1836 = vrot.slane %v1834, 5
  %v1837 = vsel %vm68, %v1832, %v1836
  %v1839 = vshrl.u32 %v1674, 16
  %v1841 = vrot.slane %v1839, 4
  %v1842 = vshll.u32 %v1674, 16
  %v1844 = vrot.slane %v1842, 5
  %v1845 = vor.u32 %v1841, %v1844
  %v1846 = vrot.slane %v1845, 4
  %v1848 = vshll.u32 %v1675, 16
  %v1850 = vrot.slane %v1848, 5
  %v1851 = vsel %vm68, %v1846, %v1850
  %v1853 = vshrl.u32 %v1676, 16
  %v1855 = vrot.slane %v1853, 4
  %v1856 = vshll.u32 %v1676, 16
  %v1858 = vrot.slane %v1856, 5
  %v1859 = vor.u32 %v1855, %v1858
  %v1860 = vrot.slane %v1859, 4
  %v1862 = vshll.u32 %v1677, 16
  %v1864 = vrot.slane %v1862, 5
  %v1865 = vsel %vm68, %v1860, %v1864
  %v1867 = vshrl.u32 %v1678, 16
  %v1869 = vrot.slane %v1867, 4
  %v1870 = vshll.u32 %v1678, 16
  %v1872 = vrot.slane %v1870, 5
  %v1873 = vor.u32 %v1869, %v1872
  %v1874 = vrot.slane %v1873, 4
  %v1876 = vshll.u32 %v1679, 16
  %v1878 = vrot.slane %v1876, 5
  %v1879 = vsel %vm68, %v1874, %v1878
  %v1881 = vshrl.u32 %v1680, 16
  %v1883 = vrot.slane %v1881, 4
  %v1884 = vshll.u32 %v1680, 16
  %v1886 = vrot.slane %v1884, 5
  %v1887 = vor.u32 %v1883, %v1886
  %v1888 = vrot.slane %v1887, 4
  %v1890 = vshll.u32 %v1681, 16
  %v1892 = vrot.slane %v1890, 5
  %v1893 = vsel %vm68, %v1888, %v1892
  %v1895 = vshrl.u32 %v1682, 16
  %v1897 = vrot.slane %v1895, 4
  %v1898 = vshll.u32 %v1682, 16
  %v1900 = vrot.slane %v1898, 5
  %v1901 = vor.u32 %v1897, %v1900
  %v1902 = vrot.slane %v1901, 4
  %v1904 = vshll.u32 %v1683, 16
  %v1906 = vrot.slane %v1904, 5
  %v1907 = vsel %vm68, %v1902, %v1906
  %s1908 = scalar_lea.vmem %s1, 14
  %v1909 = vld [vmem:[%s1908] sm:$0x3]
  %v1910 = vunpack.c.l.b16 %v1697
  %v1911 = vunpack.c.l.b16 %v1711
  %v1912 = vunpack.c.l.b16 %v1725
  %v1913 = vunpack.c.l.b16 %v1739
  %v1914 = vunpack.c.l.b16 %v1753
  %v1915 = vunpack.c.l.b16 %v1767
  %v1916 = vunpack.c.l.b16 %v1781
  %v1917 = vunpack.c.l.b16 %v1795
  %v1918 = vunpack.c.l.b16 %v1809
  %v1919 = vunpack.c.l.b16 %v1823
  %v1920 = vunpack.c.l.b16 %v1837
  %v1921 = vunpack.c.l.b16 %v1851
  %v1922 = vunpack.c.l.b16 %v1865
  %v1923 = vunpack.c.l.b16 %v1879
  %v1924 = vunpack.c.l.b16 %v1893
  %v1925 = vunpack.c.l.b16 %v1907
  %v1926 = vpack.c.b16 %v1911, %v1910
  %v1927 = vpack.c.b16 %v1913, %v1912
  %v1928 = vpack.c.b16 %v1915, %v1914
  %v1929 = vpack.c.b16 %v1917, %v1916
  %v1930 = vpack.c.b16 %v1919, %v1918
  %v1931 = vpack.c.b16 %v1921, %v1920
  %v1932 = vpack.c.b16 %v1923, %v1922
  %v1933 = vpack.c.b16 %v1925, %v1924
  %v1935 = vsel %vm319, %v1926, 0
  %v1938 = vsel %vm319, %v1927, 0
  %v1941 = vsel %vm319, %v1928, 0
  %v1944 = vsel %vm319, %v1929, 0
  %v1947 = vsel %vm319, %v1930, 0
  %v1950 = vsel %vm319, %v1931, 0
  %v1953 = vsel %vm319, %v1932, 0
  %v1956 = vsel %vm319, %v1933, 0
  %v1959 = vsel %vm344, %v1909, 0
  %1961 = vmatpush.bf16.msra.mxu0 0
  %1962 = vmatpush.bf16.msra.mxu0 0
  %1963 = vmatpush.bf16.msra.mxu0 0
  %1964 = vmatpush.bf16.msra.mxu0 0
  %1965 = vmatpush.bf16.msra.mxu0 0
  %1966 = vmatpush.bf16.msra.mxu0 0
  %1967 = vmatpush.bf16.msra.mxu0 0
  %1968 = vmatpush.bf16.msra.mxu0 %v1959
  %1969 = vmatmul.bf16.gmra.mxu0 %v1935
  %v1970 = vpop.f32.mrf.mxu0
  %v1971 = vadd.f32 0.0, %v1970
  %v1972 = vpop.f32.mrf.mxu0
  %v1973 = vadd.f32 0.0, %v1972
  %1974 = vmatmul.bf16.gmra.mxu0 %v1938
  %v1975 = vpop.f32.mrf.mxu0
  %v1976 = vadd.f32 0.0, %v1975
  %v1977 = vpop.f32.mrf.mxu0
  %v1978 = vadd.f32 0.0, %v1977
  %1979 = vmatmul.bf16.gmra.mxu0 %v1941
  %v1980 = vpop.f32.mrf.mxu0
  %v1981 = vadd.f32 0.0, %v1980
  %v1982 = vpop.f32.mrf.mxu0
  %v1983 = vadd.f32 0.0, %v1982
  %1984 = vmatmul.bf16.gmra.mxu0 %v1944
  %v1985 = vpop.f32.mrf.mxu0
  %v1986 = vadd.f32 0.0, %v1985
  %v1987 = vpop.f32.mrf.mxu0
  %v1988 = vadd.f32 0.0, %v1987
  %1989 = vmatmul.bf16.gmra.mxu0 %v1947
  %v1990 = vpop.f32.mrf.mxu0
  %v1991 = vadd.f32 0.0, %v1990
  %v1992 = vpop.f32.mrf.mxu0
  %v1993 = vadd.f32 0.0, %v1992
  %1994 = vmatmul.bf16.gmra.mxu0 %v1950
  %v1995 = vpop.f32.mrf.mxu0
  %v1996 = vadd.f32 0.0, %v1995
  %v1997 = vpop.f32.mrf.mxu0
  %v1998 = vadd.f32 0.0, %v1997
  %1999 = vmatmul.bf16.gmra.mxu0 %v1953
  %v2000 = vpop.f32.mrf.mxu0
  %v2001 = vadd.f32 0.0, %v2000
  %v2002 = vpop.f32.mrf.mxu0
  %v2003 = vadd.f32 0.0, %v2002
  %2004 = vmatmul.bf16.gmra.mxu0 %v1956
  %v2005 = vpop.f32.mrf.mxu0
  %v2006 = vadd.f32 0.0, %v2005
  %v2007 = vpop.f32.mrf.mxu0
  %v2008 = vadd.f32 0.0, %v2007
  %2009 = vdwg.mxu0
  %v2010 = vadd.f32 %v1636, %v1971
  %v2011 = vadd.f32 %v1637, %v1973
  %v2012 = vadd.f32 %v1638, %v1976
  %v2013 = vadd.f32 %v1639, %v1978
  %v2014 = vadd.f32 %v1640, %v1981
  %v2015 = vadd.f32 %v1641, %v1983
  %v2016 = vadd.f32 %v1642, %v1986
  %v2017 = vadd.f32 %v1643, %v1988
  %v2018 = vadd.f32 %v1644, %v1991
  %v2019 = vadd.f32 %v1645, %v1993
  %v2020 = vadd.f32 %v1646, %v1996
  %v2021 = vadd.f32 %v1647, %v1998
  %v2022 = vadd.f32 %v1648, %v2001
  %v2023 = vadd.f32 %v1649, %v2003
  %v2024 = vadd.f32 %v1650, %v2006
  %v2025 = vadd.f32 %v1651, %v2008
  %v2026 = vld [vmem:[%s1501] sm:$0xe]
  %v2027 = vld [vmem:[%s1501 + $0x8] sm:$0xe]
  %v2028 = vld [vmem:[%s1501 + $0x10] sm:$0xe]
  %v2029 = vld [vmem:[%s1501 + $0x18] sm:$0xe]
  %v2030 = vld [vmem:[%s1501 + $0x20] sm:$0xe]
  %v2031 = vld [vmem:[%s1501 + $0x28] sm:$0xe]
  %v2032 = vld [vmem:[%s1501 + $0x30] sm:$0xe]
  %v2033 = vld [vmem:[%s1501 + $0x38] sm:$0xe]
  %v2034 = vld [vmem:[%s1501 + $0x50] sm:$0xe]
  %v2035 = vld [vmem:[%s1501 + $0x58] sm:$0xe]
  %v2036 = vld [vmem:[%s1501 + $0x60] sm:$0xe]
  %v2037 = vld [vmem:[%s1501 + $0x68] sm:$0xe]
  %v2038 = vld [vmem:[%s1501 + $0x70] sm:$0xe]
  %v2039 = vld [vmem:[%s1501 + $0x78] sm:$0xe]
  %v2040 = vld [vmem:[%s1501 + $0x80] sm:$0xe]
  %v2041 = vld [vmem:[%s1501 + $0x88] sm:$0xe]
  %v2074 = vrot.slane %v2026, 5
  %v2075 = vrot.slane %v2074, 4
  %v2076 = vrot.slane %v1653, 5
  %v2077 = vsel %vm563, %v2075, %v2076
  %v2078 = vrot.slane %v2027, 5
  %v2079 = vrot.slane %v2078, 4
  %v2080 = vrot.slane %v1655, 5
  %v2081 = vsel %vm563, %v2079, %v2080
  %v2082 = vrot.slane %v2028, 5
  %v2083 = vrot.slane %v2082, 4
  %v2084 = vrot.slane %v1657, 5
  %v2085 = vsel %vm563, %v2083, %v2084
  %v2086 = vrot.slane %v2029, 5
  %v2087 = vrot.slane %v2086, 4
  %v2088 = vrot.slane %v1659, 5
  %v2089 = vsel %vm563, %v2087, %v2088
  %v2090 = vrot.slane %v2030, 5
  %v2091 = vrot.slane %v2090, 4
  %v2092 = vrot.slane %v1661, 5
  %v2093 = vsel %vm563, %v2091, %v2092
  %v2094 = vrot.slane %v2031, 5
  %v2095 = vrot.slane %v2094, 4
  %v2096 = vrot.slane %v1663, 5
  %v2097 = vsel %vm563, %v2095, %v2096
  %v2098 = vrot.slane %v2032, 5
  %v2099 = vrot.slane %v2098, 4
  %v2100 = vrot.slane %v1665, 5
  %v2101 = vsel %vm563, %v2099, %v2100
  %v2102 = vrot.slane %v2033, 5
  %v2103 = vrot.slane %v2102, 4
  %v2104 = vrot.slane %v1667, 5
  %v2105 = vsel %vm563, %v2103, %v2104
  %v2106 = vrot.slane %v2034, 5
  %v2107 = vrot.slane %v2106, 4
  %v2108 = vrot.slane %v1669, 5
  %v2109 = vsel %vm563, %v2107, %v2108
  %v2110 = vrot.slane %v2035, 5
  %v2111 = vrot.slane %v2110, 4
  %v2112 = vrot.slane %v1671, 5
  %v2113 = vsel %vm563, %v2111, %v2112
  %v2114 = vrot.slane %v2036, 5
  %v2115 = vrot.slane %v2114, 4
  %v2116 = vrot.slane %v1673, 5
  %v2117 = vsel %vm563, %v2115, %v2116
  %v2118 = vrot.slane %v2037, 5
  %v2119 = vrot.slane %v2118, 4
  %v2120 = vrot.slane %v1675, 5
  %v2121 = vsel %vm563, %v2119, %v2120
  %v2122 = vrot.slane %v2038, 5
  %v2123 = vrot.slane %v2122, 4
  %v2124 = vrot.slane %v1677, 5
  %v2125 = vsel %vm563, %v2123, %v2124
  %v2126 = vrot.slane %v2039, 5
  %v2127 = vrot.slane %v2126, 4
  %v2128 = vrot.slane %v1679, 5
  %v2129 = vsel %vm563, %v2127, %v2128
  %v2130 = vrot.slane %v2040, 5
  %v2131 = vrot.slane %v2130, 4
  %v2132 = vrot.slane %v1681, 5
  %v2133 = vsel %vm563, %v2131, %v2132
  %v2134 = vrot.slane %v2041, 5
  %v2135 = vrot.slane %v2134, 4
  %v2136 = vrot.slane %v1683, 5
  %v2137 = vsel %vm563, %v2135, %v2136
  %s2138 = scalar_lea.vmem %s1, 16
  %v2139 = vld [vmem:[%s2138] sm:$0x3]
  %v2140 = vunpack.c.l.b16 %v2077
  %v2141 = vunpack.c.l.b16 %v2081
  %v2142 = vunpack.c.l.b16 %v2085
  %v2143 = vunpack.c.l.b16 %v2089
  %v2144 = vunpack.c.l.b16 %v2093
  %v2145 = vunpack.c.l.b16 %v2097
  %v2146 = vunpack.c.l.b16 %v2101
  %v2147 = vunpack.c.l.b16 %v2105
  %v2148 = vunpack.c.l.b16 %v2109
  %v2149 = vunpack.c.l.b16 %v2113
  %v2150 = vunpack.c.l.b16 %v2117
  %v2151 = vunpack.c.l.b16 %v2121
  %v2152 = vunpack.c.l.b16 %v2125
  %v2153 = vunpack.c.l.b16 %v2129
  %v2154 = vunpack.c.l.b16 %v2133
  %v2155 = vunpack.c.l.b16 %v2137
  %v2156 = vpack.c.b16 %v2141, %v2140
  %v2157 = vpack.c.b16 %v2143, %v2142
  %v2158 = vpack.c.b16 %v2145, %v2144
  %v2159 = vpack.c.b16 %v2147, %v2146
  %v2160 = vpack.c.b16 %v2149, %v2148
  %v2161 = vpack.c.b16 %v2151, %v2150
  %v2162 = vpack.c.b16 %v2153, %v2152
  %v2163 = vpack.c.b16 %v2155, %v2154
  %v2165 = vsel %vm319, %v2156, 0
  %v2168 = vsel %vm319, %v2157, 0
  %v2171 = vsel %vm319, %v2158, 0
  %v2174 = vsel %vm319, %v2159, 0
  %v2177 = vsel %vm319, %v2160, 0
  %v2180 = vsel %vm319, %v2161, 0
  %v2183 = vsel %vm319, %v2162, 0
  %v2186 = vsel %vm319, %v2163, 0
  %v2189 = vsel %vm344, %v2139, 0
  %2191 = vmatpush.bf16.msra.mxu0 0
  %2192 = vmatpush.bf16.msra.mxu0 0
  %2193 = vmatpush.bf16.msra.mxu0 0
  %2194 = vmatpush.bf16.msra.mxu0 0
  %2195 = vmatpush.bf16.msra.mxu0 0
  %2196 = vmatpush.bf16.msra.mxu0 0
  %2197 = vmatpush.bf16.msra.mxu0 0
  %2198 = vmatpush.bf16.msra.mxu0 %v2189
  %2199 = vmatmul.bf16.gmra.mxu0 %v2165
  %v2200 = vpop.f32.mrf.mxu0
  %v2201 = vadd.f32 0.0, %v2200
  %v2202 = vpop.f32.mrf.mxu0
  %v2203 = vadd.f32 0.0, %v2202
  %2204 = vmatmul.bf16.gmra.mxu0 %v2168
  %v2205 = vpop.f32.mrf.mxu0
  %v2206 = vadd.f32 0.0, %v2205
  %v2207 = vpop.f32.mrf.mxu0
  %v2208 = vadd.f32 0.0, %v2207
  %2209 = vmatmul.bf16.gmra.mxu0 %v2171
  %v2210 = vpop.f32.mrf.mxu0
  %v2211 = vadd.f32 0.0, %v2210
  %v2212 = vpop.f32.mrf.mxu0
  %v2213 = vadd.f32 0.0, %v2212
  %2214 = vmatmul.bf16.gmra.mxu0 %v2174
  %v2215 = vpop.f32.mrf.mxu0
  %v2216 = vadd.f32 0.0, %v2215
  %v2217 = vpop.f32.mrf.mxu0
  %v2218 = vadd.f32 0.0, %v2217
  %2219 = vmatmul.bf16.gmra.mxu0 %v2177
  %v2220 = vpop.f32.mrf.mxu0
  %v2221 = vadd.f32 0.0, %v2220
  %v2222 = vpop.f32.mrf.mxu0
  %v2223 = vadd.f32 0.0, %v2222
  %2224 = vmatmul.bf16.gmra.mxu0 %v2180
  %v2225 = vpop.f32.mrf.mxu0
  %v2226 = vadd.f32 0.0, %v2225
  %v2227 = vpop.f32.mrf.mxu0
  %v2228 = vadd.f32 0.0, %v2227
  %2229 = vmatmul.bf16.gmra.mxu0 %v2183
  %v2230 = vpop.f32.mrf.mxu0
  %v2231 = vadd.f32 0.0, %v2230
  %v2232 = vpop.f32.mrf.mxu0
  %v2233 = vadd.f32 0.0, %v2232
  %2234 = vmatmul.bf16.gmra.mxu0 %v2186
  %v2235 = vpop.f32.mrf.mxu0
  %v2236 = vadd.f32 0.0, %v2235
  %v2237 = vpop.f32.mrf.mxu0
  %v2238 = vadd.f32 0.0, %v2237
  %2239 = vdwg.mxu0
  %v2240 = vadd.f32 %v2010, %v2201
  %v2241 = vadd.f32 %v2011, %v2203
  %v2242 = vadd.f32 %v2012, %v2206
  %v2243 = vadd.f32 %v2013, %v2208
  %v2244 = vadd.f32 %v2014, %v2211
  %v2245 = vadd.f32 %v2015, %v2213
  %v2246 = vadd.f32 %v2016, %v2216
  %v2247 = vadd.f32 %v2017, %v2218
  %v2248 = vadd.f32 %v2018, %v2221
  %v2249 = vadd.f32 %v2019, %v2223
  %v2250 = vadd.f32 %v2020, %v2226
  %v2251 = vadd.f32 %v2021, %v2228
  %v2252 = vadd.f32 %v2022, %v2231
  %v2253 = vadd.f32 %v2023, %v2233
  %v2254 = vadd.f32 %v2024, %v2236
  %v2255 = vadd.f32 %v2025, %v2238
  %v2256 = vld [vmem:[%s2] sm:$0x1]
  %v2258 = vperm.slane %v2256, 0
  %v2260 = vadd.f32 %v2240, %v2258
  %v2261 = vadd.f32 %v2241, %v2258
  %v2262 = vadd.f32 %v2242, %v2258
  %v2263 = vadd.f32 %v2243, %v2258
  %v2264 = vadd.f32 %v2244, %v2258
  %v2265 = vadd.f32 %v2245, %v2258
  %v2266 = vadd.f32 %v2246, %v2258
  %v2267 = vadd.f32 %v2247, %v2258
  %v2268 = vadd.f32 %v2248, %v2258
  %v2269 = vadd.f32 %v2249, %v2258
  %v2270 = vadd.f32 %v2250, %v2258
  %v2271 = vadd.f32 %v2251, %v2258
  %v2272 = vadd.f32 %v2252, %v2258
  %v2273 = vadd.f32 %v2253, %v2258
  %v2274 = vadd.f32 %v2254, %v2258
  %v2275 = vadd.f32 %v2255, %v2258
  %v2276 = vmax.f32 %v2260, 0.0
  %v2277 = vmax.f32 %v2261, 0.0
  %v2278 = vmax.f32 %v2262, 0.0
  %v2279 = vmax.f32 %v2263, 0.0
  %v2280 = vmax.f32 %v2264, 0.0
  %v2281 = vmax.f32 %v2265, 0.0
  %v2282 = vmax.f32 %v2266, 0.0
  %v2283 = vmax.f32 %v2267, 0.0
  %v2284 = vmax.f32 %v2268, 0.0
  %v2285 = vmax.f32 %v2269, 0.0
  %v2286 = vmax.f32 %v2270, 0.0
  %v2287 = vmax.f32 %v2271, 0.0
  %v2288 = vmax.f32 %v2272, 0.0
  %v2289 = vmax.f32 %v2273, 0.0
  %v2290 = vmax.f32 %v2274, 0.0
  %v2291 = vmax.f32 %v2275, 0.0
  %v2292 = vld [vmem:[%s3] sm:$0x1]
  %v2294 = vperm.slane %v2292, 0
  %v2296 = vmul.f32 %v2276, %v2294
  %v2297 = vmul.f32 %v2277, %v2294
  %v2298 = vmul.f32 %v2278, %v2294
  %v2299 = vmul.f32 %v2279, %v2294
  %v2300 = vmul.f32 %v2280, %v2294
  %v2301 = vmul.f32 %v2281, %v2294
  %v2302 = vmul.f32 %v2282, %v2294
  %v2303 = vmul.f32 %v2283, %v2294
  %v2304 = vmul.f32 %v2284, %v2294
  %v2305 = vmul.f32 %v2285, %v2294
  %v2306 = vmul.f32 %v2286, %v2294
  %v2307 = vmul.f32 %v2287, %v2294
  %v2308 = vmul.f32 %v2288, %v2294
  %v2309 = vmul.f32 %v2289, %v2294
  %v2310 = vmul.f32 %v2290, %v2294
  %v2311 = vmul.f32 %v2291, %v2294
  %v2312 = vld [vmem:[%s4] sm:$0x1]
  %v2314 = vperm.slane %v2312, 0
  %v2316 = vadd.f32 %v2296, %v2314
  %v2317 = vadd.f32 %v2297, %v2314
  %v2318 = vadd.f32 %v2298, %v2314
  %v2319 = vadd.f32 %v2299, %v2314
  %v2320 = vadd.f32 %v2300, %v2314
  %v2321 = vadd.f32 %v2301, %v2314
  %v2322 = vadd.f32 %v2302, %v2314
  %v2323 = vadd.f32 %v2303, %v2314
  %v2324 = vadd.f32 %v2304, %v2314
  %v2325 = vadd.f32 %v2305, %v2314
  %v2326 = vadd.f32 %v2306, %v2314
  %v2327 = vadd.f32 %v2307, %v2314
  %v2328 = vadd.f32 %v2308, %v2314
  %v2329 = vadd.f32 %v2309, %v2314
  %v2330 = vadd.f32 %v2310, %v2314
  %v2331 = vadd.f32 %v2311, %v2314
  %vm2332 = vcmask 60416
  %2333 = vst.msk [vmem:[#allocation2] sm:$0xf] %vm2332, 0
  %vm2334 = vcmask 57344
  %2335 = vst.msk [vmem:[#allocation2 + $0x4] sm:$0x1] %vm2334, 0
  %2336 = vst.msk [vmem:[#allocation2 + $0x50] sm:$0xf] %vm2332, 0
  %2337 = vst.msk [vmem:[#allocation2 + $0x54] sm:$0x1] %vm2334, 0
  %s2338 = scalar_lea.vmem [#allocation2], 72
  %2339 = vst.msk [vmem:[%s2338] sm:$0xf] %vm2332, 0
  %2340 = vst.msk [vmem:[%s2338 + $0x4] sm:$0x1] %vm2334, 0
  %2341 = vst.msk [vmem:[%s2338 + $0x50] sm:$0xf] %vm2332, 0
  %2342 = vst.msk [vmem:[%s2338 + $0x54] sm:$0x1] %vm2334, 0
  %vm2343 = vcmask 57344
  %vm2344 = vsmask.f32 256
  %vm2345 = vmand %vm2343, %vm2344
  %v2346 = vld [vmem:[#allocation2] sm:$0x1]
  %v2347 = vsel %vm2345, 0, %v2346
  %2348 = vst [vmem:[#allocation2] sm:$0x1] %v2347
  %v2349 = vld [vmem:[#allocation2 + $0x8] sm:$0x1]
  %v2350 = vsel %vm2345, 0, %v2349
  %2351 = vst [vmem:[#allocation2 + $0x8] sm:$0x1] %v2350
  %v2352 = vld [vmem:[#allocation2 + $0x10] sm:$0x1]
  %v2353 = vsel %vm2345, 0, %v2352
  %2354 = vst [vmem:[#allocation2 + $0x10] sm:$0x1] %v2353
  %v2355 = vld [vmem:[#allocation2 + $0x18] sm:$0x1]
  %v2356 = vsel %vm2345, 0, %v2355
  %2357 = vst [vmem:[#allocation2 + $0x18] sm:$0x1] %v2356
  %v2358 = vld [vmem:[#allocation2 + $0x20] sm:$0x1]
  %v2359 = vsel %vm2345, 0, %v2358
  %2360 = vst [vmem:[#allocation2 + $0x20] sm:$0x1] %v2359
  %v2361 = vld [vmem:[#allocation2 + $0x28] sm:$0x1]
  %v2362 = vsel %vm2345, 0, %v2361
  %2363 = vst [vmem:[#allocation2 + $0x28] sm:$0x1] %v2362
  %v2364 = vld [vmem:[#allocation2 + $0x30] sm:$0x1]
  %v2365 = vsel %vm2345, 0, %v2364
  %2366 = vst [vmem:[#allocation2 + $0x30] sm:$0x1] %v2365
  %v2367 = vld [vmem:[#allocation2 + $0x38] sm:$0x1]
  %v2368 = vsel %vm2345, 0, %v2367
  %2369 = vst [vmem:[#allocation2 + $0x38] sm:$0x1] %v2368
  %v2370 = vld [vmem:[#allocation2 + $0x40] sm:$0x1]
  %v2371 = vsel %vm2345, 0, %v2370
  %2372 = vst [vmem:[#allocation2 + $0x40] sm:$0x1] %v2371
  %v2373 = vld [vmem:[#allocation2 + $0x48] sm:$0x1]
  %v2374 = vsel %vm2345, 0, %v2373
  %2375 = vst [vmem:[#allocation2 + $0x48] sm:$0x1] %v2374
  %v2376 = vld [vmem:[#allocation2 + $0x50] sm:$0x1]
  %v2377 = vsel %vm2345, 0, %v2376
  %2378 = vst [vmem:[#allocation2 + $0x50] sm:$0x1] %v2377
  %v2379 = vld [vmem:[#allocation2 + $0x58] sm:$0x1]
  %v2380 = vsel %vm2345, 0, %v2379
  %2381 = vst [vmem:[#allocation2 + $0x58] sm:$0x1] %v2380
  %v2382 = vld [vmem:[#allocation2 + $0x60] sm:$0x1]
  %v2383 = vsel %vm2345, 0, %v2382
  %2384 = vst [vmem:[#allocation2 + $0x60] sm:$0x1] %v2383
  %v2385 = vld [vmem:[#allocation2 + $0x68] sm:$0x1]
  %v2386 = vsel %vm2345, 0, %v2385
  %2387 = vst [vmem:[#allocation2 + $0x68] sm:$0x1] %v2386
  %v2388 = vld [vmem:[#allocation2 + $0x70] sm:$0x1]
  %v2389 = vsel %vm2345, 0, %v2388
  %2390 = vst [vmem:[#allocation2 + $0x70] sm:$0x1] %v2389
  %v2391 = vld [vmem:[#allocation2 + $0x78] sm:$0x1]
  %v2392 = vsel %vm2345, 0, %v2391
  %2393 = vst [vmem:[#allocation2 + $0x78] sm:$0x1] %v2392
  %v2394 = vld [vmem:[#allocation2 + $0x80] sm:$0x1]
  %v2395 = vsel %vm2345, 0, %v2394
  %2396 = vst [vmem:[#allocation2 + $0x80] sm:$0x1] %v2395
  %v2397 = vld [vmem:[#allocation2 + $0x88] sm:$0x1]
  %v2398 = vsel %vm2345, 0, %v2397
  %2399 = vst [vmem:[#allocation2 + $0x88] sm:$0x1] %v2398
  %v2400 = vld [vmem:[#allocation2 + $0x90] sm:$0x1]
  %v2401 = vsel %vm2345, 0, %v2400
  %2402 = vst [vmem:[#allocation2 + $0x90] sm:$0x1] %v2401
  %v2403 = vld [vmem:[#allocation2 + $0x98] sm:$0x1]
  %v2404 = vsel %vm2345, 0, %v2403
  %2405 = vst [vmem:[#allocation2 + $0x98] sm:$0x1] %v2404
  %vm2406 = vsmask.f32 7938
  %vm2407 = vmand %vm2343, %vm2406
  %v2408 = vld [vmem:[#allocation2 + $0x4] sm:$0x1]
  %v2409 = vsel %vm2407, 0, %v2408
  %2410 = vst [vmem:[#allocation2 + $0x4] sm:$0x1] %v2409
  %v2411 = vld [vmem:[#allocation2 + $0xc] sm:$0x1]
  %v2412 = vsel %vm2407, 0, %v2411
  %2413 = vst [vmem:[#allocation2 + $0xc] sm:$0x1] %v2412
  %v2414 = vld [vmem:[#allocation2 + $0x14] sm:$0x1]
  %v2415 = vsel %vm2407, 0, %v2414
  %2416 = vst [vmem:[#allocation2 + $0x14] sm:$0x1] %v2415
  %v2417 = vld [vmem:[#allocation2 + $0x1c] sm:$0x1]
  %v2418 = vsel %vm2407, 0, %v2417
  %2419 = vst [vmem:[#allocation2 + $0x1c] sm:$0x1] %v2418
  %v2420 = vld [vmem:[#allocation2 + $0x24] sm:$0x1]
  %v2421 = vsel %vm2407, 0, %v2420
  %2422 = vst [vmem:[#allocation2 + $0x24] sm:$0x1] %v2421
  %v2423 = vld [vmem:[#allocation2 + $0x2c] sm:$0x1]
  %v2424 = vsel %vm2407, 0, %v2423
  %2425 = vst [vmem:[#allocation2 + $0x2c] sm:$0x1] %v2424
  %v2426 = vld [vmem:[#allocation2 + $0x34] sm:$0x1]
  %v2427 = vsel %vm2407, 0, %v2426
  %2428 = vst [vmem:[#allocation2 + $0x34] sm:$0x1] %v2427
  %v2429 = vld [vmem:[#allocation2 + $0x3c] sm:$0x1]
  %v2430 = vsel %vm2407, 0, %v2429
  %2431 = vst [vmem:[#allocation2 + $0x3c] sm:$0x1] %v2430
  %v2432 = vld [vmem:[#allocation2 + $0x44] sm:$0x1]
  %v2433 = vsel %vm2407, 0, %v2432
  %2434 = vst [vmem:[#allocation2 + $0x44] sm:$0x1] %v2433
  %v2435 = vld [vmem:[#allocation2 + $0x4c] sm:$0x1]
  %v2436 = vsel %vm2407, 0, %v2435
  %2437 = vst [vmem:[#allocation2 + $0x4c] sm:$0x1] %v2436
  %v2438 = vld [vmem:[#allocation2 + $0x54] sm:$0x1]
  %v2439 = vsel %vm2407, 0, %v2438
  %2440 = vst [vmem:[#allocation2 + $0x54] sm:$0x1] %v2439
  %v2441 = vld [vmem:[#allocation2 + $0x5c] sm:$0x1]
  %v2442 = vsel %vm2407, 0, %v2441
  %2443 = vst [vmem:[#allocation2 + $0x5c] sm:$0x1] %v2442
  %v2444 = vld [vmem:[#allocation2 + $0x64] sm:$0x1]
  %v2445 = vsel %vm2407, 0, %v2444
  %2446 = vst [vmem:[#allocation2 + $0x64] sm:$0x1] %v2445
  %v2447 = vld [vmem:[#allocation2 + $0x6c] sm:$0x1]
  %v2448 = vsel %vm2407, 0, %v2447
  %2449 = vst [vmem:[#allocation2 + $0x6c] sm:$0x1] %v2448
  %v2450 = vld [vmem:[#allocation2 + $0x74] sm:$0x1]
  %v2451 = vsel %vm2407, 0, %v2450
  %2452 = vst [vmem:[#allocation2 + $0x74] sm:$0x1] %v2451
  %v2453 = vld [vmem:[#allocation2 + $0x7c] sm:$0x1]
  %v2454 = vsel %vm2407, 0, %v2453
  %2455 = vst [vmem:[#allocation2 + $0x7c] sm:$0x1] %v2454
  %v2456 = vld [vmem:[#allocation2 + $0x84] sm:$0x1]
  %v2457 = vsel %vm2407, 0, %v2456
  %2458 = vst [vmem:[#allocation2 + $0x84] sm:$0x1] %v2457
  %v2459 = vld [vmem:[#allocation2 + $0x8c] sm:$0x1]
  %v2460 = vsel %vm2407, 0, %v2459
  %2461 = vst [vmem:[#allocation2 + $0x8c] sm:$0x1] %v2460
  %v2462 = vld [vmem:[#allocation2 + $0x94] sm:$0x1]
  %v2463 = vsel %vm2407, 0, %v2462
  %2464 = vst [vmem:[#allocation2 + $0x94] sm:$0x1] %v2463
  %v2465 = vld [vmem:[#allocation2 + $0x9c] sm:$0x1]
  %v2466 = vsel %vm2407, 0, %v2465
  %2467 = vst [vmem:[#allocation2 + $0x9c] sm:$0x1] %v2466
  %v2468 = vpack.c.bf16 %v2316, %v2316
  %v2469 = vpack.c.bf16 %v2317, %v2317
  %v2470 = vpack.c.bf16 %v2318, %v2318
  %v2471 = vpack.c.bf16 %v2319, %v2319
  %v2472 = vpack.c.bf16 %v2320, %v2320
  %v2473 = vpack.c.bf16 %v2321, %v2321
  %v2474 = vpack.c.bf16 %v2322, %v2322
  %v2475 = vpack.c.bf16 %v2323, %v2323
  %v2476 = vpack.c.bf16 %v2324, %v2324
  %v2477 = vpack.c.bf16 %v2325, %v2325
  %v2478 = vpack.c.bf16 %v2326, %v2326
  %v2479 = vpack.c.bf16 %v2327, %v2327
  %v2480 = vpack.c.bf16 %v2328, %v2328
  %v2481 = vpack.c.bf16 %v2329, %v2329
  %v2482 = vpack.c.bf16 %v2330, %v2330
  %v2483 = vpack.c.bf16 %v2331, %v2331
  %v2485 = vshrl.u32 %v2468, 16
  %v2487 = vrot.slane %v2485, 7
  %v2488 = vshll.u32 %v2468, 16
  %v2490 = vor.u32 %v2487, %v2488
  %v2491 = vrot.slane %v2487, 4
  %v2493 = vshrl.u32 %v2469, 16
  %v2495 = vrot.slane %v2493, 7
  %v2496 = vshll.u32 %v2469, 16
  %v2498 = vor.u32 %v2495, %v2496
  %v2499 = vrot.slane %v2495, 4
  %v2501 = vshrl.u32 %v2470, 16
  %v2503 = vrot.slane %v2501, 7
  %v2504 = vshll.u32 %v2470, 16
  %v2506 = vor.u32 %v2503, %v2504
  %v2507 = vrot.slane %v2503, 4
  %v2509 = vshrl.u32 %v2471, 16
  %v2511 = vrot.slane %v2509, 7
  %v2512 = vshll.u32 %v2471, 16
  %v2514 = vor.u32 %v2511, %v2512
  %v2515 = vrot.slane %v2511, 4
  %v2517 = vshrl.u32 %v2472, 16
  %v2519 = vrot.slane %v2517, 7
  %v2520 = vshll.u32 %v2472, 16
  %v2522 = vor.u32 %v2519, %v2520
  %v2523 = vrot.slane %v2519, 4
  %v2525 = vshrl.u32 %v2473, 16
  %v2527 = vrot.slane %v2525, 7
  %v2528 = vshll.u32 %v2473, 16
  %v2530 = vor.u32 %v2527, %v2528
  %v2531 = vrot.slane %v2527, 4
  %v2533 = vshrl.u32 %v2474, 16
  %v2535 = vrot.slane %v2533, 7
  %v2536 = vshll.u32 %v2474, 16
  %v2538 = vor.u32 %v2535, %v2536
  %v2539 = vrot.slane %v2535, 4
  %v2541 = vshrl.u32 %v2475, 16
  %v2543 = vrot.slane %v2541, 7
  %v2544 = vshll.u32 %v2475, 16
  %v2546 = vor.u32 %v2543, %v2544
  %v2547 = vrot.slane %v2543, 4
  %v2549 = vshrl.u32 %v2476, 16
  %v2551 = vrot.slane %v2549, 7
  %v2552 = vshll.u32 %v2476, 16
  %v2554 = vor.u32 %v2551, %v2552
  %v2555 = vrot.slane %v2551, 4
  %v2557 = vshrl.u32 %v2477, 16
  %v2559 = vrot.slane %v2557, 7
  %v2560 = vshll.u32 %v2477, 16
  %v2562 = vor.u32 %v2559, %v2560
  %v2563 = vrot.slane %v2559, 4
  %v2565 = vshrl.u32 %v2478, 16
  %v2567 = vrot.slane %v2565, 7
  %v2568 = vshll.u32 %v2478, 16
  %v2570 = vor.u32 %v2567, %v2568
  %v2571 = vrot.slane %v2567, 4
  %v2573 = vshrl.u32 %v2479, 16
  %v2575 = vrot.slane %v2573, 7
  %v2576 = vshll.u32 %v2479, 16
  %v2578 = vor.u32 %v2575, %v2576
  %v2579 = vrot.slane %v2575, 4
  %v2581 = vshrl.u32 %v2480, 16
  %v2583 = vrot.slane %v2581, 7
  %v2584 = vshll.u32 %v2480, 16
  %v2586 = vor.u32 %v2583, %v2584
  %v2587 = vrot.slane %v2583, 4
  %v2589 = vshrl.u32 %v2481, 16
  %v2591 = vrot.slane %v2589, 7
  %v2592 = vshll.u32 %v2481, 16
  %v2594 = vor.u32 %v2591, %v2592
  %v2595 = vrot.slane %v2591, 4
  %v2597 = vshrl.u32 %v2482, 16
  %v2599 = vrot.slane %v2597, 7
  %v2600 = vshll.u32 %v2482, 16
  %v2602 = vor.u32 %v2599, %v2600
  %v2603 = vrot.slane %v2599, 4
  %v2605 = vshrl.u32 %v2483, 16
  %v2607 = vrot.slane %v2605, 7
  %v2608 = vshll.u32 %v2483, 16
  %v2610 = vor.u32 %v2607, %v2608
  %v2611 = vrot.slane %v2607, 4
  %s2644 = scalar_lea.vmem [#allocation2], 8
  %vm2645 = vcmask 60416
  %vm2646 = vmand %vm2645, %vm2406
  %v2647 = vld [vmem:[%s2644] sm:$0xf]
  %v2648 = vsel %vm2646, %v2490, %v2647
  %2649 = vst [vmem:[%s2644] sm:$0xf] %v2648
  %v2650 = vld [vmem:[%s2644 + $0x4] sm:$0x1]
  %v2651 = vsel %vm2345, %v2491, %v2650
  %2652 = vst [vmem:[%s2644 + $0x4] sm:$0x1] %v2651
  %v2653 = vld [vmem:[%s2644 + $0x8] sm:$0xf]
  %v2654 = vsel %vm2646, %v2498, %v2653
  %2655 = vst [vmem:[%s2644 + $0x8] sm:$0xf] %v2654
  %v2656 = vld [vmem:[%s2644 + $0xc] sm:$0x1]
  %v2657 = vsel %vm2345, %v2499, %v2656
  %2658 = vst [vmem:[%s2644 + $0xc] sm:$0x1] %v2657
  %v2659 = vld [vmem:[%s2644 + $0x10] sm:$0xf]
  %v2660 = vsel %vm2646, %v2506, %v2659
  %2661 = vst [vmem:[%s2644 + $0x10] sm:$0xf] %v2660
  %v2662 = vld [vmem:[%s2644 + $0x14] sm:$0x1]
  %v2663 = vsel %vm2345, %v2507, %v2662
  %2664 = vst [vmem:[%s2644 + $0x14] sm:$0x1] %v2663
  %v2665 = vld [vmem:[%s2644 + $0x18] sm:$0xf]
  %v2666 = vsel %vm2646, %v2514, %v2665
  %2667 = vst [vmem:[%s2644 + $0x18] sm:$0xf] %v2666
  %v2668 = vld [vmem:[%s2644 + $0x1c] sm:$0x1]
  %v2669 = vsel %vm2345, %v2515, %v2668
  %2670 = vst [vmem:[%s2644 + $0x1c] sm:$0x1] %v2669
  %v2671 = vld [vmem:[%s2644 + $0x20] sm:$0xf]
  %v2672 = vsel %vm2646, %v2522, %v2671
  %2673 = vst [vmem:[%s2644 + $0x20] sm:$0xf] %v2672
  %v2674 = vld [vmem:[%s2644 + $0x24] sm:$0x1]
  %v2675 = vsel %vm2345, %v2523, %v2674
  %2676 = vst [vmem:[%s2644 + $0x24] sm:$0x1] %v2675
  %v2677 = vld [vmem:[%s2644 + $0x28] sm:$0xf]
  %v2678 = vsel %vm2646, %v2530, %v2677
  %2679 = vst [vmem:[%s2644 + $0x28] sm:$0xf] %v2678
  %v2680 = vld [vmem:[%s2644 + $0x2c] sm:$0x1]
  %v2681 = vsel %vm2345, %v2531, %v2680
  %2682 = vst [vmem:[%s2644 + $0x2c] sm:$0x1] %v2681
  %v2683 = vld [vmem:[%s2644 + $0x30] sm:$0xf]
  %v2684 = vsel %vm2646, %v2538, %v2683
  %2685 = vst [vmem:[%s2644 + $0x30] sm:$0xf] %v2684
  %v2686 = vld [vmem:[%s2644 + $0x34] sm:$0x1]
  %v2687 = vsel %vm2345, %v2539, %v2686
  %2688 = vst [vmem:[%s2644 + $0x34] sm:$0x1] %v2687
  %v2689 = vld [vmem:[%s2644 + $0x38] sm:$0xf]
  %v2690 = vsel %vm2646, %v2546, %v2689
  %2691 = vst [vmem:[%s2644 + $0x38] sm:$0xf] %v2690
  %v2692 = vld [vmem:[%s2644 + $0x3c] sm:$0x1]
  %v2693 = vsel %vm2345, %v2547, %v2692
  %2694 = vst [vmem:[%s2644 + $0x3c] sm:$0x1] %v2693
  %v2695 = vld [vmem:[%s2644 + $0x50] sm:$0xf]
  %v2696 = vsel %vm2646, %v2554, %v2695
  %2697 = vst [vmem:[%s2644 + $0x50] sm:$0xf] %v2696
  %v2698 = vld [vmem:[%s2644 + $0x54] sm:$0x1]
  %v2699 = vsel %vm2345, %v2555, %v2698
  %2700 = vst [vmem:[%s2644 + $0x54] sm:$0x1] %v2699
  %v2701 = vld [vmem:[%s2644 + $0x58] sm:$0xf]
  %v2702 = vsel %vm2646, %v2562, %v2701
  %2703 = vst [vmem:[%s2644 + $0x58] sm:$0xf] %v2702
  %v2704 = vld [vmem:[%s2644 + $0x5c] sm:$0x1]
  %v2705 = vsel %vm2345, %v2563, %v2704
  %2706 = vst [vmem:[%s2644 + $0x5c] sm:$0x1] %v2705
  %v2707 = vld [vmem:[%s2644 + $0x60] sm:$0xf]
  %v2708 = vsel %vm2646, %v2570, %v2707
  %2709 = vst [vmem:[%s2644 + $0x60] sm:$0xf] %v2708
  %v2710 = vld [vmem:[%s2644 + $0x64] sm:$0x1]
  %v2711 = vsel %vm2345, %v2571, %v2710
  %2712 = vst [vmem:[%s2644 + $0x64] sm:$0x1] %v2711
  %v2713 = vld [vmem:[%s2644 + $0x68] sm:$0xf]
  %v2714 = vsel %vm2646, %v2578, %v2713
  %2715 = vst [vmem:[%s2644 + $0x68] sm:$0xf] %v2714
  %v2716 = vld [vmem:[%s2644 + $0x6c] sm:$0x1]
  %v2717 = vsel %vm2345, %v2579, %v2716
  %2718 = vst [vmem:[%s2644 + $0x6c] sm:$0x1] %v2717
  %v2719 = vld [vmem:[%s2644 + $0x70] sm:$0xf]
  %v2720 = vsel %vm2646, %v2586, %v2719
  %2721 = vst [vmem:[%s2644 + $0x70] sm:$0xf] %v2720
  %v2722 = vld [vmem:[%s2644 + $0x74] sm:$0x1]
  %v2723 = vsel %vm2345, %v2587, %v2722
  %2724 = vst [vmem:[%s2644 + $0x74] sm:$0x1] %v2723
  %v2725 = vld [vmem:[%s2644 + $0x78] sm:$0xf]
  %v2726 = vsel %vm2646, %v2594, %v2725
  %2727 = vst [vmem:[%s2644 + $0x78] sm:$0xf] %v2726
  %v2728 = vld [vmem:[%s2644 + $0x7c] sm:$0x1]
  %v2729 = vsel %vm2345, %v2595, %v2728
  %2730 = vst [vmem:[%s2644 + $0x7c] sm:$0x1] %v2729
  %v2731 = vld [vmem:[%s2644 + $0x80] sm:$0xf]
  %v2732 = vsel %vm2646, %v2602, %v2731
  %2733 = vst [vmem:[%s2644 + $0x80] sm:$0xf] %v2732
  %v2734 = vld [vmem:[%s2644 + $0x84] sm:$0x1]
  %v2735 = vsel %vm2345, %v2603, %v2734
  %2736 = vst [vmem:[%s2644 + $0x84] sm:$0x1] %v2735
  %v2737 = vld [vmem:[%s2644 + $0x88] sm:$0xf]
  %v2738 = vsel %vm2646, %v2610, %v2737
  %2739 = vst [vmem:[%s2644 + $0x88] sm:$0xf] %v2738
  %v2740 = vld [vmem:[%s2644 + $0x8c] sm:$0x1]
  %v2741 = vsel %vm2345, %v2611, %v2740
  %2742 = vst [vmem:[%s2644 + $0x8c] sm:$0x1] %v2741
  %v2743 = vld [vmem:[#allocation2] sm:$0xf]
  %v2744 = vld [vmem:[#allocation2 + $0x8] sm:$0xf]
  %v2745 = vld [vmem:[#allocation2 + $0x10] sm:$0xf]
  %v2746 = vld [vmem:[#allocation2 + $0x18] sm:$0xf]
  %v2747 = vld [vmem:[#allocation2 + $0x20] sm:$0xf]
  %v2748 = vld [vmem:[#allocation2 + $0x28] sm:$0xf]
  %v2749 = vld [vmem:[#allocation2 + $0x30] sm:$0xf]
  %v2750 = vld [vmem:[#allocation2 + $0x38] sm:$0xf]
  %v2751 = vld [vmem:[#allocation2 + $0x50] sm:$0xf]
  %v2752 = vld [vmem:[#allocation2 + $0x58] sm:$0xf]
  %v2753 = vld [vmem:[#allocation2 + $0x60] sm:$0xf]
  %v2754 = vld [vmem:[#allocation2 + $0x68] sm:$0xf]
  %v2755 = vld [vmem:[#allocation2 + $0x70] sm:$0xf]
  %v2756 = vld [vmem:[#allocation2 + $0x78] sm:$0xf]
  %v2757 = vld [vmem:[#allocation2 + $0x80] sm:$0xf]
  %v2758 = vld [vmem:[#allocation2 + $0x88] sm:$0xf]
  %v2759 = vld [vmem:[%s5] sm:$0xf]
  %v2760 = vld [vmem:[#allocation2 + $0x4] sm:$0x1]
  %v2761 = vld [vmem:[#allocation2 + $0xc] sm:$0x1]
  %v2762 = vld [vmem:[#allocation2 + $0x14] sm:$0x1]
  %v2763 = vld [vmem:[#allocation2 + $0x1c] sm:$0x1]
  %v2764 = vld [vmem:[#allocation2 + $0x24] sm:$0x1]
  %v2765 = vld [vmem:[#allocation2 + $0x2c] sm:$0x1]
  %v2766 = vld [vmem:[#allocation2 + $0x34] sm:$0x1]
  %v2767 = vld [vmem:[#allocation2 + $0x3c] sm:$0x1]
  %v2768 = vld [vmem:[#allocation2 + $0x54] sm:$0x1]
  %v2769 = vld [vmem:[#allocation2 + $0x5c] sm:$0x1]
  %v2770 = vld [vmem:[#allocation2 + $0x64] sm:$0x1]
  %v2771 = vld [vmem:[#allocation2 + $0x6c] sm:$0x1]
  %v2772 = vld [vmem:[#allocation2 + $0x74] sm:$0x1]
  %v2773 = vld [vmem:[#allocation2 + $0x7c] sm:$0x1]
  %v2774 = vld [vmem:[#allocation2 + $0x84] sm:$0x1]
  %v2775 = vld [vmem:[#allocation2 + $0x8c] sm:$0x1]
  %v2777 = vshrl.u32 %v2743, 16
  %v2779 = vrot.slane %v2777, 4
  %v2780 = vshll.u32 %v2743, 16
  %v2782 = vrot.slane %v2780, 5
  %v2783 = vor.u32 %v2779, %v2782
  %v2784 = vrot.slane %v2783, 4
  %v2786 = vshll.u32 %v2760, 16
  %v2788 = vrot.slane %v2786, 5
  %v2789 = vsel %vm68, %v2784, %v2788
  %v2791 = vshrl.u32 %v2744, 16
  %v2793 = vrot.slane %v2791, 4
  %v2794 = vshll.u32 %v2744, 16
  %v2796 = vrot.slane %v2794, 5
  %v2797 = vor.u32 %v2793, %v2796
  %v2798 = vrot.slane %v2797, 4
  %v2800 = vshll.u32 %v2761, 16
  %v2802 = vrot.slane %v2800, 5
  %v2803 = vsel %vm68, %v2798, %v2802
  %v2805 = vshrl.u32 %v2745, 16
  %v2807 = vrot.slane %v2805, 4
  %v2808 = vshll.u32 %v2745, 16
  %v2810 = vrot.slane %v2808, 5
  %v2811 = vor.u32 %v2807, %v2810
  %v2812 = vrot.slane %v2811, 4
  %v2814 = vshll.u32 %v2762, 16
  %v2816 = vrot.slane %v2814, 5
  %v2817 = vsel %vm68, %v2812, %v2816
  %v2819 = vshrl.u32 %v2746, 16
  %v2821 = vrot.slane %v2819, 4
  %v2822 = vshll.u32 %v2746, 16
  %v2824 = vrot.slane %v2822, 5
  %v2825 = vor.u32 %v2821, %v2824
  %v2826 = vrot.slane %v2825, 4
  %v2828 = vshll.u32 %v2763, 16
  %v2830 = vrot.slane %v2828, 5
  %v2831 = vsel %vm68, %v2826, %v2830
  %v2833 = vshrl.u32 %v2747, 16
  %v2835 = vrot.slane %v2833, 4
  %v2836 = vshll.u32 %v2747, 16
  %v2838 = vrot.slane %v2836, 5
  %v2839 = vor.u32 %v2835, %v2838
  %v2840 = vrot.slane %v2839, 4
  %v2842 = vshll.u32 %v2764, 16
  %v2844 = vrot.slane %v2842, 5
  %v2845 = vsel %vm68, %v2840, %v2844
  %v2847 = vshrl.u32 %v2748, 16
  %v2849 = vrot.slane %v2847, 4
  %v2850 = vshll.u32 %v2748, 16
  %v2852 = vrot.slane %v2850, 5
  %v2853 = vor.u32 %v2849, %v2852
  %v2854 = vrot.slane %v2853, 4
  %v2856 = vshll.u32 %v2765, 16
  %v2858 = vrot.slane %v2856, 5
  %v2859 = vsel %vm68, %v2854, %v2858
  %v2861 = vshrl.u32 %v2749, 16
  %v2863 = vrot.slane %v2861, 4
  %v2864 = vshll.u32 %v2749, 16
  %v2866 = vrot.slane %v2864, 5
  %v2867 = vor.u32 %v2863, %v2866
  %v2868 = vrot.slane %v2867, 4
  %v2870 = vshll.u32 %v2766, 16
  %v2872 = vrot.slane %v2870, 5
  %v2873 = vsel %vm68, %v2868, %v2872
  %v2875 = vshrl.u32 %v2750, 16
  %v2877 = vrot.slane %v2875, 4
  %v2878 = vshll.u32 %v2750, 16
  %v2880 = vrot.slane %v2878, 5
  %v2881 = vor.u32 %v2877, %v2880
  %v2882 = vrot.slane %v2881, 4
  %v2884 = vshll.u32 %v2767, 16
  %v2886 = vrot.slane %v2884, 5
  %v2887 = vsel %vm68, %v2882, %v2886
  %v2889 = vshrl.u32 %v2751, 16
  %v2891 = vrot.slane %v2889, 4
  %v2892 = vshll.u32 %v2751, 16
  %v2894 = vrot.slane %v2892, 5
  %v2895 = vor.u32 %v2891, %v2894
  %v2896 = vrot.slane %v2895, 4
  %v2898 = vshll.u32 %v2768, 16
  %v2900 = vrot.slane %v2898, 5
  %v2901 = vsel %vm68, %v2896, %v2900
  %v2903 = vshrl.u32 %v2752, 16
  %v2905 = vrot.slane %v2903, 4
  %v2906 = vshll.u32 %v2752, 16
  %v2908 = vrot.slane %v2906, 5
  %v2909 = vor.u32 %v2905, %v2908
  %v2910 = vrot.slane %v2909, 4
  %v2912 = vshll.u32 %v2769, 16
  %v2914 = vrot.slane %v2912, 5
  %v2915 = vsel %vm68, %v2910, %v2914
  %v2917 = vshrl.u32 %v2753, 16
  %v2919 = vrot.slane %v2917, 4
  %v2920 = vshll.u32 %v2753, 16
  %v2922 = vrot.slane %v2920, 5
  %v2923 = vor.u32 %v2919, %v2922
  %v2924 = vrot.slane %v2923, 4
  %v2926 = vshll.u32 %v2770, 16
  %v2928 = vrot.slane %v2926, 5
  %v2929 = vsel %vm68, %v2924, %v2928
  %v2931 = vshrl.u32 %v2754, 16
  %v2933 = vrot.slane %v2931, 4
  %v2934 = vshll.u32 %v2754, 16
  %v2936 = vrot.slane %v2934, 5
  %v2937 = vor.u32 %v2933, %v2936
  %v2938 = vrot.slane %v2937, 4
  %v2940 = vshll.u32 %v2771, 16
  %v2942 = vrot.slane %v2940, 5
  %v2943 = vsel %vm68, %v2938, %v2942
  %v2945 = vshrl.u32 %v2755, 16
  %v2947 = vrot.slane %v2945, 4
  %v2948 = vshll.u32 %v2755, 16
  %v2950 = vrot.slane %v2948, 5
  %v2951 = vor.u32 %v2947, %v2950
  %v2952 = vrot.slane %v2951, 4
  %v2954 = vshll.u32 %v2772, 16
  %v2956 = vrot.slane %v2954, 5
  %v2957 = vsel %vm68, %v2952, %v2956
  %v2959 = vshrl.u32 %v2756, 16
  %v2961 = vrot.slane %v2959, 4
  %v2962 = vshll.u32 %v2756, 16
  %v2964 = vrot.slane %v2962, 5
  %v2965 = vor.u32 %v2961, %v2964
  %v2966 = vrot.slane %v2965, 4
  %v2968 = vshll.u32 %v2773, 16
  %v2970 = vrot.slane %v2968, 5
  %v2971 = vsel %vm68, %v2966, %v2970
  %v2973 = vshrl.u32 %v2757, 16
  %v2975 = vrot.slane %v2973, 4
  %v2976 = vshll.u32 %v2757, 16
  %v2978 = vrot.slane %v2976, 5
  %v2979 = vor.u32 %v2975, %v2978
  %v2980 = vrot.slane %v2979, 4
  %v2982 = vshll.u32 %v2774, 16
  %v2984 = vrot.slane %v2982, 5
  %v2985 = vsel %vm68, %v2980, %v2984
  %v2987 = vshrl.u32 %v2758, 16
  %v2989 = vrot.slane %v2987, 4
  %v2990 = vshll.u32 %v2758, 16
  %v2992 = vrot.slane %v2990, 5
  %v2993 = vor.u32 %v2989, %v2992
  %v2994 = vrot.slane %v2993, 4
  %v2996 = vshll.u32 %v2775, 16
  %v2998 = vrot.slane %v2996, 5
  %v2999 = vsel %vm68, %v2994, %v2998
  %s3000 = scalar_lea.vmem %s5, 4
  %v3001 = vld [vmem:[%s3000] sm:$0xf]
  %v3002 = vunpack.c.l.b16 %v2789
  %v3003 = vunpack.c.l.b16 %v2803
  %v3004 = vunpack.c.l.b16 %v2817
  %v3005 = vunpack.c.l.b16 %v2831
  %v3006 = vunpack.c.l.b16 %v2845
  %v3007 = vunpack.c.l.b16 %v2859
  %v3008 = vunpack.c.l.b16 %v2873
  %v3009 = vunpack.c.l.b16 %v2887
  %v3010 = vunpack.c.l.b16 %v2901
  %v3011 = vunpack.c.l.b16 %v2915
  %v3012 = vunpack.c.l.b16 %v2929
  %v3013 = vunpack.c.l.b16 %v2943
  %v3014 = vunpack.c.l.b16 %v2957
  %v3015 = vunpack.c.l.b16 %v2971
  %v3016 = vunpack.c.l.b16 %v2985
  %v3017 = vunpack.c.l.b16 %v2999
  %v3018 = vpack.c.b16 %v3003, %v3002
  %v3019 = vpack.c.b16 %v3005, %v3004
  %v3020 = vpack.c.b16 %v3007, %v3006
  %v3021 = vpack.c.b16 %v3009, %v3008
  %v3022 = vpack.c.b16 %v3011, %v3010
  %v3023 = vpack.c.b16 %v3013, %v3012
  %v3024 = vpack.c.b16 %v3015, %v3014
  %v3025 = vpack.c.b16 %v3017, %v3016
  %vm3026 = vcmask 64512
  %v3028 = vsel %vm3026, %v3018, 0
  %v3031 = vsel %vm3026, %v3019, 0
  %v3034 = vsel %vm3026, %v3020, 0
  %v3037 = vsel %vm3026, %v3021, 0
  %v3040 = vsel %vm3026, %v3022, 0
  %v3043 = vsel %vm3026, %v3023, 0
  %v3046 = vsel %vm3026, %v3024, 0
  %v3049 = vsel %vm3026, %v3025, 0
  %vm3051 = vcmask 1043456
  %v3053 = vsel %vm3051, %v3001, 0
  %3055 = vmatpush.bf16.msra.mxu0 0
  %3056 = vmatpush.bf16.msra.mxu0 0
  %3057 = vmatpush.bf16.msra.mxu0 0
  %3058 = vmatpush.bf16.msra.mxu0 0
  %3059 = vmatpush.bf16.msra.mxu0 0
  %3060 = vmatpush.bf16.msra.mxu0 0
  %3061 = vmatpush.bf16.msra.mxu0 0
  %3062 = vmatpush.bf16.msra.mxu0 %v3053
  %3063 = vmatmul.bf16.gmra.mxu0 %v3028
  %v3064 = vpop.f32.mrf.mxu0
  %v3065 = vadd.f32 0.0, %v3064
  %v3066 = vpop.f32.mrf.mxu0
  %v3067 = vadd.f32 0.0, %v3066
  %3068 = vmatmul.bf16.gmra.mxu0 %v3031
  %v3069 = vpop.f32.mrf.mxu0
  %v3070 = vadd.f32 0.0, %v3069
  %v3071 = vpop.f32.mrf.mxu0
  %v3072 = vadd.f32 0.0, %v3071
  %3073 = vmatmul.bf16.gmra.mxu0 %v3034
  %v3074 = vpop.f32.mrf.mxu0
  %v3075 = vadd.f32 0.0, %v3074
  %v3076 = vpop.f32.mrf.mxu0
  %v3077 = vadd.f32 0.0, %v3076
  %3078 = vmatmul.bf16.gmra.mxu0 %v3037
  %v3079 = vpop.f32.mrf.mxu0
  %v3080 = vadd.f32 0.0, %v3079
  %v3081 = vpop.f32.mrf.mxu0
  %v3082 = vadd.f32 0.0, %v3081
  %3083 = vmatmul.bf16.gmra.mxu0 %v3040
  %v3084 = vpop.f32.mrf.mxu0
  %v3085 = vadd.f32 0.0, %v3084
  %v3086 = vpop.f32.mrf.mxu0
  %v3087 = vadd.f32 0.0, %v3086
  %3088 = vmatmul.bf16.gmra.mxu0 %v3043
  %v3089 = vpop.f32.mrf.mxu0
  %v3090 = vadd.f32 0.0, %v3089
  %v3091 = vpop.f32.mrf.mxu0
  %v3092 = vadd.f32 0.0, %v3091
  %3093 = vmatmul.bf16.gmra.mxu0 %v3046
  %v3094 = vpop.f32.mrf.mxu0
  %v3095 = vadd.f32 0.0, %v3094
  %v3096 = vpop.f32.mrf.mxu0
  %v3097 = vadd.f32 0.0, %v3096
  %3098 = vmatmul.bf16.gmra.mxu0 %v3049
  %v3099 = vpop.f32.mrf.mxu0
  %v3100 = vadd.f32 0.0, %v3099
  %v3101 = vpop.f32.mrf.mxu0
  %v3102 = vadd.f32 0.0, %v3101
  %3103 = vdwg.mxu0
  %v3120 = vunpack.c.l.b16 %v2743
  %v3121 = vunpack.c.l.b16 %v2744
  %v3122 = vunpack.c.l.b16 %v2745
  %v3123 = vunpack.c.l.b16 %v2746
  %v3124 = vunpack.c.l.b16 %v2747
  %v3125 = vunpack.c.l.b16 %v2748
  %v3126 = vunpack.c.l.b16 %v2749
  %v3127 = vunpack.c.l.b16 %v2750
  %v3128 = vunpack.c.l.b16 %v2751
  %v3129 = vunpack.c.l.b16 %v2752
  %v3130 = vunpack.c.l.b16 %v2753
  %v3131 = vunpack.c.l.b16 %v2754
  %v3132 = vunpack.c.l.b16 %v2755
  %v3133 = vunpack.c.l.b16 %v2756
  %v3134 = vunpack.c.l.b16 %v2757
  %v3135 = vunpack.c.l.b16 %v2758
  %v3136 = vpack.c.b16 %v3121, %v3120
  %v3137 = vpack.c.b16 %v3123, %v3122
  %v3138 = vpack.c.b16 %v3125, %v3124
  %v3139 = vpack.c.b16 %v3127, %v3126
  %v3140 = vpack.c.b16 %v3129, %v3128
  %v3141 = vpack.c.b16 %v3131, %v3130
  %v3142 = vpack.c.b16 %v3133, %v3132
  %v3143 = vpack.c.b16 %v3135, %v3134
  %v3145 = vsel %vm3026, %v3136, 0
  %v3148 = vsel %vm3026, %v3137, 0
  %v3151 = vsel %vm3026, %v3138, 0
  %v3154 = vsel %vm3026, %v3139, 0
  %v3157 = vsel %vm3026, %v3140, 0
  %v3160 = vsel %vm3026, %v3141, 0
  %v3163 = vsel %vm3026, %v3142, 0
  %v3166 = vsel %vm3026, %v3143, 0
  %v3169 = vsel %vm3051, %v2759, 0
  %3171 = vmatpush.bf16.msra.mxu0 0
  %3172 = vmatpush.bf16.msra.mxu0 0
  %3173 = vmatpush.bf16.msra.mxu0 0
  %3174 = vmatpush.bf16.msra.mxu0 0
  %3175 = vmatpush.bf16.msra.mxu0 0
  %3176 = vmatpush.bf16.msra.mxu0 0
  %3177 = vmatpush.bf16.msra.mxu0 0
  %3178 = vmatpush.bf16.msra.mxu0 %v3169
  %3179 = vmatmul.bf16.gmra.mxu0 %v3145
  %v3180 = vpop.f32.mrf.mxu0
  %v3181 = vadd.f32 %v3065, %v3180
  %v3182 = vpop.f32.mrf.mxu0
  %v3183 = vadd.f32 %v3067, %v3182
  %3184 = vmatmul.bf16.gmra.mxu0 %v3148
  %v3185 = vpop.f32.mrf.mxu0
  %v3186 = vadd.f32 %v3070, %v3185
  %v3187 = vpop.f32.mrf.mxu0
  %v3188 = vadd.f32 %v3072, %v3187
  %3189 = vmatmul.bf16.gmra.mxu0 %v3151
  %v3190 = vpop.f32.mrf.mxu0
  %v3191 = vadd.f32 %v3075, %v3190
  %v3192 = vpop.f32.mrf.mxu0
  %v3193 = vadd.f32 %v3077, %v3192
  %3194 = vmatmul.bf16.gmra.mxu0 %v3154
  %v3195 = vpop.f32.mrf.mxu0
  %v3196 = vadd.f32 %v3080, %v3195
  %v3197 = vpop.f32.mrf.mxu0
  %v3198 = vadd.f32 %v3082, %v3197
  %3199 = vmatmul.bf16.gmra.mxu0 %v3157
  %v3200 = vpop.f32.mrf.mxu0
  %v3201 = vadd.f32 %v3085, %v3200
  %v3202 = vpop.f32.mrf.mxu0
  %v3203 = vadd.f32 %v3087, %v3202
  %3204 = vmatmul.bf16.gmra.mxu0 %v3160
  %v3205 = vpop.f32.mrf.mxu0
  %v3206 = vadd.f32 %v3090, %v3205
  %v3207 = vpop.f32.mrf.mxu0
  %v3208 = vadd.f32 %v3092, %v3207
  %3209 = vmatmul.bf16.gmra.mxu0 %v3163
  %v3210 = vpop.f32.mrf.mxu0
  %v3211 = vadd.f32 %v3095, %v3210
  %v3212 = vpop.f32.mrf.mxu0
  %v3213 = vadd.f32 %v3097, %v3212
  %3214 = vmatmul.bf16.gmra.mxu0 %v3166
  %v3215 = vpop.f32.mrf.mxu0
  %v3216 = vadd.f32 %v3100, %v3215
  %v3217 = vpop.f32.mrf.mxu0
  %v3218 = vadd.f32 %v3102, %v3217
  %3219 = vdwg.mxu0
  %v3220 = vld [vmem:[#allocation2] sm:$0xe]
  %v3221 = vld [vmem:[#allocation2 + $0x8] sm:$0xe]
  %v3222 = vld [vmem:[#allocation2 + $0x10] sm:$0xe]
  %v3223 = vld [vmem:[#allocation2 + $0x18] sm:$0xe]
  %v3224 = vld [vmem:[#allocation2 + $0x20] sm:$0xe]
  %v3225 = vld [vmem:[#allocation2 + $0x28] sm:$0xe]
  %v3226 = vld [vmem:[#allocation2 + $0x30] sm:$0xe]
  %v3227 = vld [vmem:[#allocation2 + $0x38] sm:$0xe]
  %v3228 = vld [vmem:[#allocation2 + $0x50] sm:$0xe]
  %v3229 = vld [vmem:[#allocation2 + $0x58] sm:$0xe]
  %v3230 = vld [vmem:[#allocation2 + $0x60] sm:$0xe]
  %v3231 = vld [vmem:[#allocation2 + $0x68] sm:$0xe]
  %v3232 = vld [vmem:[#allocation2 + $0x70] sm:$0xe]
  %v3233 = vld [vmem:[#allocation2 + $0x78] sm:$0xe]
  %v3234 = vld [vmem:[#allocation2 + $0x80] sm:$0xe]
  %v3235 = vld [vmem:[#allocation2 + $0x88] sm:$0xe]
  %v3268 = vrot.slane %v3220, 5
  %v3269 = vrot.slane %v3268, 4
  %v3270 = vrot.slane %v2760, 5
  %v3271 = vsel %vm563, %v3269, %v3270
  %v3272 = vrot.slane %v3221, 5
  %v3273 = vrot.slane %v3272, 4
  %v3274 = vrot.slane %v2761, 5
  %v3275 = vsel %vm563, %v3273, %v3274
  %v3276 = vrot.slane %v3222, 5
  %v3277 = vrot.slane %v3276, 4
  %v3278 = vrot.slane %v2762, 5
  %v3279 = vsel %vm563, %v3277, %v3278
  %v3280 = vrot.slane %v3223, 5
  %v3281 = vrot.slane %v3280, 4
  %v3282 = vrot.slane %v2763, 5
  %v3283 = vsel %vm563, %v3281, %v3282
  %v3284 = vrot.slane %v3224, 5
  %v3285 = vrot.slane %v3284, 4
  %v3286 = vrot.slane %v2764, 5
  %v3287 = vsel %vm563, %v3285, %v3286
  %v3288 = vrot.slane %v3225, 5
  %v3289 = vrot.slane %v3288, 4
  %v3290 = vrot.slane %v2765, 5
  %v3291 = vsel %vm563, %v3289, %v3290
  %v3292 = vrot.slane %v3226, 5
  %v3293 = vrot.slane %v3292, 4
  %v3294 = vrot.slane %v2766, 5
  %v3295 = vsel %vm563, %v3293, %v3294
  %v3296 = vrot.slane %v3227, 5
  %v3297 = vrot.slane %v3296, 4
  %v3298 = vrot.slane %v2767, 5
  %v3299 = vsel %vm563, %v3297, %v3298
  %v3300 = vrot.slane %v3228, 5
  %v3301 = vrot.slane %v3300, 4
  %v3302 = vrot.slane %v2768, 5
  %v3303 = vsel %vm563, %v3301, %v3302
  %v3304 = vrot.slane %v3229, 5
  %v3305 = vrot.slane %v3304, 4
  %v3306 = vrot.slane %v2769, 5
  %v3307 = vsel %vm563, %v3305, %v3306
  %v3308 = vrot.slane %v3230, 5
  %v3309 = vrot.slane %v3308, 4
  %v3310 = vrot.slane %v2770, 5
  %v3311 = vsel %vm563, %v3309, %v3310
  %v3312 = vrot.slane %v3231, 5
  %v3313 = vrot.slane %v3312, 4
  %v3314 = vrot.slane %v2771, 5
  %v3315 = vsel %vm563, %v3313, %v3314
  %v3316 = vrot.slane %v3232, 5
  %v3317 = vrot.slane %v3316, 4
  %v3318 = vrot.slane %v2772, 5
  %v3319 = vsel %vm563, %v3317, %v3318
  %v3320 = vrot.slane %v3233, 5
  %v3321 = vrot.slane %v3320, 4
  %v3322 = vrot.slane %v2773, 5
  %v3323 = vsel %vm563, %v3321, %v3322
  %v3324 = vrot.slane %v3234, 5
  %v3325 = vrot.slane %v3324, 4
  %v3326 = vrot.slane %v2774, 5
  %v3327 = vsel %vm563, %v3325, %v3326
  %v3328 = vrot.slane %v3235, 5
  %v3329 = vrot.slane %v3328, 4
  %v3330 = vrot.slane %v2775, 5
  %v3331 = vsel %vm563, %v3329, %v3330
  %s3332 = scalar_lea.vmem %s5, 8
  %v3333 = vld [vmem:[%s3332] sm:$0xf]
  %v3334 = vunpack.c.l.b16 %v3271
  %v3335 = vunpack.c.l.b16 %v3275
  %v3336 = vunpack.c.l.b16 %v3279
  %v3337 = vunpack.c.l.b16 %v3283
  %v3338 = vunpack.c.l.b16 %v3287
  %v3339 = vunpack.c.l.b16 %v3291
  %v3340 = vunpack.c.l.b16 %v3295
  %v3341 = vunpack.c.l.b16 %v3299
  %v3342 = vunpack.c.l.b16 %v3303
  %v3343 = vunpack.c.l.b16 %v3307
  %v3344 = vunpack.c.l.b16 %v3311
  %v3345 = vunpack.c.l.b16 %v3315
  %v3346 = vunpack.c.l.b16 %v3319
  %v3347 = vunpack.c.l.b16 %v3323
  %v3348 = vunpack.c.l.b16 %v3327
  %v3349 = vunpack.c.l.b16 %v3331
  %v3350 = vpack.c.b16 %v3335, %v3334
  %v3351 = vpack.c.b16 %v3337, %v3336
  %v3352 = vpack.c.b16 %v3339, %v3338
  %v3353 = vpack.c.b16 %v3341, %v3340
  %v3354 = vpack.c.b16 %v3343, %v3342
  %v3355 = vpack.c.b16 %v3345, %v3344
  %v3356 = vpack.c.b16 %v3347, %v3346
  %v3357 = vpack.c.b16 %v3349, %v3348
  %v3359 = vsel %vm3026, %v3350, 0
  %v3362 = vsel %vm3026, %v3351, 0
  %v3365 = vsel %vm3026, %v3352, 0
  %v3368 = vsel %vm3026, %v3353, 0
  %v3371 = vsel %vm3026, %v3354, 0
  %v3374 = vsel %vm3026, %v3355, 0
  %v3377 = vsel %vm3026, %v3356, 0
  %v3380 = vsel %vm3026, %v3357, 0
  %v3383 = vsel %vm3051, %v3333, 0
  %3385 = vmatpush.bf16.msra.mxu0 0
  %3386 = vmatpush.bf16.msra.mxu0 0
  %3387 = vmatpush.bf16.msra.mxu0 0
  %3388 = vmatpush.bf16.msra.mxu0 0
  %3389 = vmatpush.bf16.msra.mxu0 0
  %3390 = vmatpush.bf16.msra.mxu0 0
  %3391 = vmatpush.bf16.msra.mxu0 0
  %3392 = vmatpush.bf16.msra.mxu0 %v3383
  %3393 = vmatmul.bf16.gmra.mxu0 %v3359
  %v3394 = vpop.f32.mrf.mxu0
  %v3395 = vadd.f32 0.0, %v3394
  %v3396 = vpop.f32.mrf.mxu0
  %v3397 = vadd.f32 0.0, %v3396
  %3398 = vmatmul.bf16.gmra.mxu0 %v3362
  %v3399 = vpop.f32.mrf.mxu0
  %v3400 = vadd.f32 0.0, %v3399
  %v3401 = vpop.f32.mrf.mxu0
  %v3402 = vadd.f32 0.0, %v3401
  %3403 = vmatmul.bf16.gmra.mxu0 %v3365
  %v3404 = vpop.f32.mrf.mxu0
  %v3405 = vadd.f32 0.0, %v3404
  %v3406 = vpop.f32.mrf.mxu0
  %v3407 = vadd.f32 0.0, %v3406
  %3408 = vmatmul.bf16.gmra.mxu0 %v3368
  %v3409 = vpop.f32.mrf.mxu0
  %v3410 = vadd.f32 0.0, %v3409
  %v3411 = vpop.f32.mrf.mxu0
  %v3412 = vadd.f32 0.0, %v3411
  %3413 = vmatmul.bf16.gmra.mxu0 %v3371
  %v3414 = vpop.f32.mrf.mxu0
  %v3415 = vadd.f32 0.0, %v3414
  %v3416 = vpop.f32.mrf.mxu0
  %v3417 = vadd.f32 0.0, %v3416
  %3418 = vmatmul.bf16.gmra.mxu0 %v3374
  %v3419 = vpop.f32.mrf.mxu0
  %v3420 = vadd.f32 0.0, %v3419
  %v3421 = vpop.f32.mrf.mxu0
  %v3422 = vadd.f32 0.0, %v3421
  %3423 = vmatmul.bf16.gmra.mxu0 %v3377
  %v3424 = vpop.f32.mrf.mxu0
  %v3425 = vadd.f32 0.0, %v3424
  %v3426 = vpop.f32.mrf.mxu0
  %v3427 = vadd.f32 0.0, %v3426
  %3428 = vmatmul.bf16.gmra.mxu0 %v3380
  %v3429 = vpop.f32.mrf.mxu0
  %v3430 = vadd.f32 0.0, %v3429
  %v3431 = vpop.f32.mrf.mxu0
  %v3432 = vadd.f32 0.0, %v3431
  %3433 = vdwg.mxu0
  %v3434 = vadd.f32 %v3181, %v3395
  %v3435 = vadd.f32 %v3183, %v3397
  %v3436 = vadd.f32 %v3186, %v3400
  %v3437 = vadd.f32 %v3188, %v3402
  %v3438 = vadd.f32 %v3191, %v3405
  %v3439 = vadd.f32 %v3193, %v3407
  %v3440 = vadd.f32 %v3196, %v3410
  %v3441 = vadd.f32 %v3198, %v3412
  %v3442 = vadd.f32 %v3201, %v3415
  %v3443 = vadd.f32 %v3203, %v3417
  %v3444 = vadd.f32 %v3206, %v3420
  %v3445 = vadd.f32 %v3208, %v3422
  %v3446 = vadd.f32 %v3211, %v3425
  %v3447 = vadd.f32 %v3213, %v3427
  %v3448 = vadd.f32 %v3216, %v3430
  %v3449 = vadd.f32 %v3218, %v3432
  %v3450 = vld [vmem:[%s2644] sm:$0xf]
  %v3451 = vld [vmem:[%s2644 + $0x8] sm:$0xf]
  %v3452 = vld [vmem:[%s2644 + $0x10] sm:$0xf]
  %v3453 = vld [vmem:[%s2644 + $0x18] sm:$0xf]
  %v3454 = vld [vmem:[%s2644 + $0x20] sm:$0xf]
  %v3455 = vld [vmem:[%s2644 + $0x28] sm:$0xf]
  %v3456 = vld [vmem:[%s2644 + $0x30] sm:$0xf]
  %v3457 = vld [vmem:[%s2644 + $0x38] sm:$0xf]
  %v3458 = vld [vmem:[%s2644 + $0x50] sm:$0xf]
  %v3459 = vld [vmem:[%s2644 + $0x58] sm:$0xf]
  %v3460 = vld [vmem:[%s2644 + $0x60] sm:$0xf]
  %v3461 = vld [vmem:[%s2644 + $0x68] sm:$0xf]
  %v3462 = vld [vmem:[%s2644 + $0x70] sm:$0xf]
  %v3463 = vld [vmem:[%s2644 + $0x78] sm:$0xf]
  %v3464 = vld [vmem:[%s2644 + $0x80] sm:$0xf]
  %v3465 = vld [vmem:[%s2644 + $0x88] sm:$0xf]
  %s3466 = scalar_lea.vmem %s5, 12
  %v3467 = vld [vmem:[%s3466] sm:$0xf]
  %v3484 = vunpack.c.l.b16 %v3450
  %v3485 = vunpack.c.l.b16 %v3451
  %v3486 = vunpack.c.l.b16 %v3452
  %v3487 = vunpack.c.l.b16 %v3453
  %v3488 = vunpack.c.l.b16 %v3454
  %v3489 = vunpack.c.l.b16 %v3455
  %v3490 = vunpack.c.l.b16 %v3456
  %v3491 = vunpack.c.l.b16 %v3457
  %v3492 = vunpack.c.l.b16 %v3458
  %v3493 = vunpack.c.l.b16 %v3459
  %v3494 = vunpack.c.l.b16 %v3460
  %v3495 = vunpack.c.l.b16 %v3461
  %v3496 = vunpack.c.l.b16 %v3462
  %v3497 = vunpack.c.l.b16 %v3463
  %v3498 = vunpack.c.l.b16 %v3464
  %v3499 = vunpack.c.l.b16 %v3465
  %v3500 = vpack.c.b16 %v3485, %v3484
  %v3501 = vpack.c.b16 %v3487, %v3486
  %v3502 = vpack.c.b16 %v3489, %v3488
  %v3503 = vpack.c.b16 %v3491, %v3490
  %v3504 = vpack.c.b16 %v3493, %v3492
  %v3505 = vpack.c.b16 %v3495, %v3494
  %v3506 = vpack.c.b16 %v3497, %v3496
  %v3507 = vpack.c.b16 %v3499, %v3498
  %v3509 = vsel %vm3026, %v3500, 0
  %v3512 = vsel %vm3026, %v3501, 0
  %v3515 = vsel %vm3026, %v3502, 0
  %v3518 = vsel %vm3026, %v3503, 0
  %v3521 = vsel %vm3026, %v3504, 0
  %v3524 = vsel %vm3026, %v3505, 0
  %v3527 = vsel %vm3026, %v3506, 0
  %v3530 = vsel %vm3026, %v3507, 0
  %v3533 = vsel %vm3051, %v3467, 0
  %3535 = vmatpush.bf16.msra.mxu0 0
  %3536 = vmatpush.bf16.msra.mxu0 0
  %3537 = vmatpush.bf16.msra.mxu0 0
  %3538 = vmatpush.bf16.msra.mxu0 0
  %3539 = vmatpush.bf16.msra.mxu0 0
  %3540 = vmatpush.bf16.msra.mxu0 0
  %3541 = vmatpush.bf16.msra.mxu0 0
  %3542 = vmatpush.bf16.msra.mxu0 %v3533
  %3543 = vmatmul.bf16.gmra.mxu0 %v3509
  %v3544 = vpop.f32.mrf.mxu0
  %v3545 = vadd.f32 0.0, %v3544
  %v3546 = vpop.f32.mrf.mxu0
  %v3547 = vadd.f32 0.0, %v3546
  %3548 = vmatmul.bf16.gmra.mxu0 %v3512
  %v3549 = vpop.f32.mrf.mxu0
  %v3550 = vadd.f32 0.0, %v3549
  %v3551 = vpop.f32.mrf.mxu0
  %v3552 = vadd.f32 0.0, %v3551
  %3553 = vmatmul.bf16.gmra.mxu0 %v3515
  %v3554 = vpop.f32.mrf.mxu0
  %v3555 = vadd.f32 0.0, %v3554
  %v3556 = vpop.f32.mrf.mxu0
  %v3557 = vadd.f32 0.0, %v3556
  %3558 = vmatmul.bf16.gmra.mxu0 %v3518
  %v3559 = vpop.f32.mrf.mxu0
  %v3560 = vadd.f32 0.0, %v3559
  %v3561 = vpop.f32.mrf.mxu0
  %v3562 = vadd.f32 0.0, %v3561
  %3563 = vmatmul.bf16.gmra.mxu0 %v3521
  %v3564 = vpop.f32.mrf.mxu0
  %v3565 = vadd.f32 0.0, %v3564
  %v3566 = vpop.f32.mrf.mxu0
  %v3567 = vadd.f32 0.0, %v3566
  %3568 = vmatmul.bf16.gmra.mxu0 %v3524
  %v3569 = vpop.f32.mrf.mxu0
  %v3570 = vadd.f32 0.0, %v3569
  %v3571 = vpop.f32.mrf.mxu0
  %v3572 = vadd.f32 0.0, %v3571
  %3573 = vmatmul.bf16.gmra.mxu0 %v3527
  %v3574 = vpop.f32.mrf.mxu0
  %v3575 = vadd.f32 0.0, %v3574
  %v3576 = vpop.f32.mrf.mxu0
  %v3577 = vadd.f32 0.0, %v3576
  %3578 = vmatmul.bf16.gmra.mxu0 %v3530
  %v3579 = vpop.f32.mrf.mxu0
  %v3580 = vadd.f32 0.0, %v3579
  %v3581 = vpop.f32.mrf.mxu0
  %v3582 = vadd.f32 0.0, %v3581
  %3583 = vdwg.mxu0
  %v3584 = vadd.f32 %v3434, %v3545
  %v3585 = vadd.f32 %v3435, %v3547
  %v3586 = vadd.f32 %v3436, %v3550
  %v3587 = vadd.f32 %v3437, %v3552
  %v3588 = vadd.f32 %v3438, %v3555
  %v3589 = vadd.f32 %v3439, %v3557
  %v3590 = vadd.f32 %v3440, %v3560
  %v3591 = vadd.f32 %v3441, %v3562
  %v3592 = vadd.f32 %v3442, %v3565
  %v3593 = vadd.f32 %v3443, %v3567
  %v3594 = vadd.f32 %v3444, %v3570
  %v3595 = vadd.f32 %v3445, %v3572
  %v3596 = vadd.f32 %v3446, %v3575
  %v3597 = vadd.f32 %v3447, %v3577
  %v3598 = vadd.f32 %v3448, %v3580
  %v3599 = vadd.f32 %v3449, %v3582
  %v3600 = vld [vmem:[%s2644] sm:$0xf]
  %v3601 = vld [vmem:[%s2644 + $0x4] sm:$0x1]
  %v3602 = vld [vmem:[%s2644 + $0x8] sm:$0xf]
  %v3603 = vld [vmem:[%s2644 + $0xc] sm:$0x1]
  %v3604 = vld [vmem:[%s2644 + $0x10] sm:$0xf]
  %v3605 = vld [vmem:[%s2644 + $0x14] sm:$0x1]
  %v3606 = vld [vmem:[%s2644 + $0x18] sm:$0xf]
  %v3607 = vld [vmem:[%s2644 + $0x1c] sm:$0x1]
  %v3608 = vld [vmem:[%s2644 + $0x20] sm:$0xf]
  %v3609 = vld [vmem:[%s2644 + $0x24] sm:$0x1]
  %v3610 = vld [vmem:[%s2644 + $0x28] sm:$0xf]
  %v3611 = vld [vmem:[%s2644 + $0x2c] sm:$0x1]
  %v3612 = vld [vmem:[%s2644 + $0x30] sm:$0xf]
  %v3613 = vld [vmem:[%s2644 + $0x34] sm:$0x1]
  %v3614 = vld [vmem:[%s2644 + $0x38] sm:$0xf]
  %v3615 = vld [vmem:[%s2644 + $0x3c] sm:$0x1]
  %v3616 = vld [vmem:[%s2644 + $0x50] sm:$0xf]
  %v3617 = vld [vmem:[%s2644 + $0x54] sm:$0x1]
  %v3618 = vld [vmem:[%s2644 + $0x58] sm:$0xf]
  %v3619 = vld [vmem:[%s2644 + $0x5c] sm:$0x1]
  %v3620 = vld [vmem:[%s2644 + $0x60] sm:$0xf]
  %v3621 = vld [vmem:[%s2644 + $0x64] sm:$0x1]
  %v3622 = vld [vmem:[%s2644 + $0x68] sm:$0xf]
  %v3623 = vld [vmem:[%s2644 + $0x6c] sm:$0x1]
  %v3624 = vld [vmem:[%s2644 + $0x70] sm:$0xf]
  %v3625 = vld [vmem:[%s2644 + $0x74] sm:$0x1]
  %v3626 = vld [vmem:[%s2644 + $0x78] sm:$0xf]
  %v3627 = vld [vmem:[%s2644 + $0x7c] sm:$0x1]
  %v3628 = vld [vmem:[%s2644 + $0x80] sm:$0xf]
  %v3629 = vld [vmem:[%s2644 + $0x84] sm:$0x1]
  %v3630 = vld [vmem:[%s2644 + $0x88] sm:$0xf]
  %v3631 = vld [vmem:[%s2644 + $0x8c] sm:$0x1]
  %v3633 = vshrl.u32 %v3600, 16
  %v3635 = vrot.slane %v3633, 4
  %v3636 = vshll.u32 %v3600, 16
  %v3638 = vrot.slane %v3636, 5
  %v3639 = vor.u32 %v3635, %v3638
  %v3640 = vrot.slane %v3639, 4
  %v3642 = vshll.u32 %v3601, 16
  %v3644 = vrot.slane %v3642, 5
  %v3645 = vsel %vm68, %v3640, %v3644
  %v3647 = vshrl.u32 %v3602, 16
  %v3649 = vrot.slane %v3647, 4
  %v3650 = vshll.u32 %v3602, 16
  %v3652 = vrot.slane %v3650, 5
  %v3653 = vor.u32 %v3649, %v3652
  %v3654 = vrot.slane %v3653, 4
  %v3656 = vshll.u32 %v3603, 16
  %v3658 = vrot.slane %v3656, 5
  %v3659 = vsel %vm68, %v3654, %v3658
  %v3661 = vshrl.u32 %v3604, 16
  %v3663 = vrot.slane %v3661, 4
  %v3664 = vshll.u32 %v3604, 16
  %v3666 = vrot.slane %v3664, 5
  %v3667 = vor.u32 %v3663, %v3666
  %v3668 = vrot.slane %v3667, 4
  %v3670 = vshll.u32 %v3605, 16
  %v3672 = vrot.slane %v3670, 5
  %v3673 = vsel %vm68, %v3668, %v3672
  %v3675 = vshrl.u32 %v3606, 16
  %v3677 = vrot.slane %v3675, 4
  %v3678 = vshll.u32 %v3606, 16
  %v3680 = vrot.slane %v3678, 5
  %v3681 = vor.u32 %v3677, %v3680
  %v3682 = vrot.slane %v3681, 4
  %v3684 = vshll.u32 %v3607, 16
  %v3686 = vrot.slane %v3684, 5
  %v3687 = vsel %vm68, %v3682, %v3686
  %v3689 = vshrl.u32 %v3608, 16
  %v3691 = vrot.slane %v3689, 4
  %v3692 = vshll.u32 %v3608, 16
  %v3694 = vrot.slane %v3692, 5
  %v3695 = vor.u32 %v3691, %v3694
  %v3696 = vrot.slane %v3695, 4
  %v3698 = vshll.u32 %v3609, 16
  %v3700 = vrot.slane %v3698, 5
  %v3701 = vsel %vm68, %v3696, %v3700
  %v3703 = vshrl.u32 %v3610, 16
  %v3705 = vrot.slane %v3703, 4
  %v3706 = vshll.u32 %v3610, 16
  %v3708 = vrot.slane %v3706, 5
  %v3709 = vor.u32 %v3705, %v3708
  %v3710 = vrot.slane %v3709, 4
  %v3712 = vshll.u32 %v3611, 16
  %v3714 = vrot.slane %v3712, 5
  %v3715 = vsel %vm68, %v3710, %v3714
  %v3717 = vshrl.u32 %v3612, 16
  %v3719 = vrot.slane %v3717, 4
  %v3720 = vshll.u32 %v3612, 16
  %v3722 = vrot.slane %v3720, 5
  %v3723 = vor.u32 %v3719, %v3722
  %v3724 = vrot.slane %v3723, 4
  %v3726 = vshll.u32 %v3613, 16
  %v3728 = vrot.slane %v3726, 5
  %v3729 = vsel %vm68, %v3724, %v3728
  %v3731 = vshrl.u32 %v3614, 16
  %v3733 = vrot.slane %v3731, 4
  %v3734 = vshll.u32 %v3614, 16
  %v3736 = vrot.slane %v3734, 5
  %v3737 = vor.u32 %v3733, %v3736
  %v3738 = vrot.slane %v3737, 4
  %v3740 = vshll.u32 %v3615, 16
  %v3742 = vrot.slane %v3740, 5
  %v3743 = vsel %vm68, %v3738, %v3742
  %v3745 = vshrl.u32 %v3616, 16
  %v3747 = vrot.slane %v3745, 4
  %v3748 = vshll.u32 %v3616, 16
  %v3750 = vrot.slane %v3748, 5
  %v3751 = vor.u32 %v3747, %v3750
  %v3752 = vrot.slane %v3751, 4
  %v3754 = vshll.u32 %v3617, 16
  %v3756 = vrot.slane %v3754, 5
  %v3757 = vsel %vm68, %v3752, %v3756
  %v3759 = vshrl.u32 %v3618, 16
  %v3761 = vrot.slane %v3759, 4
  %v3762 = vshll.u32 %v3618, 16
  %v3764 = vrot.slane %v3762, 5
  %v3765 = vor.u32 %v3761, %v3764
  %v3766 = vrot.slane %v3765, 4
  %v3768 = vshll.u32 %v3619, 16
  %v3770 = vrot.slane %v3768, 5
  %v3771 = vsel %vm68, %v3766, %v3770
  %v3773 = vshrl.u32 %v3620, 16
  %v3775 = vrot.slane %v3773, 4
  %v3776 = vshll.u32 %v3620, 16
  %v3778 = vrot.slane %v3776, 5
  %v3779 = vor.u32 %v3775, %v3778
  %v3780 = vrot.slane %v3779, 4
  %v3782 = vshll.u32 %v3621, 16
  %v3784 = vrot.slane %v3782, 5
  %v3785 = vsel %vm68, %v3780, %v3784
  %v3787 = vshrl.u32 %v3622, 16
  %v3789 = vrot.slane %v3787, 4
  %v3790 = vshll.u32 %v3622, 16
  %v3792 = vrot.slane %v3790, 5
  %v3793 = vor.u32 %v3789, %v3792
  %v3794 = vrot.slane %v3793, 4
  %v3796 = vshll.u32 %v3623, 16
  %v3798 = vrot.slane %v3796, 5
  %v3799 = vsel %vm68, %v3794, %v3798
  %v3801 = vshrl.u32 %v3624, 16
  %v3803 = vrot.slane %v3801, 4
  %v3804 = vshll.u32 %v3624, 16
  %v3806 = vrot.slane %v3804, 5
  %v3807 = vor.u32 %v3803, %v3806
  %v3808 = vrot.slane %v3807, 4
  %v3810 = vshll.u32 %v3625, 16
  %v3812 = vrot.slane %v3810, 5
  %v3813 = vsel %vm68, %v3808, %v3812
  %v3815 = vshrl.u32 %v3626, 16
  %v3817 = vrot.slane %v3815, 4
  %v3818 = vshll.u32 %v3626, 16
  %v3820 = vrot.slane %v3818, 5
  %v3821 = vor.u32 %v3817, %v3820
  %v3822 = vrot.slane %v3821, 4
  %v3824 = vshll.u32 %v3627, 16
  %v3826 = vrot.slane %v3824, 5
  %v3827 = vsel %vm68, %v3822, %v3826
  %v3829 = vshrl.u32 %v3628, 16
  %v3831 = vrot.slane %v3829, 4
  %v3832 = vshll.u32 %v3628, 16
  %v3834 = vrot.slane %v3832, 5
  %v3835 = vor.u32 %v3831, %v3834
  %v3836 = vrot.slane %v3835, 4
  %v3838 = vshll.u32 %v3629, 16
  %v3840 = vrot.slane %v3838, 5
  %v3841 = vsel %vm68, %v3836, %v3840
  %v3843 = vshrl.u32 %v3630, 16
  %v3845 = vrot.slane %v3843, 4
  %v3846 = vshll.u32 %v3630, 16
  %v3848 = vrot.slane %v3846, 5
  %v3849 = vor.u32 %v3845, %v3848
  %v3850 = vrot.slane %v3849, 4
  %v3852 = vshll.u32 %v3631, 16
  %v3854 = vrot.slane %v3852, 5
  %v3855 = vsel %vm68, %v3850, %v3854
  %s3856 = scalar_lea.vmem %s5, 16
  %v3857 = vld [vmem:[%s3856] sm:$0xf]
  %v3858 = vunpack.c.l.b16 %v3645
  %v3859 = vunpack.c.l.b16 %v3659
  %v3860 = vunpack.c.l.b16 %v3673
  %v3861 = vunpack.c.l.b16 %v3687
  %v3862 = vunpack.c.l.b16 %v3701
  %v3863 = vunpack.c.l.b16 %v3715
  %v3864 = vunpack.c.l.b16 %v3729
  %v3865 = vunpack.c.l.b16 %v3743
  %v3866 = vunpack.c.l.b16 %v3757
  %v3867 = vunpack.c.l.b16 %v3771
  %v3868 = vunpack.c.l.b16 %v3785
  %v3869 = vunpack.c.l.b16 %v3799
  %v3870 = vunpack.c.l.b16 %v3813
  %v3871 = vunpack.c.l.b16 %v3827
  %v3872 = vunpack.c.l.b16 %v3841
  %v3873 = vunpack.c.l.b16 %v3855
  %v3874 = vpack.c.b16 %v3859, %v3858
  %v3875 = vpack.c.b16 %v3861, %v3860
  %v3876 = vpack.c.b16 %v3863, %v3862
  %v3877 = vpack.c.b16 %v3865, %v3864
  %v3878 = vpack.c.b16 %v3867, %v3866
  %v3879 = vpack.c.b16 %v3869, %v3868
  %v3880 = vpack.c.b16 %v3871, %v3870
  %v3881 = vpack.c.b16 %v3873, %v3872
  %v3883 = vsel %vm3026, %v3874, 0
  %v3886 = vsel %vm3026, %v3875, 0
  %v3889 = vsel %vm3026, %v3876, 0
  %v3892 = vsel %vm3026, %v3877, 0
  %v3895 = vsel %vm3026, %v3878, 0
  %v3898 = vsel %vm3026, %v3879, 0
  %v3901 = vsel %vm3026, %v3880, 0
  %v3904 = vsel %vm3026, %v3881, 0
  %v3907 = vsel %vm3051, %v3857, 0
  %3909 = vmatpush.bf16.msra.mxu0 0
  %3910 = vmatpush.bf16.msra.mxu0 0
  %3911 = vmatpush.bf16.msra.mxu0 0
  %3912 = vmatpush.bf16.msra.mxu0 0
  %3913 = vmatpush.bf16.msra.mxu0 0
  %3914 = vmatpush.bf16.msra.mxu0 0
  %3915 = vmatpush.bf16.msra.mxu0 0
  %3916 = vmatpush.bf16.msra.mxu0 %v3907
  %3917 = vmatmul.bf16.gmra.mxu0 %v3883
  %v3918 = vpop.f32.mrf.mxu0
  %v3919 = vadd.f32 0.0, %v3918
  %v3920 = vpop.f32.mrf.mxu0
  %v3921 = vadd.f32 0.0, %v3920
  %3922 = vmatmul.bf16.gmra.mxu0 %v3886
  %v3923 = vpop.f32.mrf.mxu0
  %v3924 = vadd.f32 0.0, %v3923
  %v3925 = vpop.f32.mrf.mxu0
  %v3926 = vadd.f32 0.0, %v3925
  %3927 = vmatmul.bf16.gmra.mxu0 %v3889
  %v3928 = vpop.f32.mrf.mxu0
  %v3929 = vadd.f32 0.0, %v3928
  %v3930 = vpop.f32.mrf.mxu0
  %v3931 = vadd.f32 0.0, %v3930
  %3932 = vmatmul.bf16.gmra.mxu0 %v3892
  %v3933 = vpop.f32.mrf.mxu0
  %v3934 = vadd.f32 0.0, %v3933
  %v3935 = vpop.f32.mrf.mxu0
  %v3936 = vadd.f32 0.0, %v3935
  %3937 = vmatmul.bf16.gmra.mxu0 %v3895
  %v3938 = vpop.f32.mrf.mxu0
  %v3939 = vadd.f32 0.0, %v3938
  %v3940 = vpop.f32.mrf.mxu0
  %v3941 = vadd.f32 0.0, %v3940
  %3942 = vmatmul.bf16.gmra.mxu0 %v3898
  %v3943 = vpop.f32.mrf.mxu0
  %v3944 = vadd.f32 0.0, %v3943
  %v3945 = vpop.f32.mrf.mxu0
  %v3946 = vadd.f32 0.0, %v3945
  %3947 = vmatmul.bf16.gmra.mxu0 %v3901
  %v3948 = vpop.f32.mrf.mxu0
  %v3949 = vadd.f32 0.0, %v3948
  %v3950 = vpop.f32.mrf.mxu0
  %v3951 = vadd.f32 0.0, %v3950
  %3952 = vmatmul.bf16.gmra.mxu0 %v3904
  %v3953 = vpop.f32.mrf.mxu0
  %v3954 = vadd.f32 0.0, %v3953
  %v3955 = vpop.f32.mrf.mxu0
  %v3956 = vadd.f32 0.0, %v3955
  %3957 = vdwg.mxu0
  %v3958 = vadd.f32 %v3584, %v3919
  %v3959 = vadd.f32 %v3585, %v3921
  %v3960 = vadd.f32 %v3586, %v3924
  %v3961 = vadd.f32 %v3587, %v3926
  %v3962 = vadd.f32 %v3588, %v3929
  %v3963 = vadd.f32 %v3589, %v3931
  %v3964 = vadd.f32 %v3590, %v3934
  %v3965 = vadd.f32 %v3591, %v3936
  %v3966 = vadd.f32 %v3592, %v3939
  %v3967 = vadd.f32 %v3593, %v3941
  %v3968 = vadd.f32 %v3594, %v3944
  %v3969 = vadd.f32 %v3595, %v3946
  %v3970 = vadd.f32 %v3596, %v3949
  %v3971 = vadd.f32 %v3597, %v3951
  %v3972 = vadd.f32 %v3598, %v3954
  %v3973 = vadd.f32 %v3599, %v3956
  %v3974 = vld [vmem:[%s2644] sm:$0xe]
  %v3975 = vld [vmem:[%s2644 + $0x8] sm:$0xe]
  %v3976 = vld [vmem:[%s2644 + $0x10] sm:$0xe]
  %v3977 = vld [vmem:[%s2644 + $0x18] sm:$0xe]
  %v3978 = vld [vmem:[%s2644 + $0x20] sm:$0xe]
  %v3979 = vld [vmem:[%s2644 + $0x28] sm:$0xe]
  %v3980 = vld [vmem:[%s2644 + $0x30] sm:$0xe]
  %v3981 = vld [vmem:[%s2644 + $0x38] sm:$0xe]
  %v3982 = vld [vmem:[%s2644 + $0x50] sm:$0xe]
  %v3983 = vld [vmem:[%s2644 + $0x58] sm:$0xe]
  %v3984 = vld [vmem:[%s2644 + $0x60] sm:$0xe]
  %v3985 = vld [vmem:[%s2644 + $0x68] sm:$0xe]
  %v3986 = vld [vmem:[%s2644 + $0x70] sm:$0xe]
  %v3987 = vld [vmem:[%s2644 + $0x78] sm:$0xe]
  %v3988 = vld [vmem:[%s2644 + $0x80] sm:$0xe]
  %v3989 = vld [vmem:[%s2644 + $0x88] sm:$0xe]
  %v4022 = vrot.slane %v3974, 5
  %v4023 = vrot.slane %v4022, 4
  %v4024 = vrot.slane %v3601, 5
  %v4025 = vsel %vm563, %v4023, %v4024
  %v4026 = vrot.slane %v3975, 5
  %v4027 = vrot.slane %v4026, 4
  %v4028 = vrot.slane %v3603, 5
  %v4029 = vsel %vm563, %v4027, %v4028
  %v4030 = vrot.slane %v3976, 5
  %v4031 = vrot.slane %v4030, 4
  %v4032 = vrot.slane %v3605, 5
  %v4033 = vsel %vm563, %v4031, %v4032
  %v4034 = vrot.slane %v3977, 5
  %v4035 = vrot.slane %v4034, 4
  %v4036 = vrot.slane %v3607, 5
  %v4037 = vsel %vm563, %v4035, %v4036
  %v4038 = vrot.slane %v3978, 5
  %v4039 = vrot.slane %v4038, 4
  %v4040 = vrot.slane %v3609, 5
  %v4041 = vsel %vm563, %v4039, %v4040
  %v4042 = vrot.slane %v3979, 5
  %v4043 = vrot.slane %v4042, 4
  %v4044 = vrot.slane %v3611, 5
  %v4045 = vsel %vm563, %v4043, %v4044
  %v4046 = vrot.slane %v3980, 5
  %v4047 = vrot.slane %v4046, 4
  %v4048 = vrot.slane %v3613, 5
  %v4049 = vsel %vm563, %v4047, %v4048
  %v4050 = vrot.slane %v3981, 5
  %v4051 = vrot.slane %v4050, 4
  %v4052 = vrot.slane %v3615, 5
  %v4053 = vsel %vm563, %v4051, %v4052
  %v4054 = vrot.slane %v3982, 5
  %v4055 = vrot.slane %v4054, 4
  %v4056 = vrot.slane %v3617, 5
  %v4057 = vsel %vm563, %v4055, %v4056
  %v4058 = vrot.slane %v3983, 5
  %v4059 = vrot.slane %v4058, 4
  %v4060 = vrot.slane %v3619, 5
  %v4061 = vsel %vm563, %v4059, %v4060
  %v4062 = vrot.slane %v3984, 5
  %v4063 = vrot.slane %v4062, 4
  %v4064 = vrot.slane %v3621, 5
  %v4065 = vsel %vm563, %v4063, %v4064
  %v4066 = vrot.slane %v3985, 5
  %v4067 = vrot.slane %v4066, 4
  %v4068 = vrot.slane %v3623, 5
  %v4069 = vsel %vm563, %v4067, %v4068
  %v4070 = vrot.slane %v3986, 5
  %v4071 = vrot.slane %v4070, 4
  %v4072 = vrot.slane %v3625, 5
  %v4073 = vsel %vm563, %v4071, %v4072
  %v4074 = vrot.slane %v3987, 5
  %v4075 = vrot.slane %v4074, 4
  %v4076 = vrot.slane %v3627, 5
  %v4077 = vsel %vm563, %v4075, %v4076
  %v4078 = vrot.slane %v3988, 5
  %v4079 = vrot.slane %v4078, 4
  %v4080 = vrot.slane %v3629, 5
  %v4081 = vsel %vm563, %v4079, %v4080
  %v4082 = vrot.slane %v3989, 5
  %v4083 = vrot.slane %v4082, 4
  %v4084 = vrot.slane %v3631, 5
  %v4085 = vsel %vm563, %v4083, %v4084
  %s4086 = scalar_lea.vmem %s5, 20
  %v4087 = vld [vmem:[%s4086] sm:$0xf]
  %v4088 = vunpack.c.l.b16 %v4025
  %v4089 = vunpack.c.l.b16 %v4029
  %v4090 = vunpack.c.l.b16 %v4033
  %v4091 = vunpack.c.l.b16 %v4037
  %v4092 = vunpack.c.l.b16 %v4041
  %v4093 = vunpack.c.l.b16 %v4045
  %v4094 = vunpack.c.l.b16 %v4049
  %v4095 = vunpack.c.l.b16 %v4053
  %v4096 = vunpack.c.l.b16 %v4057
  %v4097 = vunpack.c.l.b16 %v4061
  %v4098 = vunpack.c.l.b16 %v4065
  %v4099 = vunpack.c.l.b16 %v4069
  %v4100 = vunpack.c.l.b16 %v4073
  %v4101 = vunpack.c.l.b16 %v4077
  %v4102 = vunpack.c.l.b16 %v4081
  %v4103 = vunpack.c.l.b16 %v4085
  %v4104 = vpack.c.b16 %v4089, %v4088
  %v4105 = vpack.c.b16 %v4091, %v4090
  %v4106 = vpack.c.b16 %v4093, %v4092
  %v4107 = vpack.c.b16 %v4095, %v4094
  %v4108 = vpack.c.b16 %v4097, %v4096
  %v4109 = vpack.c.b16 %v4099, %v4098
  %v4110 = vpack.c.b16 %v4101, %v4100
  %v4111 = vpack.c.b16 %v4103, %v4102
  %v4113 = vsel %vm3026, %v4104, 0
  %v4116 = vsel %vm3026, %v4105, 0
  %v4119 = vsel %vm3026, %v4106, 0
  %v4122 = vsel %vm3026, %v4107, 0
  %v4125 = vsel %vm3026, %v4108, 0
  %v4128 = vsel %vm3026, %v4109, 0
  %v4131 = vsel %vm3026, %v4110, 0
  %v4134 = vsel %vm3026, %v4111, 0
  %v4137 = vsel %vm3051, %v4087, 0
  %4139 = vmatpush.bf16.msra.mxu0 0
  %4140 = vmatpush.bf16.msra.mxu0 0
  %4141 = vmatpush.bf16.msra.mxu0 0
  %4142 = vmatpush.bf16.msra.mxu0 0
  %4143 = vmatpush.bf16.msra.mxu0 0
  %4144 = vmatpush.bf16.msra.mxu0 0
  %4145 = vmatpush.bf16.msra.mxu0 0
  %4146 = vmatpush.bf16.msra.mxu0 %v4137
  %4147 = vmatmul.bf16.gmra.mxu0 %v4113
  %v4148 = vpop.f32.mrf.mxu0
  %v4149 = vadd.f32 0.0, %v4148
  %v4150 = vpop.f32.mrf.mxu0
  %v4151 = vadd.f32 0.0, %v4150
  %4152 = vmatmul.bf16.gmra.mxu0 %v4116
  %v4153 = vpop.f32.mrf.mxu0
  %v4154 = vadd.f32 0.0, %v4153
  %v4155 = vpop.f32.mrf.mxu0
  %v4156 = vadd.f32 0.0, %v4155
  %4157 = vmatmul.bf16.gmra.mxu0 %v4119
  %v4158 = vpop.f32.mrf.mxu0
  %v4159 = vadd.f32 0.0, %v4158
  %v4160 = vpop.f32.mrf.mxu0
  %v4161 = vadd.f32 0.0, %v4160
  %4162 = vmatmul.bf16.gmra.mxu0 %v4122
  %v4163 = vpop.f32.mrf.mxu0
  %v4164 = vadd.f32 0.0, %v4163
  %v4165 = vpop.f32.mrf.mxu0
  %v4166 = vadd.f32 0.0, %v4165
  %4167 = vmatmul.bf16.gmra.mxu0 %v4125
  %v4168 = vpop.f32.mrf.mxu0
  %v4169 = vadd.f32 0.0, %v4168
  %v4170 = vpop.f32.mrf.mxu0
  %v4171 = vadd.f32 0.0, %v4170
  %4172 = vmatmul.bf16.gmra.mxu0 %v4128
  %v4173 = vpop.f32.mrf.mxu0
  %v4174 = vadd.f32 0.0, %v4173
  %v4175 = vpop.f32.mrf.mxu0
  %v4176 = vadd.f32 0.0, %v4175
  %4177 = vmatmul.bf16.gmra.mxu0 %v4131
  %v4178 = vpop.f32.mrf.mxu0
  %v4179 = vadd.f32 0.0, %v4178
  %v4180 = vpop.f32.mrf.mxu0
  %v4181 = vadd.f32 0.0, %v4180
  %4182 = vmatmul.bf16.gmra.mxu0 %v4134
  %v4183 = vpop.f32.mrf.mxu0
  %v4184 = vadd.f32 0.0, %v4183
  %v4185 = vpop.f32.mrf.mxu0
  %v4186 = vadd.f32 0.0, %v4185
  %4187 = vdwg.mxu0
  %v4188 = vadd.f32 %v3958, %v4149
  %v4189 = vadd.f32 %v3959, %v4151
  %v4190 = vadd.f32 %v3960, %v4154
  %v4191 = vadd.f32 %v3961, %v4156
  %v4192 = vadd.f32 %v3962, %v4159
  %v4193 = vadd.f32 %v3963, %v4161
  %v4194 = vadd.f32 %v3964, %v4164
  %v4195 = vadd.f32 %v3965, %v4166
  %v4196 = vadd.f32 %v3966, %v4169
  %v4197 = vadd.f32 %v3967, %v4171
  %v4198 = vadd.f32 %v3968, %v4174
  %v4199 = vadd.f32 %v3969, %v4176
  %v4200 = vadd.f32 %v3970, %v4179
  %v4201 = vadd.f32 %v3971, %v4181
  %v4202 = vadd.f32 %v3972, %v4184
  %v4203 = vadd.f32 %v3973, %v4186
  %s4204 = scalar_lea.vmem [#allocation2], 16
  %v4205 = vld [vmem:[%s4204] sm:$0xf]
  %v4206 = vld [vmem:[%s4204 + $0x8] sm:$0xf]
  %v4207 = vld [vmem:[%s4204 + $0x10] sm:$0xf]
  %v4208 = vld [vmem:[%s4204 + $0x18] sm:$0xf]
  %v4209 = vld [vmem:[%s4204 + $0x20] sm:$0xf]
  %v4210 = vld [vmem:[%s4204 + $0x28] sm:$0xf]
  %v4211 = vld [vmem:[%s4204 + $0x30] sm:$0xf]
  %v4212 = vld [vmem:[%s4204 + $0x38] sm:$0xf]
  %v4213 = vld [vmem:[%s4204 + $0x50] sm:$0xf]
  %v4214 = vld [vmem:[%s4204 + $0x58] sm:$0xf]
  %v4215 = vld [vmem:[%s4204 + $0x60] sm:$0xf]
  %v4216 = vld [vmem:[%s4204 + $0x68] sm:$0xf]
  %v4217 = vld [vmem:[%s4204 + $0x70] sm:$0xf]
  %v4218 = vld [vmem:[%s4204 + $0x78] sm:$0xf]
  %v4219 = vld [vmem:[%s4204 + $0x80] sm:$0xf]
  %v4220 = vld [vmem:[%s4204 + $0x88] sm:$0xf]
  %s4221 = scalar_lea.vmem %s5, 24
  %v4222 = vld [vmem:[%s4221] sm:$0xf]
  %v4239 = vunpack.c.l.b16 %v4205
  %v4240 = vunpack.c.l.b16 %v4206
  %v4241 = vunpack.c.l.b16 %v4207
  %v4242 = vunpack.c.l.b16 %v4208
  %v4243 = vunpack.c.l.b16 %v4209
  %v4244 = vunpack.c.l.b16 %v4210
  %v4245 = vunpack.c.l.b16 %v4211
  %v4246 = vunpack.c.l.b16 %v4212
  %v4247 = vunpack.c.l.b16 %v4213
  %v4248 = vunpack.c.l.b16 %v4214
  %v4249 = vunpack.c.l.b16 %v4215
  %v4250 = vunpack.c.l.b16 %v4216
  %v4251 = vunpack.c.l.b16 %v4217
  %v4252 = vunpack.c.l.b16 %v4218
  %v4253 = vunpack.c.l.b16 %v4219
  %v4254 = vunpack.c.l.b16 %v4220
  %v4255 = vpack.c.b16 %v4240, %v4239
  %v4256 = vpack.c.b16 %v4242, %v4241
  %v4257 = vpack.c.b16 %v4244, %v4243
  %v4258 = vpack.c.b16 %v4246, %v4245
  %v4259 = vpack.c.b16 %v4248, %v4247
  %v4260 = vpack.c.b16 %v4250, %v4249
  %v4261 = vpack.c.b16 %v4252, %v4251
  %v4262 = vpack.c.b16 %v4254, %v4253
  %v4264 = vsel %vm3026, %v4255, 0
  %v4267 = vsel %vm3026, %v4256, 0
  %v4270 = vsel %vm3026, %v4257, 0
  %v4273 = vsel %vm3026, %v4258, 0
  %v4276 = vsel %vm3026, %v4259, 0
  %v4279 = vsel %vm3026, %v4260, 0
  %v4282 = vsel %vm3026, %v4261, 0
  %v4285 = vsel %vm3026, %v4262, 0
  %v4288 = vsel %vm3051, %v4222, 0
  %4290 = vmatpush.bf16.msra.mxu0 0
  %4291 = vmatpush.bf16.msra.mxu0 0
  %4292 = vmatpush.bf16.msra.mxu0 0
  %4293 = vmatpush.bf16.msra.mxu0 0
  %4294 = vmatpush.bf16.msra.mxu0 0
  %4295 = vmatpush.bf16.msra.mxu0 0
  %4296 = vmatpush.bf16.msra.mxu0 0
  %4297 = vmatpush.bf16.msra.mxu0 %v4288
  %4298 = vmatmul.bf16.gmra.mxu0 %v4264
  %v4299 = vpop.f32.mrf.mxu0
  %v4300 = vadd.f32 0.0, %v4299
  %v4301 = vpop.f32.mrf.mxu0
  %v4302 = vadd.f32 0.0, %v4301
  %4303 = vmatmul.bf16.gmra.mxu0 %v4267
  %v4304 = vpop.f32.mrf.mxu0
  %v4305 = vadd.f32 0.0, %v4304
  %v4306 = vpop.f32.mrf.mxu0
  %v4307 = vadd.f32 0.0, %v4306
  %4308 = vmatmul.bf16.gmra.mxu0 %v4270
  %v4309 = vpop.f32.mrf.mxu0
  %v4310 = vadd.f32 0.0, %v4309
  %v4311 = vpop.f32.mrf.mxu0
  %v4312 = vadd.f32 0.0, %v4311
  %4313 = vmatmul.bf16.gmra.mxu0 %v4273
  %v4314 = vpop.f32.mrf.mxu0
  %v4315 = vadd.f32 0.0, %v4314
  %v4316 = vpop.f32.mrf.mxu0
  %v4317 = vadd.f32 0.0, %v4316
  %4318 = vmatmul.bf16.gmra.mxu0 %v4276
  %v4319 = vpop.f32.mrf.mxu0
  %v4320 = vadd.f32 0.0, %v4319
  %v4321 = vpop.f32.mrf.mxu0
  %v4322 = vadd.f32 0.0, %v4321
  %4323 = vmatmul.bf16.gmra.mxu0 %v4279
  %v4324 = vpop.f32.mrf.mxu0
  %v4325 = vadd.f32 0.0, %v4324
  %v4326 = vpop.f32.mrf.mxu0
  %v4327 = vadd.f32 0.0, %v4326
  %4328 = vmatmul.bf16.gmra.mxu0 %v4282
  %v4329 = vpop.f32.mrf.mxu0
  %v4330 = vadd.f32 0.0, %v4329
  %v4331 = vpop.f32.mrf.mxu0
  %v4332 = vadd.f32 0.0, %v4331
  %4333 = vmatmul.bf16.gmra.mxu0 %v4285
  %v4334 = vpop.f32.mrf.mxu0
  %v4335 = vadd.f32 0.0, %v4334
  %v4336 = vpop.f32.mrf.mxu0
  %v4337 = vadd.f32 0.0, %v4336
  %4338 = vdwg.mxu0
  %v4339 = vadd.f32 %v4188, %v4300
  %v4340 = vadd.f32 %v4189, %v4302
  %v4341 = vadd.f32 %v4190, %v4305
  %v4342 = vadd.f32 %v4191, %v4307
  %v4343 = vadd.f32 %v4192, %v4310
  %v4344 = vadd.f32 %v4193, %v4312
  %v4345 = vadd.f32 %v4194, %v4315
  %v4346 = vadd.f32 %v4195, %v4317
  %v4347 = vadd.f32 %v4196, %v4320
  %v4348 = vadd.f32 %v4197, %v4322
  %v4349 = vadd.f32 %v4198, %v4325
  %v4350 = vadd.f32 %v4199, %v4327
  %v4351 = vadd.f32 %v4200, %v4330
  %v4352 = vadd.f32 %v4201, %v4332
  %v4353 = vadd.f32 %v4202, %v4335
  %v4354 = vadd.f32 %v4203, %v4337
  %v4355 = vld [vmem:[%s4204] sm:$0xf]
  %v4356 = vld [vmem:[%s4204 + $0x4] sm:$0x1]
  %v4357 = vld [vmem:[%s4204 + $0x8] sm:$0xf]
  %v4358 = vld [vmem:[%s4204 + $0xc] sm:$0x1]
  %v4359 = vld [vmem:[%s4204 + $0x10] sm:$0xf]
  %v4360 = vld [vmem:[%s4204 + $0x14] sm:$0x1]
  %v4361 = vld [vmem:[%s4204 + $0x18] sm:$0xf]
  %v4362 = vld [vmem:[%s4204 + $0x1c] sm:$0x1]
  %v4363 = vld [vmem:[%s4204 + $0x20] sm:$0xf]
  %v4364 = vld [vmem:[%s4204 + $0x24] sm:$0x1]
  %v4365 = vld [vmem:[%s4204 + $0x28] sm:$0xf]
  %v4366 = vld [vmem:[%s4204 + $0x2c] sm:$0x1]
  %v4367 = vld [vmem:[%s4204 + $0x30] sm:$0xf]
  %v4368 = vld [vmem:[%s4204 + $0x34] sm:$0x1]
  %v4369 = vld [vmem:[%s4204 + $0x38] sm:$0xf]
  %v4370 = vld [vmem:[%s4204 + $0x3c] sm:$0x1]
  %v4371 = vld [vmem:[%s4204 + $0x50] sm:$0xf]
  %v4372 = vld [vmem:[%s4204 + $0x54] sm:$0x1]
  %v4373 = vld [vmem:[%s4204 + $0x58] sm:$0xf]
  %v4374 = vld [vmem:[%s4204 + $0x5c] sm:$0x1]
  %v4375 = vld [vmem:[%s4204 + $0x60] sm:$0xf]
  %v4376 = vld [vmem:[%s4204 + $0x64] sm:$0x1]
  %v4377 = vld [vmem:[%s4204 + $0x68] sm:$0xf]
  %v4378 = vld [vmem:[%s4204 + $0x6c] sm:$0x1]
  %v4379 = vld [vmem:[%s4204 + $0x70] sm:$0xf]
  %v4380 = vld [vmem:[%s4204 + $0x74] sm:$0x1]
  %v4381 = vld [vmem:[%s4204 + $0x78] sm:$0xf]
  %v4382 = vld [vmem:[%s4204 + $0x7c] sm:$0x1]
  %v4383 = vld [vmem:[%s4204 + $0x80] sm:$0xf]
  %v4384 = vld [vmem:[%s4204 + $0x84] sm:$0x1]
  %v4385 = vld [vmem:[%s4204 + $0x88] sm:$0xf]
  %v4386 = vld [vmem:[%s4204 + $0x8c] sm:$0x1]
  %v4388 = vshrl.u32 %v4355, 16
  %v4390 = vrot.slane %v4388, 4
  %v4391 = vshll.u32 %v4355, 16
  %v4393 = vrot.slane %v4391, 5
  %v4394 = vor.u32 %v4390, %v4393
  %v4395 = vrot.slane %v4394, 4
  %v4397 = vshll.u32 %v4356, 16
  %v4399 = vrot.slane %v4397, 5
  %v4400 = vsel %vm68, %v4395, %v4399
  %v4402 = vshrl.u32 %v4357, 16
  %v4404 = vrot.slane %v4402, 4
  %v4405 = vshll.u32 %v4357, 16
  %v4407 = vrot.slane %v4405, 5
  %v4408 = vor.u32 %v4404, %v4407
  %v4409 = vrot.slane %v4408, 4
  %v4411 = vshll.u32 %v4358, 16
  %v4413 = vrot.slane %v4411, 5
  %v4414 = vsel %vm68, %v4409, %v4413
  %v4416 = vshrl.u32 %v4359, 16
  %v4418 = vrot.slane %v4416, 4
  %v4419 = vshll.u32 %v4359, 16
  %v4421 = vrot.slane %v4419, 5
  %v4422 = vor.u32 %v4418, %v4421
  %v4423 = vrot.slane %v4422, 4
  %v4425 = vshll.u32 %v4360, 16
  %v4427 = vrot.slane %v4425, 5
  %v4428 = vsel %vm68, %v4423, %v4427
  %v4430 = vshrl.u32 %v4361, 16
  %v4432 = vrot.slane %v4430, 4
  %v4433 = vshll.u32 %v4361, 16
  %v4435 = vrot.slane %v4433, 5
  %v4436 = vor.u32 %v4432, %v4435
  %v4437 = vrot.slane %v4436, 4
  %v4439 = vshll.u32 %v4362, 16
  %v4441 = vrot.slane %v4439, 5
  %v4442 = vsel %vm68, %v4437, %v4441
  %v4444 = vshrl.u32 %v4363, 16
  %v4446 = vrot.slane %v4444, 4
  %v4447 = vshll.u32 %v4363, 16
  %v4449 = vrot.slane %v4447, 5
  %v4450 = vor.u32 %v4446, %v4449
  %v4451 = vrot.slane %v4450, 4
  %v4453 = vshll.u32 %v4364, 16
  %v4455 = vrot.slane %v4453, 5
  %v4456 = vsel %vm68, %v4451, %v4455
  %v4458 = vshrl.u32 %v4365, 16
  %v4460 = vrot.slane %v4458, 4
  %v4461 = vshll.u32 %v4365, 16
  %v4463 = vrot.slane %v4461, 5
  %v4464 = vor.u32 %v4460, %v4463
  %v4465 = vrot.slane %v4464, 4
  %v4467 = vshll.u32 %v4366, 16
  %v4469 = vrot.slane %v4467, 5
  %v4470 = vsel %vm68, %v4465, %v4469
  %v4472 = vshrl.u32 %v4367, 16
  %v4474 = vrot.slane %v4472, 4
  %v4475 = vshll.u32 %v4367, 16
  %v4477 = vrot.slane %v4475, 5
  %v4478 = vor.u32 %v4474, %v4477
  %v4479 = vrot.slane %v4478, 4
  %v4481 = vshll.u32 %v4368, 16
  %v4483 = vrot.slane %v4481, 5
  %v4484 = vsel %vm68, %v4479, %v4483
  %v4486 = vshrl.u32 %v4369, 16
  %v4488 = vrot.slane %v4486, 4
  %v4489 = vshll.u32 %v4369, 16
  %v4491 = vrot.slane %v4489, 5
  %v4492 = vor.u32 %v4488, %v4491
  %v4493 = vrot.slane %v4492, 4
  %v4495 = vshll.u32 %v4370, 16
  %v4497 = vrot.slane %v4495, 5
  %v4498 = vsel %vm68, %v4493, %v4497
  %v4500 = vshrl.u32 %v4371, 16
  %v4502 = vrot.slane %v4500, 4
  %v4503 = vshll.u32 %v4371, 16
  %v4505 = vrot.slane %v4503, 5
  %v4506 = vor.u32 %v4502, %v4505
  %v4507 = vrot.slane %v4506, 4
  %v4509 = vshll.u32 %v4372, 16
  %v4511 = vrot.slane %v4509, 5
  %v4512 = vsel %vm68, %v4507, %v4511
  %v4514 = vshrl.u32 %v4373, 16
  %v4516 = vrot.slane %v4514, 4
  %v4517 = vshll.u32 %v4373, 16
  %v4519 = vrot.slane %v4517, 5
  %v4520 = vor.u32 %v4516, %v4519
  %v4521 = vrot.slane %v4520, 4
  %v4523 = vshll.u32 %v4374, 16
  %v4525 = vrot.slane %v4523, 5
  %v4526 = vsel %vm68, %v4521, %v4525
  %v4528 = vshrl.u32 %v4375, 16
  %v4530 = vrot.slane %v4528, 4
  %v4531 = vshll.u32 %v4375, 16
  %v4533 = vrot.slane %v4531, 5
  %v4534 = vor.u32 %v4530, %v4533
  %v4535 = vrot.slane %v4534, 4
  %v4537 = vshll.u32 %v4376, 16
  %v4539 = vrot.slane %v4537, 5
  %v4540 = vsel %vm68, %v4535, %v4539
  %v4542 = vshrl.u32 %v4377, 16
  %v4544 = vrot.slane %v4542, 4
  %v4545 = vshll.u32 %v4377, 16
  %v4547 = vrot.slane %v4545, 5
  %v4548 = vor.u32 %v4544, %v4547
  %v4549 = vrot.slane %v4548, 4
  %v4551 = vshll.u32 %v4378, 16
  %v4553 = vrot.slane %v4551, 5
  %v4554 = vsel %vm68, %v4549, %v4553
  %v4556 = vshrl.u32 %v4379, 16
  %v4558 = vrot.slane %v4556, 4
  %v4559 = vshll.u32 %v4379, 16
  %v4561 = vrot.slane %v4559, 5
  %v4562 = vor.u32 %v4558, %v4561
  %v4563 = vrot.slane %v4562, 4
  %v4565 = vshll.u32 %v4380, 16
  %v4567 = vrot.slane %v4565, 5
  %v4568 = vsel %vm68, %v4563, %v4567
  %v4570 = vshrl.u32 %v4381, 16
  %v4572 = vrot.slane %v4570, 4
  %v4573 = vshll.u32 %v4381, 16
  %v4575 = vrot.slane %v4573, 5
  %v4576 = vor.u32 %v4572, %v4575
  %v4577 = vrot.slane %v4576, 4
  %v4579 = vshll.u32 %v4382, 16
  %v4581 = vrot.slane %v4579, 5
  %v4582 = vsel %vm68, %v4577, %v4581
  %v4584 = vshrl.u32 %v4383, 16
  %v4586 = vrot.slane %v4584, 4
  %v4587 = vshll.u32 %v4383, 16
  %v4589 = vrot.slane %v4587, 5
  %v4590 = vor.u32 %v4586, %v4589
  %v4591 = vrot.slane %v4590, 4
  %v4593 = vshll.u32 %v4384, 16
  %v4595 = vrot.slane %v4593, 5
  %v4596 = vsel %vm68, %v4591, %v4595
  %v4598 = vshrl.u32 %v4385, 16
  %v4600 = vrot.slane %v4598, 4
  %v4601 = vshll.u32 %v4385, 16
  %v4603 = vrot.slane %v4601, 5
  %v4604 = vor.u32 %v4600, %v4603
  %v4605 = vrot.slane %v4604, 4
  %v4607 = vshll.u32 %v4386, 16
  %v4609 = vrot.slane %v4607, 5
  %v4610 = vsel %vm68, %v4605, %v4609
  %s4611 = scalar_lea.vmem %s5, 28
  %v4612 = vld [vmem:[%s4611] sm:$0xf]
  %v4613 = vunpack.c.l.b16 %v4400
  %v4614 = vunpack.c.l.b16 %v4414
  %v4615 = vunpack.c.l.b16 %v4428
  %v4616 = vunpack.c.l.b16 %v4442
  %v4617 = vunpack.c.l.b16 %v4456
  %v4618 = vunpack.c.l.b16 %v4470
  %v4619 = vunpack.c.l.b16 %v4484
  %v4620 = vunpack.c.l.b16 %v4498
  %v4621 = vunpack.c.l.b16 %v4512
  %v4622 = vunpack.c.l.b16 %v4526
  %v4623 = vunpack.c.l.b16 %v4540
  %v4624 = vunpack.c.l.b16 %v4554
  %v4625 = vunpack.c.l.b16 %v4568
  %v4626 = vunpack.c.l.b16 %v4582
  %v4627 = vunpack.c.l.b16 %v4596
  %v4628 = vunpack.c.l.b16 %v4610
  %v4629 = vpack.c.b16 %v4614, %v4613
  %v4630 = vpack.c.b16 %v4616, %v4615
  %v4631 = vpack.c.b16 %v4618, %v4617
  %v4632 = vpack.c.b16 %v4620, %v4619
  %v4633 = vpack.c.b16 %v4622, %v4621
  %v4634 = vpack.c.b16 %v4624, %v4623
  %v4635 = vpack.c.b16 %v4626, %v4625
  %v4636 = vpack.c.b16 %v4628, %v4627
  %v4638 = vsel %vm3026, %v4629, 0
  %v4641 = vsel %vm3026, %v4630, 0
  %v4644 = vsel %vm3026, %v4631, 0
  %v4647 = vsel %vm3026, %v4632, 0
  %v4650 = vsel %vm3026, %v4633, 0
  %v4653 = vsel %vm3026, %v4634, 0
  %v4656 = vsel %vm3026, %v4635, 0
  %v4659 = vsel %vm3026, %v4636, 0
  %v4662 = vsel %vm3051, %v4612, 0
  %4664 = vmatpush.bf16.msra.mxu0 0
  %4665 = vmatpush.bf16.msra.mxu0 0
  %4666 = vmatpush.bf16.msra.mxu0 0
  %4667 = vmatpush.bf16.msra.mxu0 0
  %4668 = vmatpush.bf16.msra.mxu0 0
  %4669 = vmatpush.bf16.msra.mxu0 0
  %4670 = vmatpush.bf16.msra.mxu0 0
  %4671 = vmatpush.bf16.msra.mxu0 %v4662
  %4672 = vmatmul.bf16.gmra.mxu0 %v4638
  %v4673 = vpop.f32.mrf.mxu0
  %v4674 = vadd.f32 0.0, %v4673
  %v4675 = vpop.f32.mrf.mxu0
  %v4676 = vadd.f32 0.0, %v4675
  %4677 = vmatmul.bf16.gmra.mxu0 %v4641
  %v4678 = vpop.f32.mrf.mxu0
  %v4679 = vadd.f32 0.0, %v4678
  %v4680 = vpop.f32.mrf.mxu0
  %v4681 = vadd.f32 0.0, %v4680
  %4682 = vmatmul.bf16.gmra.mxu0 %v4644
  %v4683 = vpop.f32.mrf.mxu0
  %v4684 = vadd.f32 0.0, %v4683
  %v4685 = vpop.f32.mrf.mxu0
  %v4686 = vadd.f32 0.0, %v4685
  %4687 = vmatmul.bf16.gmra.mxu0 %v4647
  %v4688 = vpop.f32.mrf.mxu0
  %v4689 = vadd.f32 0.0, %v4688
  %v4690 = vpop.f32.mrf.mxu0
  %v4691 = vadd.f32 0.0, %v4690
  %4692 = vmatmul.bf16.gmra.mxu0 %v4650
  %v4693 = vpop.f32.mrf.mxu0
  %v4694 = vadd.f32 0.0, %v4693
  %v4695 = vpop.f32.mrf.mxu0
  %v4696 = vadd.f32 0.0, %v4695
  %4697 = vmatmul.bf16.gmra.mxu0 %v4653
  %v4698 = vpop.f32.mrf.mxu0
  %v4699 = vadd.f32 0.0, %v4698
  %v4700 = vpop.f32.mrf.mxu0
  %v4701 = vadd.f32 0.0, %v4700
  %4702 = vmatmul.bf16.gmra.mxu0 %v4656
  %v4703 = vpop.f32.mrf.mxu0
  %v4704 = vadd.f32 0.0, %v4703
  %v4705 = vpop.f32.mrf.mxu0
  %v4706 = vadd.f32 0.0, %v4705
  %4707 = vmatmul.bf16.gmra.mxu0 %v4659
  %v4708 = vpop.f32.mrf.mxu0
  %v4709 = vadd.f32 0.0, %v4708
  %v4710 = vpop.f32.mrf.mxu0
  %v4711 = vadd.f32 0.0, %v4710
  %4712 = vdwg.mxu0
  %v4713 = vadd.f32 %v4339, %v4674
  %v4714 = vadd.f32 %v4340, %v4676
  %v4715 = vadd.f32 %v4341, %v4679
  %v4716 = vadd.f32 %v4342, %v4681
  %v4717 = vadd.f32 %v4343, %v4684
  %v4718 = vadd.f32 %v4344, %v4686
  %v4719 = vadd.f32 %v4345, %v4689
  %v4720 = vadd.f32 %v4346, %v4691
  %v4721 = vadd.f32 %v4347, %v4694
  %v4722 = vadd.f32 %v4348, %v4696
  %v4723 = vadd.f32 %v4349, %v4699
  %v4724 = vadd.f32 %v4350, %v4701
  %v4725 = vadd.f32 %v4351, %v4704
  %v4726 = vadd.f32 %v4352, %v4706
  %v4727 = vadd.f32 %v4353, %v4709
  %v4728 = vadd.f32 %v4354, %v4711
  %v4729 = vld [vmem:[%s4204] sm:$0xe]
  %v4730 = vld [vmem:[%s4204 + $0x8] sm:$0xe]
  %v4731 = vld [vmem:[%s4204 + $0x10] sm:$0xe]
  %v4732 = vld [vmem:[%s4204 + $0x18] sm:$0xe]
  %v4733 = vld [vmem:[%s4204 + $0x20] sm:$0xe]
  %v4734 = vld [vmem:[%s4204 + $0x28] sm:$0xe]
  %v4735 = vld [vmem:[%s4204 + $0x30] sm:$0xe]
  %v4736 = vld [vmem:[%s4204 + $0x38] sm:$0xe]
  %v4737 = vld [vmem:[%s4204 + $0x50] sm:$0xe]
  %v4738 = vld [vmem:[%s4204 + $0x58] sm:$0xe]
  %v4739 = vld [vmem:[%s4204 + $0x60] sm:$0xe]
  %v4740 = vld [vmem:[%s4204 + $0x68] sm:$0xe]
  %v4741 = vld [vmem:[%s4204 + $0x70] sm:$0xe]
  %v4742 = vld [vmem:[%s4204 + $0x78] sm:$0xe]
  %v4743 = vld [vmem:[%s4204 + $0x80] sm:$0xe]
  %v4744 = vld [vmem:[%s4204 + $0x88] sm:$0xe]
  %v4777 = vrot.slane %v4729, 5
  %v4778 = vrot.slane %v4777, 4
  %v4779 = vrot.slane %v4356, 5
  %v4780 = vsel %vm563, %v4778, %v4779
  %v4781 = vrot.slane %v4730, 5
  %v4782 = vrot.slane %v4781, 4
  %v4783 = vrot.slane %v4358, 5
  %v4784 = vsel %vm563, %v4782, %v4783
  %v4785 = vrot.slane %v4731, 5
  %v4786 = vrot.slane %v4785, 4
  %v4787 = vrot.slane %v4360, 5
  %v4788 = vsel %vm563, %v4786, %v4787
  %v4789 = vrot.slane %v4732, 5
  %v4790 = vrot.slane %v4789, 4
  %v4791 = vrot.slane %v4362, 5
  %v4792 = vsel %vm563, %v4790, %v4791
  %v4793 = vrot.slane %v4733, 5
  %v4794 = vrot.slane %v4793, 4
  %v4795 = vrot.slane %v4364, 5
  %v4796 = vsel %vm563, %v4794, %v4795
  %v4797 = vrot.slane %v4734, 5
  %v4798 = vrot.slane %v4797, 4
  %v4799 = vrot.slane %v4366, 5
  %v4800 = vsel %vm563, %v4798, %v4799
  %v4801 = vrot.slane %v4735, 5
  %v4802 = vrot.slane %v4801, 4
  %v4803 = vrot.slane %v4368, 5
  %v4804 = vsel %vm563, %v4802, %v4803
  %v4805 = vrot.slane %v4736, 5
  %v4806 = vrot.slane %v4805, 4
  %v4807 = vrot.slane %v4370, 5
  %v4808 = vsel %vm563, %v4806, %v4807
  %v4809 = vrot.slane %v4737, 5
  %v4810 = vrot.slane %v4809, 4
  %v4811 = vrot.slane %v4372, 5
  %v4812 = vsel %vm563, %v4810, %v4811
  %v4813 = vrot.slane %v4738, 5
  %v4814 = vrot.slane %v4813, 4
  %v4815 = vrot.slane %v4374, 5
  %v4816 = vsel %vm563, %v4814, %v4815
  %v4817 = vrot.slane %v4739, 5
  %v4818 = vrot.slane %v4817, 4
  %v4819 = vrot.slane %v4376, 5
  %v4820 = vsel %vm563, %v4818, %v4819
  %v4821 = vrot.slane %v4740, 5
  %v4822 = vrot.slane %v4821, 4
  %v4823 = vrot.slane %v4378, 5
  %v4824 = vsel %vm563, %v4822, %v4823
  %v4825 = vrot.slane %v4741, 5
  %v4826 = vrot.slane %v4825, 4
  %v4827 = vrot.slane %v4380, 5
  %v4828 = vsel %vm563, %v4826, %v4827
  %v4829 = vrot.slane %v4742, 5
  %v4830 = vrot.slane %v4829, 4
  %v4831 = vrot.slane %v4382, 5
  %v4832 = vsel %vm563, %v4830, %v4831
  %v4833 = vrot.slane %v4743, 5
  %v4834 = vrot.slane %v4833, 4
  %v4835 = vrot.slane %v4384, 5
  %v4836 = vsel %vm563, %v4834, %v4835
  %v4837 = vrot.slane %v4744, 5
  %v4838 = vrot.slane %v4837, 4
  %v4839 = vrot.slane %v4386, 5
  %v4840 = vsel %vm563, %v4838, %v4839
  %s4841 = scalar_lea.vmem %s5, 32
  %v4842 = vld [vmem:[%s4841] sm:$0xf]
  %v4843 = vunpack.c.l.b16 %v4780
  %v4844 = vunpack.c.l.b16 %v4784
  %v4845 = vunpack.c.l.b16 %v4788
  %v4846 = vunpack.c.l.b16 %v4792
  %v4847 = vunpack.c.l.b16 %v4796
  %v4848 = vunpack.c.l.b16 %v4800
  %v4849 = vunpack.c.l.b16 %v4804
  %v4850 = vunpack.c.l.b16 %v4808
  %v4851 = vunpack.c.l.b16 %v4812
  %v4852 = vunpack.c.l.b16 %v4816
  %v4853 = vunpack.c.l.b16 %v4820
  %v4854 = vunpack.c.l.b16 %v4824
  %v4855 = vunpack.c.l.b16 %v4828
  %v4856 = vunpack.c.l.b16 %v4832
  %v4857 = vunpack.c.l.b16 %v4836
  %v4858 = vunpack.c.l.b16 %v4840
  %v4859 = vpack.c.b16 %v4844, %v4843
  %v4860 = vpack.c.b16 %v4846, %v4845
  %v4861 = vpack.c.b16 %v4848, %v4847
  %v4862 = vpack.c.b16 %v4850, %v4849
  %v4863 = vpack.c.b16 %v4852, %v4851
  %v4864 = vpack.c.b16 %v4854, %v4853
  %v4865 = vpack.c.b16 %v4856, %v4855
  %v4866 = vpack.c.b16 %v4858, %v4857
  %v4868 = vsel %vm3026, %v4859, 0
  %v4871 = vsel %vm3026, %v4860, 0
  %v4874 = vsel %vm3026, %v4861, 0
  %v4877 = vsel %vm3026, %v4862, 0
  %v4880 = vsel %vm3026, %v4863, 0
  %v4883 = vsel %vm3026, %v4864, 0
  %v4886 = vsel %vm3026, %v4865, 0
  %v4889 = vsel %vm3026, %v4866, 0
  %v4892 = vsel %vm3051, %v4842, 0
  %4894 = vmatpush.bf16.msra.mxu0 0
  %4895 = vmatpush.bf16.msra.mxu0 0
  %4896 = vmatpush.bf16.msra.mxu0 0
  %4897 = vmatpush.bf16.msra.mxu0 0
  %4898 = vmatpush.bf16.msra.mxu0 0
  %4899 = vmatpush.bf16.msra.mxu0 0
  %4900 = vmatpush.bf16.msra.mxu0 0
  %4901 = vmatpush.bf16.msra.mxu0 %v4892
  %4902 = vmatmul.bf16.gmra.mxu0 %v4868
  %v4903 = vpop.f32.mrf.mxu0
  %v4904 = vadd.f32 0.0, %v4903
  %v4905 = vpop.f32.mrf.mxu0
  %v4906 = vadd.f32 0.0, %v4905
  %4907 = vmatmul.bf16.gmra.mxu0 %v4871
  %v4908 = vpop.f32.mrf.mxu0
  %v4909 = vadd.f32 0.0, %v4908
  %v4910 = vpop.f32.mrf.mxu0
  %v4911 = vadd.f32 0.0, %v4910
  %4912 = vmatmul.bf16.gmra.mxu0 %v4874
  %v4913 = vpop.f32.mrf.mxu0
  %v4914 = vadd.f32 0.0, %v4913
  %v4915 = vpop.f32.mrf.mxu0
  %v4916 = vadd.f32 0.0, %v4915
  %4917 = vmatmul.bf16.gmra.mxu0 %v4877
  %v4918 = vpop.f32.mrf.mxu0
  %v4919 = vadd.f32 0.0, %v4918
  %v4920 = vpop.f32.mrf.mxu0
  %v4921 = vadd.f32 0.0, %v4920
  %4922 = vmatmul.bf16.gmra.mxu0 %v4880
  %v4923 = vpop.f32.mrf.mxu0
  %v4924 = vadd.f32 0.0, %v4923
  %v4925 = vpop.f32.mrf.mxu0
  %v4926 = vadd.f32 0.0, %v4925
  %4927 = vmatmul.bf16.gmra.mxu0 %v4883
  %v4928 = vpop.f32.mrf.mxu0
  %v4929 = vadd.f32 0.0, %v4928
  %v4930 = vpop.f32.mrf.mxu0
  %v4931 = vadd.f32 0.0, %v4930
  %4932 = vmatmul.bf16.gmra.mxu0 %v4886
  %v4933 = vpop.f32.mrf.mxu0
  %v4934 = vadd.f32 0.0, %v4933
  %v4935 = vpop.f32.mrf.mxu0
  %v4936 = vadd.f32 0.0, %v4935
  %4937 = vmatmul.bf16.gmra.mxu0 %v4889
  %v4938 = vpop.f32.mrf.mxu0
  %v4939 = vadd.f32 0.0, %v4938
  %v4940 = vpop.f32.mrf.mxu0
  %v4941 = vadd.f32 0.0, %v4940
  %4942 = vdwg.mxu0
  %v4943 = vadd.f32 %v4713, %v4904
  %v4944 = vadd.f32 %v4714, %v4906
  %v4945 = vadd.f32 %v4715, %v4909
  %v4946 = vadd.f32 %v4716, %v4911
  %v4947 = vadd.f32 %v4717, %v4914
  %v4948 = vadd.f32 %v4718, %v4916
  %v4949 = vadd.f32 %v4719, %v4919
  %v4950 = vadd.f32 %v4720, %v4921
  %v4951 = vadd.f32 %v4721, %v4924
  %v4952 = vadd.f32 %v4722, %v4926
  %v4953 = vadd.f32 %v4723, %v4929
  %v4954 = vadd.f32 %v4724, %v4931
  %v4955 = vadd.f32 %v4725, %v4934
  %v4956 = vadd.f32 %v4726, %v4936
  %v4957 = vadd.f32 %v4727, %v4939
  %v4958 = vadd.f32 %v4728, %v4941
  %v4959 = vld [vmem:[%s6] sm:$0x1]
  %v4961 = vperm.slane %v4959, 0
  %v4963 = vadd.f32 %v4943, %v4961
  %v4964 = vadd.f32 %v4944, %v4961
  %v4965 = vadd.f32 %v4945, %v4961
  %v4966 = vadd.f32 %v4946, %v4961
  %v4967 = vadd.f32 %v4947, %v4961
  %v4968 = vadd.f32 %v4948, %v4961
  %v4969 = vadd.f32 %v4949, %v4961
  %v4970 = vadd.f32 %v4950, %v4961
  %v4971 = vadd.f32 %v4951, %v4961
  %v4972 = vadd.f32 %v4952, %v4961
  %v4973 = vadd.f32 %v4953, %v4961
  %v4974 = vadd.f32 %v4954, %v4961
  %v4975 = vadd.f32 %v4955, %v4961
  %v4976 = vadd.f32 %v4956, %v4961
  %v4977 = vadd.f32 %v4957, %v4961
  %v4978 = vadd.f32 %v4958, %v4961
  %v4979 = vmax.f32 %v4963, 0.0
  %v4980 = vmax.f32 %v4964, 0.0
  %v4981 = vmax.f32 %v4965, 0.0
  %v4982 = vmax.f32 %v4966, 0.0
  %v4983 = vmax.f32 %v4967, 0.0
  %v4984 = vmax.f32 %v4968, 0.0
  %v4985 = vmax.f32 %v4969, 0.0
  %v4986 = vmax.f32 %v4970, 0.0
  %v4987 = vmax.f32 %v4971, 0.0
  %v4988 = vmax.f32 %v4972, 0.0
  %v4989 = vmax.f32 %v4973, 0.0
  %v4990 = vmax.f32 %v4974, 0.0
  %v4991 = vmax.f32 %v4975, 0.0
  %v4992 = vmax.f32 %v4976, 0.0
  %v4993 = vmax.f32 %v4977, 0.0
  %v4994 = vmax.f32 %v4978, 0.0
  %v4995 = vld [vmem:[%s7] sm:$0x1]
  %v4997 = vperm.slane %v4995, 0
  %v4999 = vmul.f32 %v4979, %v4997
  %v5000 = vmul.f32 %v4980, %v4997
  %v5001 = vmul.f32 %v4981, %v4997
  %v5002 = vmul.f32 %v4982, %v4997
  %v5003 = vmul.f32 %v4983, %v4997
  %v5004 = vmul.f32 %v4984, %v4997
  %v5005 = vmul.f32 %v4985, %v4997
  %v5006 = vmul.f32 %v4986, %v4997
  %v5007 = vmul.f32 %v4987, %v4997
  %v5008 = vmul.f32 %v4988, %v4997
  %v5009 = vmul.f32 %v4989, %v4997
  %v5010 = vmul.f32 %v4990, %v4997
  %v5011 = vmul.f32 %v4991, %v4997
  %v5012 = vmul.f32 %v4992, %v4997
  %v5013 = vmul.f32 %v4993, %v4997
  %v5014 = vmul.f32 %v4994, %v4997
  %v5015 = vld [vmem:[%s8] sm:$0x1]
  %v5017 = vperm.slane %v5015, 0
  %v5019 = vadd.f32 %v4999, %v5017
  %v5020 = vadd.f32 %v5000, %v5017
  %v5021 = vadd.f32 %v5001, %v5017
  %v5022 = vadd.f32 %v5002, %v5017
  %v5023 = vadd.f32 %v5003, %v5017
  %v5024 = vadd.f32 %v5004, %v5017
  %v5025 = vadd.f32 %v5005, %v5017
  %v5026 = vadd.f32 %v5006, %v5017
  %v5027 = vadd.f32 %v5007, %v5017
  %v5028 = vadd.f32 %v5008, %v5017
  %v5029 = vadd.f32 %v5009, %v5017
  %v5030 = vadd.f32 %v5010, %v5017
  %v5031 = vadd.f32 %v5011, %v5017
  %v5032 = vadd.f32 %v5012, %v5017
  %v5033 = vadd.f32 %v5013, %v5017
  %v5034 = vadd.f32 %v5014, %v5017
  %5035 = vst.msk [vmem:[%s9] sm:$0xff] %vm3026, %v5019
  %5036 = vst.msk [vmem:[%s9 + $0x8] sm:$0xff] %vm3026, %v5020
  %5037 = vst.msk [vmem:[%s9 + $0x10] sm:$0xff] %vm3026, %v5021
  %5038 = vst.msk [vmem:[%s9 + $0x18] sm:$0xff] %vm3026, %v5022
  %5039 = vst.msk [vmem:[%s9 + $0x20] sm:$0xff] %vm3026, %v5023
  %5040 = vst.msk [vmem:[%s9 + $0x28] sm:$0xff] %vm3026, %v5024
  %5041 = vst.msk [vmem:[%s9 + $0x30] sm:$0xff] %vm3026, %v5025
  %5042 = vst.msk [vmem:[%s9 + $0x38] sm:$0xff] %vm3026, %v5026
  %5043 = vst.msk [vmem:[%s9 + $0x40] sm:$0xff] %vm3026, %v5027
  %5044 = vst.msk [vmem:[%s9 + $0x48] sm:$0xff] %vm3026, %v5028
  %5045 = vst.msk [vmem:[%s9 + $0x50] sm:$0xff] %vm3026, %v5029
  %5046 = vst.msk [vmem:[%s9 + $0x58] sm:$0xff] %vm3026, %v5030
  %5047 = vst.msk [vmem:[%s9 + $0x60] sm:$0xff] %vm3026, %v5031
  %5048 = vst.msk [vmem:[%s9 + $0x68] sm:$0xff] %vm3026, %v5032
  %5049 = vst.msk [vmem:[%s9 + $0x70] sm:$0xff] %vm3026, %v5033
  %5050 = vst.msk [vmem:[%s9 + $0x78] sm:$0xff] %vm3026, %v5034
  // Predicated region
  $region38: #{tpu_custom_call.1} parent=0 // pred_check
    _
  $region39: #{tpu_custom_call.1} parent=0 // pred_check_branch
    %5052 = sbr.rel (0) target = $region41
  $region40: #{tpu_custom_call.1} parent=0 // pred_region
    _
  $region41: #{tpu_custom_call.1} parent=0 // pred_fallthru
    _
  // Predicated region
  $region42: #{tpu_custom_call.1} parent=0 // pred_check
    _
  $region43: #{tpu_custom_call.1} parent=0 // pred_check_branch
    %5054 = sbr.rel (0) target = $region45
  $region44: #{tpu_custom_call.1} parent=0 // pred_region
    _
  $region45: #{tpu_custom_call.1} parent=0 // pred_fallthru
    _

</llo_original>
